<compile_context>
chip_gen: v5e
topology: v5e:2x2
jax: 0.10.0
libtpu: 0.0.40
codegen_flags: <defaults>
</compile_context>

<pallas_src>
import math
import functools
import numpy as np
import jax
import jax.numpy as jnp
from jax import lax
from jax.experimental import pallas as pl
from jax.experimental.pallas import tpu as pltpu

BN_EPS = 1e-5
VMEM_LIMIT = 32 * 1024 * 1024          # safe scoped-VMEM limit on v5e/v6e/v7x
MXU_DTYPE = jnp.bfloat16               # MXU operand dtype; accumulation is f32
LANE = 128


def _gelu(x):
    c = 0.7978845608028654  # sqrt(2/pi)
    return 0.5 * x * (1.0 + jnp.tanh(c * (x + 0.044715 * x * x * x)))


def _mm(a, b):
    """MXU matmul: bf16 operands, float32 accumulation."""
    return jnp.dot(a.astype(MXU_DTYPE), b.astype(MXU_DTYPE),
                   preferred_element_type=jnp.float32)


def _softmax_lastdim(s):
    m = jnp.max(s, axis=-1, keepdims=True)
    p = jnp.exp(s - m)
    # EUP reciprocal instead of a VALU divide (review item #8).
    return p * pl.reciprocal(jnp.sum(p, axis=-1, keepdims=True), approx=True)


# ----------------------------- Pallas kernels -----------------------------
def encoder_kernel(tok_ref, pe_ref, wp_ref, bp_ref,
                   w_in_ref, b_in_ref, w_out_ref, b_out_ref,
                   w1_ref, b1_ref, w2_ref, b2_ref,
                   g1_ref, be1_ref, g2_ref, be2_ref,
                   h_out_ref, *, B, S, D, H, n_layers):
    """Whole encoder stack on the VMEM-resident (B*S, D) token matrix."""
    N = B * S
    dh = D // H
    inv_n = 1.0 / float(N)

    def add_batchnorm(h, delta, gamma, beta):
        # residual add + BatchNorm1d with train-mode batch stats over all B*S
        # tokens (biased variance, two-pass form to avoid cancellation).
        z = h + delta
        mean = jnp.sum(z, axis=0, keepdims=True) * inv_n
        zc = z - mean
        var = jnp.sum(zc * zc, axis=0, keepdims=True) * inv_n
        return zc * (lax.rsqrt(var + BN_EPS) * gamma) + beta

    # input projection (sqrt(d_model) folded into wp/bp) + positional encoding
    h = _mm(tok_ref[...], wp_ref[...]) + bp_ref[...] + pe_ref[...]    # (N, D)

    for li in range(n_layers):
        # ---- multi-head self-attention (key-padding mask is all-True) -----
        qkv = _mm(h, w_in_ref[li]) + b_in_ref[li]                     # (N, 3D)
        w_out = w_out_ref[li]                                         # (H,dh,D)
        attn = None
        for hh in range(H):
            o = hh * dh
            qh = qkv[:, o:o + dh].reshape(B, S, dh)     # 1/sqrt(dh) pre-folded
            kh = qkv[:, D + o:D + o + dh].reshape(B, S, dh)
            vh = qkv[:, 2 * D + o:2 * D + o + dh].reshape(B, S, dh)
            s = jnp.einsum('bqd,bkd->bqk',
                           qh.astype(MXU_DTYPE), kh.astype(MXU_DTYPE),
                           preferred_element_type=jnp.float32)        # (B,S,S)
            p = _softmax_lastdim(s)
            ctx = jnp.einsum('bqk,bkd->bqd',
                             p.astype(MXU_DTYPE), vh.astype(MXU_DTYPE),
                             preferred_element_type=jnp.float32)      # (B,S,dh)
            # per-head slice of the output projection, accumulated in place
            contrib = _mm(ctx.reshape(N, dh), w_out[hh])              # (N, D)
            attn = contrib if attn is None else attn + contrib
        attn = attn + b_out_ref[li]

        h = add_batchnorm(h, attn, g1_ref[li], be1_ref[li])           # norm1

        # ---- position-wise feed-forward ------------------------------------
        ff = _gelu(_mm(h, w1_ref[li]) + b1_ref[li])                   # (N, FF)
        ff = _mm(ff, w2_ref[li]) + b2_ref[li]                         # (N, D)
        h = add_batchnorm(h, ff, g2_ref[li], be2_ref[li])             # norm2

    # final activation fused here so the classifier kernel is a bare matmul.
    h_out_ref[...] = _gelu(h)


def classifier_kernel(h_ref, w_ref, b_ref, o_ref):
    # (B, S*D) x (S*D, NC_padded) -> lane-dense (B, NC_padded) output block.
    o_ref[...] = _mm(h_ref[...], w_ref[...]) + b_ref[...]


# ------------------------------ model forward ------------------------------
def ts_transformer_forward(x, params, *, n_heads, num_classes):
    """x: (batch, feat_dim, seq_len) — the layout the PyTorch forward indexes
    (K = X.shape[2] is the sequence length)."""
    B, F, S = x.shape
    D = params["wp_t"].shape[1]
    L = params["w_in_t"].shape[0]
    N = B * S

    # Cheap XLA-side layout prep (compiled into the same jit program):
    # (B, F, S) -> flat (B*S, F) token matrix; PE tiled to all B*S rows.
    tokens = jnp.transpose(x, (0, 2, 1)).reshape(N, F).astype(jnp.float32)
    pe_full = jnp.tile(params["pe"], (B, 1))                          # (N, D)

    vmem = pl.BlockSpec(memory_space=pltpu.MemorySpace.VMEM)
    h = pl.pallas_call(
        functools.partial(encoder_kernel, B=B, S=S, D=D, H=n_heads,
                          n_layers=L),
        out_shape=jax.ShapeDtypeStruct((N, D), jnp.float32),
        in_specs=[vmem] * 16,
        out_specs=vmem,
        compiler_params=pltpu.CompilerParams(vmem_limit_bytes=VMEM_LIMIT),
    )(tokens, pe_full, params["wp_t"], params["bp"],
      params["w_in_t"], params["b_in"], params["w_out_t"], params["b_out"],
      params["w1_t"], params["b1"], params["w2_t"], params["b2"],
      params["g1"], params["be1"], params["g2"], params["be2"])

    # flatten (B*S, D) -> (B, S*D): matches PyTorch's reshape of (B, S, D).
    h_flat = h.reshape(B, S * D)
    nc_pad = params["w_cls_t"].shape[1]
    out = pl.pallas_call(
        classifier_kernel,
        out_shape=jax.ShapeDtypeStruct((B, nc_pad), jnp.float32),
        in_specs=[vmem] * 3,
        out_specs=vmem,
        compiler_params=pltpu.CompilerParams(vmem_limit_bytes=VMEM_LIMIT),
    )(h_flat, params["w_cls_t"], params["b_cls"])
    return out[:, :num_classes]


# ------------------------------ parameters ------------------------------
def fixed_positional_encoding(max_len, d_model):
    pe = np.zeros((max_len, d_model), np.float32)
    position = np.arange(max_len, dtype=np.float32)[:, None]
    div_term = np.exp(np.arange(0, d_model, 2, dtype=np.float32)
                      * (-math.log(10000.0) / d_model))
    pe[:, 0::2] = np.sin(position * div_term)
    pe[:, 1::2] = np.cos(position * div_term)[:, : d_model // 2]
    return jnp.asarray(pe)


def init_params(key, feat_dim, d_model, n_heads, num_layers, dim_feedforward,
                num_classes, seq_len):
    """PyTorch-style init, then pre-transposed / scale-folded / bf16-cast
    layouts that the kernels consume directly."""
    def u(k, shape, fan_in):
        bound = 1.0 / math.sqrt(fan_in)
        return jax.random.uniform(k, shape, jnp.float32, -bound, bound)

    D, FF = d_model, dim_feedforward
    dh = D // n_heads
    keys = jax.random.split(key, num_layers + 2)

    kp1, kp2 = jax.random.split(keys[0])
    w_proj = u(kp1, (D, feat_dim), feat_dim)          # PyTorch Linear layout
    b_proj = u(kp2, (D,), feat_dim)
    scale = math.sqrt(D)
    qscale = 1.0 / math.sqrt(dh)

    per_layer = {name: [] for name in
                 ("w_in_t", "b_in", "w_out_t", "b_out", "w1_t", "b1",
                  "w2_t", "b2", "g1", "be1", "g2", "be2")}
    for li in range(num_layers):
        lk = jax.random.split(keys[2 + li], 8)
        w_in = u(lk[0], (3 * D, D), D)                # packed [Wq; Wk; Wv]
        b_in = u(lk[1], (3 * D,), D)
        # fold the 1/sqrt(d_head) attention scale into the Q projection.
        w_in = w_in.at[:D].multiply(qscale)
        b_in = b_in.at[:D].multiply(qscale)
        w_out = u(lk[2], (D, D), D)
        b_out = u(lk[3], (D,), D)
        w1 = u(lk[4], (FF, D), D)
        b1 = u(lk[5], (FF,), D)
        w2 = u(lk[6], (D, FF), FF)
        b2 = u(lk[7], (D,), FF)
        per_layer["w_in_t"].append(w_in.T.astype(MXU_DTYPE))          # (D,3D)
        per_layer["b_in"].append(b_in.reshape(1, 3 * D))
        # out-projection transposed and split per head (rows h*dh:(h+1)*dh).
        per_layer["w_out_t"].append(
            w_out.T.reshape(n_heads, dh, D).astype(MXU_DTYPE))        # (H,dh,D)
        per_layer["b_out"].append(b_out.reshape(1, D))
        per_layer["w1_t"].append(w1.T.astype(MXU_DTYPE))              # (D,FF)
        per_layer["b1"].append(b1.reshape(1, FF))
        per_layer["w2_t"].append(w2.T.astype(MXU_DTYPE))              # (FF,D)
        per_layer["b2"].append(b2.reshape(1, D))
        per_layer["g1"].append(jnp.ones((1, D), jnp.float32))
        per_layer["be1"].append(jnp.zeros((1, D), jnp.float32))
        per_layer["g2"].append(jnp.ones((1, D), jnp.float32))
        per_layer["be2"].append(jnp.zeros((1, D), jnp.float32))

    kc1, kc2 = jax.random.split(keys[1])
    w_cls = u(kc1, (num_classes, D * seq_len), D * seq_len)
    b_cls = u(kc2, (num_classes,), D * seq_len)
    # pad the classifier output to a full 128-lane block (unmasked stores).
    nc_pad = ((num_classes + LANE - 1) // LANE) * LANE
    w_cls_t = jnp.zeros((D * seq_len, nc_pad), MXU_DTYPE)
    w_cls_t = w_cls_t.at[:, :num_classes].set(w_cls.T.astype(MXU_DTYPE))
    b_cls_p = jnp.zeros((1, nc_pad), jnp.float32)
    b_cls_p = b_cls_p.at[:, :num_classes].set(b_cls)

    params = dict(
        # sqrt(d_model) folded into the input projection weights/bias.
        wp_t=(w_proj.T * scale).astype(MXU_DTYPE),                    # (F, D)
        bp=(b_proj * scale).reshape(1, D),
        pe=fixed_positional_encoding(seq_len, D),
        w_cls_t=w_cls_t, b_cls=b_cls_p,
    )
    for name, lst in per_layer.items():
        params[name] = jnp.stack(lst, axis=0)                 # leading L axis
    return params


if __name__ == "__main__":
    B, FEAT, SEQ = 2, 4, 16            # batch, feat_dim, seq_len (= temp_depth)
    D_MODEL, N_HEADS, N_LAYERS = 32, 4, 2
    DIM_FF, NUM_CLASSES = 64, 5

    key = jax.random.PRNGKey(0)
    kx, kp = jax.random.split(key)
    x = jax.random.normal(kx, (B, FEAT, SEQ), jnp.float32)
    params = init_params(kp, FEAT, D_MODEL, N_HEADS, N_LAYERS, DIM_FF,
                         NUM_CLASSES, SEQ)

    fwd = jax.jit(functools.partial(ts_transformer_forward,
                                    n_heads=N_HEADS, num_classes=NUM_CLASSES))
    out = fwd(x, params)
    jax.block_until_ready(out)
    assert out.shape == (B, NUM_CLASSES)
    print("KERNEL_OK")
</pallas_src>

<mosaic_0001>
module attributes {stable_mosaic.version = 11 : i64} {
  func.func @encoder_kernel(%arg0: memref<32x4xf32, #tpu.memory_space<vmem>>, %arg1: memref<32x32xf32, #tpu.memory_space<vmem>>, %arg2: memref<4x32xbf16, #tpu.memory_space<vmem>>, %arg3: memref<1x32xf32, #tpu.memory_space<vmem>>, %arg4: memref<2x32x96xbf16, #tpu.memory_space<vmem>>, %arg5: memref<2x1x96xf32, #tpu.memory_space<vmem>>, %arg6: memref<2x4x8x32xbf16, #tpu.memory_space<vmem>>, %arg7: memref<2x1x32xf32, #tpu.memory_space<vmem>>, %arg8: memref<2x32x64xbf16, #tpu.memory_space<vmem>>, %arg9: memref<2x1x64xf32, #tpu.memory_space<vmem>>, %arg10: memref<2x64x32xbf16, #tpu.memory_space<vmem>>, %arg11: memref<2x1x32xf32, #tpu.memory_space<vmem>>, %arg12: memref<2x1x32xf32, #tpu.memory_space<vmem>>, %arg13: memref<2x1x32xf32, #tpu.memory_space<vmem>>, %arg14: memref<2x1x32xf32, #tpu.memory_space<vmem>>, %arg15: memref<2x1x32xf32, #tpu.memory_space<vmem>>, %arg16: memref<32x32xf32, #tpu.memory_space<vmem>>) attributes {dimension_semantics = [], scalar_prefetch = 0 : i64, scratch_operands = 0 : i64, tpu.core_type = #tpu.core_type<tc>} {
    %c0 = arith.constant 0 : index
    %c0_0 = arith.constant 0 : index
    %0 = vector.load %arg0[%c0, %c0_0] : memref<32x4xf32, #tpu.memory_space<vmem>>, vector<32x4xf32>
    %c0_1 = arith.constant 0 : index
    %c0_2 = arith.constant 0 : index
    %1 = vector.load %arg2[%c0_1, %c0_2] : memref<4x32xbf16, #tpu.memory_space<vmem>>, vector<4x32xbf16>
    %2 = arith.truncf %0 : vector<32x4xf32> to vector<32x4xbf16>
    %cst = arith.constant dense<0.000000e+00> : vector<32x32xf32>
    %3 = tpu.matmul %2, %1, %cst {dimension_numbers = #tpu.dot_dimension_numbers<[1], [0], [0], [1], [0, 0, 1, 1], [], []>} : vector<32x4xbf16>, vector<4x32xbf16>, vector<32x32xf32> -> vector<32x32xf32>
    %c0_3 = arith.constant 0 : index
    %c0_4 = arith.constant 0 : index
    %4 = vector.load %arg3[%c0_3, %c0_4] : memref<1x32xf32, #tpu.memory_space<vmem>>, vector<1x32xf32>
    %5 = vector.broadcast %4 : vector<1x32xf32> to vector<32x32xf32>
    %6 = arith.addf %3, %5 : vector<32x32xf32>
    %c0_5 = arith.constant 0 : index
    %c0_6 = arith.constant 0 : index
    %7 = vector.load %arg1[%c0_5, %c0_6] : memref<32x32xf32, #tpu.memory_space<vmem>>, vector<32x32xf32>
    %8 = arith.addf %6, %7 : vector<32x32xf32>
    %c0_7 = arith.constant 0 : index
    %c0_8 = arith.constant 0 : index
    %c0_9 = arith.constant 0 : index
    %9 = vector.load %arg4[%c0_7, %c0_8, %c0_9] : memref<2x32x96xbf16, #tpu.memory_space<vmem>>, vector<1x32x96xbf16>
    %10 = vector.shape_cast %9 : vector<1x32x96xbf16> to vector<32x96xbf16>
    %11 = arith.truncf %8 : vector<32x32xf32> to vector<32x32xbf16>
    %cst_10 = arith.constant dense<0.000000e+00> : vector<32x96xf32>
    %12 = tpu.matmul %11, %10, %cst_10 {dimension_numbers = #tpu.dot_dimension_numbers<[1], [0], [0], [1], [0, 0, 1, 1], [], []>} : vector<32x32xbf16>, vector<32x96xbf16>, vector<32x96xf32> -> vector<32x96xf32>
    %c0_11 = arith.constant 0 : index
    %c0_12 = arith.constant 0 : index
    %c0_13 = arith.constant 0 : index
    %13 = vector.load %arg5[%c0_11, %c0_12, %c0_13] : memref<2x1x96xf32, #tpu.memory_space<vmem>>, vector<1x1x96xf32>
    %14 = vector.shape_cast %13 : vector<1x1x96xf32> to vector<1x96xf32>
    %15 = vector.broadcast %14 : vector<1x96xf32> to vector<32x96xf32>
    %16 = arith.addf %12, %15 : vector<32x96xf32>
    %c0_14 = arith.constant 0 : index
    %c0_15 = arith.constant 0 : index
    %c0_16 = arith.constant 0 : index
    %c0_17 = arith.constant 0 : index
    %17 = vector.load %arg6[%c0_14, %c0_15, %c0_16, %c0_17] : memref<2x4x8x32xbf16, #tpu.memory_space<vmem>>, vector<1x4x8x32xbf16>
    %18 = vector.shape_cast %17 : vector<1x4x8x32xbf16> to vector<4x8x32xbf16>
    %19 = vector.extract_strided_slice %16 {offsets = [0, 0], sizes = [32, 8], strides = [1, 1]} : vector<32x96xf32> to vector<32x8xf32>
    %20 = vector.shape_cast %19 : vector<32x8xf32> to vector<2x16x8xf32>
    %21 = vector.extract_strided_slice %16 {offsets = [0, 32], sizes = [32, 8], strides = [1, 1]} : vector<32x96xf32> to vector<32x8xf32>
    %22 = vector.shape_cast %21 : vector<32x8xf32> to vector<2x16x8xf32>
    %23 = vector.extract_strided_slice %16 {offsets = [0, 64], sizes = [32, 8], strides = [1, 1]} : vector<32x96xf32> to vector<32x8xf32>
    %24 = vector.shape_cast %23 : vector<32x8xf32> to vector<2x16x8xf32>
    %25 = arith.truncf %20 : vector<2x16x8xf32> to vector<2x16x8xbf16>
    %26 = arith.truncf %22 : vector<2x16x8xf32> to vector<2x16x8xbf16>
    "tpu.trace_start"() <{level = 10 : i32, message = "bqd,bkd->bqk"}> : () -> ()
    %cst_18 = arith.constant dense<0.000000e+00> : vector<2x16x16xf32>
    %27 = tpu.matmul %25, %26, %cst_18 {dimension_numbers = #tpu.dot_dimension_numbers<[2], [2], [1], [1], [0, 0, 0, 1, 1, 1], [0], [0]>} : vector<2x16x8xbf16>, vector<2x16x8xbf16>, vector<2x16x16xf32> -> vector<2x16x16xf32>
    "tpu.trace_stop"() : () -> ()
    %cst_19 = arith.constant dense<0xFF800000> : vector<2x16xf32>
    %28 = vector.multi_reduction <maximumf>, %27, %cst_19 [2] : vector<2x16x16xf32> to vector<2x16xf32>
    %29 = vector.shape_cast %28 : vector<2x16xf32> to vector<2x16x1xf32>
    %30 = vector.broadcast %29 : vector<2x16x1xf32> to vector<2x16x16xf32>
    %31 = arith.subf %27, %30 : vector<2x16x16xf32>
    %32 = math.exp %31 : vector<2x16x16xf32>
    %cst_20 = arith.constant dense<0.000000e+00> : vector<2x16xf32>
    %33 = vector.multi_reduction <add>, %32, %cst_20 [2] : vector<2x16x16xf32> to vector<2x16xf32>
    %34 = vector.shape_cast %33 : vector<2x16xf32> to vector<2x16x1xf32>
    %35 = tpu.reciprocal %34 {approx = true} : vector<2x16x1xf32> -> vector<2x16x1xf32>
    %36 = vector.broadcast %35 : vector<2x16x1xf32> to vector<2x16x16xf32>
    %37 = arith.mulf %32, %36 : vector<2x16x16xf32>
    %38 = arith.truncf %37 : vector<2x16x16xf32> to vector<2x16x16xbf16>
    %39 = arith.truncf %24 : vector<2x16x8xf32> to vector<2x16x8xbf16>
    "tpu.trace_start"() <{level = 10 : i32, message = "bqk,bkd->bqd"}> : () -> ()
    %cst_21 = arith.constant dense<0.000000e+00> : vector<2x16x8xf32>
    %40 = tpu.matmul %38, %39, %cst_21 {dimension_numbers = #tpu.dot_dimension_numbers<[2], [1], [1], [2], [0, 0, 0, 1, 1, 2], [0], [0]>} : vector<2x16x16xbf16>, vector<2x16x8xbf16>, vector<2x16x8xf32> -> vector<2x16x8xf32>
    "tpu.trace_stop"() : () -> ()
    %41 = vector.shape_cast %40 : vector<2x16x8xf32> to vector<32x8xf32>
    %42 = vector.extract_strided_slice %18 {offsets = [0, 0, 0], sizes = [1, 8, 32], strides = [1, 1, 1]} : vector<4x8x32xbf16> to vector<1x8x32xbf16>
    %43 = vector.shape_cast %42 : vector<1x8x32xbf16> to vector<8x32xbf16>
    %44 = arith.truncf %41 : vector<32x8xf32> to vector<32x8xbf16>
    %cst_22 = arith.constant dense<0.000000e+00> : vector<32x32xf32>
    %45 = tpu.matmul %44, %43, %cst_22 {dimension_numbers = #tpu.dot_dimension_numbers<[1], [0], [0], [1], [0, 0, 1, 1], [], []>} : vector<32x8xbf16>, vector<8x32xbf16>, vector<32x32xf32> -> vector<32x32xf32>
    %46 = vector.extract_strided_slice %16 {offsets = [0, 8], sizes = [32, 8], strides = [1, 1]} : vector<32x96xf32> to vector<32x8xf32>
    %47 = vector.shape_cast %46 : vector<32x8xf32> to vector<2x16x8xf32>
    %48 = vector.extract_strided_slice %16 {offsets = [0, 40], sizes = [32, 8], strides = [1, 1]} : vector<32x96xf32> to vector<32x8xf32>
    %49 = vector.shape_cast %48 : vector<32x8xf32> to vector<2x16x8xf32>
    %50 = vector.extract_strided_slice %16 {offsets = [0, 72], sizes = [32, 8], strides = [1, 1]} : vector<32x96xf32> to vector<32x8xf32>
    %51 = vector.shape_cast %50 : vector<32x8xf32> to vector<2x16x8xf32>
    %52 = arith.truncf %47 : vector<2x16x8xf32> to vector<2x16x8xbf16>
    %53 = arith.truncf %49 : vector<2x16x8xf32> to vector<2x16x8xbf16>
    "tpu.trace_start"() <{level = 10 : i32, message = "bqd,bkd->bqk"}> : () -> ()
    %cst_23 = arith.constant dense<0.000000e+00> : vector<2x16x16xf32>
    %54 = tpu.matmul %52, %53, %cst_23 {dimension_numbers = #tpu.dot_dimension_numbers<[2], [2], [1], [1], [0, 0, 0, 1, 1, 1], [0], [0]>} : vector<2x16x8xbf16>, vector<2x16x8xbf16>, vector<2x16x16xf32> -> vector<2x16x16xf32>
    "tpu.trace_stop"() : () -> ()
    %cst_24 = arith.constant dense<0xFF800000> : vector<2x16xf32>
    %55 = vector.multi_reduction <maximumf>, %54, %cst_24 [2] : vector<2x16x16xf32> to vector<2x16xf32>
    %56 = vector.shape_cast %55 : vector<2x16xf32> to vector<2x16x1xf32>
    %57 = vector.broadcast %56 : vector<2x16x1xf32> to vector<2x16x16xf32>
    %58 = arith.subf %54, %57 : vector<2x16x16xf32>
    %59 = math.exp %58 : vector<2x16x16xf32>
    %cst_25 = arith.constant dense<0.000000e+00> : vector<2x16xf32>
    %60 = vector.multi_reduction <add>, %59, %cst_25 [2] : vector<2x16x16xf32> to vector<2x16xf32>
    %61 = vector.shape_cast %60 : vector<2x16xf32> to vector<2x16x1xf32>
    %62 = tpu.reciprocal %61 {approx = true} : vector<2x16x1xf32> -> vector<2x16x1xf32>
    %63 = vector.broadcast %62 : vector<2x16x1xf32> to vector<2x16x16xf32>
    %64 = arith.mulf %59, %63 : vector<2x16x16xf32>
    %65 = arith.truncf %64 : vector<2x16x16xf32> to vector<2x16x16xbf16>
    %66 = arith.truncf %51 : vector<2x16x8xf32> to vector<2x16x8xbf16>
    "tpu.trace_start"() <{level = 10 : i32, message = "bqk,bkd->bqd"}> : () -> ()
    %cst_26 = arith.constant dense<0.000000e+00> : vector<2x16x8xf32>
    %67 = tpu.matmul %65, %66, %cst_26 {dimension_numbers = #tpu.dot_dimension_numbers<[2], [1], [1], [2], [0, 0, 0, 1, 1, 2], [0], [0]>} : vector<2x16x16xbf16>, vector<2x16x8xbf16>, vector<2x16x8xf32> -> vector<2x16x8xf32>
    "tpu.trace_stop"() : () -> ()
    %68 = vector.shape_cast %67 : vector<2x16x8xf32> to vector<32x8xf32>
    %69 = vector.extract_strided_slice %18 {offsets = [1, 0, 0], sizes = [1, 8, 32], strides = [1, 1, 1]} : vector<4x8x32xbf16> to vector<1x8x32xbf16>
    %70 = vector.shape_cast %69 : vector<1x8x32xbf16> to vector<8x32xbf16>
    %71 = arith.truncf %68 : vector<32x8xf32> to vector<32x8xbf16>
    %cst_27 = arith.constant dense<0.000000e+00> : vector<32x32xf32>
    %72 = tpu.matmul %71, %70, %cst_27 {dimension_numbers = #tpu.dot_dimension_numbers<[1], [0], [0], [1], [0, 0, 1, 1], [], []>} : vector<32x8xbf16>, vector<8x32xbf16>, vector<32x32xf32> -> vector<32x32xf32>
    %73 = arith.addf %45, %72 : vector<32x32xf32>
    %74 = vector.extract_strided_slice %16 {offsets = [0, 16], sizes = [32, 8], strides = [1, 1]} : vector<32x96xf32> to vector<32x8xf32>
    %75 = vector.shape_cast %74 : vector<32x8xf32> to vector<2x16x8xf32>
    %76 = vector.extract_strided_slice %16 {offsets = [0, 48], sizes = [32, 8], strides = [1, 1]} : vector<32x96xf32> to vector<32x8xf32>
    %77 = vector.shape_cast %76 : vector<32x8xf32> to vector<2x16x8xf32>
    %78 = vector.extract_strided_slice %16 {offsets = [0, 80], sizes = [32, 8], strides = [1, 1]} : vector<32x96xf32> to vector<32x8xf32>
    %79 = vector.shape_cast %78 : vector<32x8xf32> to vector<2x16x8xf32>
    %80 = arith.truncf %75 : vector<2x16x8xf32> to vector<2x16x8xbf16>
    %81 = arith.truncf %77 : vector<2x16x8xf32> to vector<2x16x8xbf16>
    "tpu.trace_start"() <{level = 10 : i32, message = "bqd,bkd->bqk"}> : () -> ()
    %cst_28 = arith.constant dense<0.000000e+00> : vector<2x16x16xf32>
    %82 = tpu.matmul %80, %81, %cst_28 {dimension_numbers = #tpu.dot_dimension_numbers<[2], [2], [1], [1], [0, 0, 0, 1, 1, 1], [0], [0]>} : vector<2x16x8xbf16>, vector<2x16x8xbf16>, vector<2x16x16xf32> -> vector<2x16x16xf32>
    "tpu.trace_stop"() : () -> ()
    %cst_29 = arith.constant dense<0xFF800000> : vector<2x16xf32>
    %83 = vector.multi_reduction <maximumf>, %82, %cst_29 [2] : vector<2x16x16xf32> to vector<2x16xf32>
    %84 = vector.shape_cast %83 : vector<2x16xf32> to vector<2x16x1xf32>
    %85 = vector.broadcast %84 : vector<2x16x1xf32> to vector<2x16x16xf32>
    %86 = arith.subf %82, %85 : vector<2x16x16xf32>
    %87 = math.exp %86 : vector<2x16x16xf32>
    %cst_30 = arith.constant dense<0.000000e+00> : vector<2x16xf32>
    %88 = vector.multi_reduction <add>, %87, %cst_30 [2] : vector<2x16x16xf32> to vector<2x16xf32>
    %89 = vector.shape_cast %88 : vector<2x16xf32> to vector<2x16x1xf32>
    %90 = tpu.reciprocal %89 {approx = true} : vector<2x16x1xf32> -> vector<2x16x1xf32>
    %91 = vector.broadcast %90 : vector<2x16x1xf32> to vector<2x16x16xf32>
    %92 = arith.mulf %87, %91 : vector<2x16x16xf32>
    %93 = arith.truncf %92 : vector<2x16x16xf32> to vector<2x16x16xbf16>
    %94 = arith.truncf %79 : vector<2x16x8xf32> to vector<2x16x8xbf16>
    "tpu.trace_start"() <{level = 10 : i32, message = "bqk,bkd->bqd"}> : () -> ()
    %cst_31 = arith.constant dense<0.000000e+00> : vector<2x16x8xf32>
    %95 = tpu.matmul %93, %94, %cst_31 {dimension_numbers = #tpu.dot_dimension_numbers<[2], [1], [1], [2], [0, 0, 0, 1, 1, 2], [0], [0]>} : vector<2x16x16xbf16>, vector<2x16x8xbf16>, vector<2x16x8xf32> -> vector<2x16x8xf32>
    "tpu.trace_stop"() : () -> ()
    %96 = vector.shape_cast %95 : vector<2x16x8xf32> to vector<32x8xf32>
    %97 = vector.extract_strided_slice %18 {offsets = [2, 0, 0], sizes = [1, 8, 32], strides = [1, 1, 1]} : vector<4x8x32xbf16> to vector<1x8x32xbf16>
    %98 = vector.shape_cast %97 : vector<1x8x32xbf16> to vector<8x32xbf16>
    %99 = arith.truncf %96 : vector<32x8xf32> to vector<32x8xbf16>
    %cst_32 = arith.constant dense<0.000000e+00> : vector<32x32xf32>
    %100 = tpu.matmul %99, %98, %cst_32 {dimension_numbers = #tpu.dot_dimension_numbers<[1], [0], [0], [1], [0, 0, 1, 1], [], []>} : vector<32x8xbf16>, vector<8x32xbf16>, vector<32x32xf32> -> vector<32x32xf32>
    %101 = arith.addf %73, %100 : vector<32x32xf32>
    %102 = vector.extract_strided_slice %16 {offsets = [0, 24], sizes = [32, 8], strides = [1, 1]} : vector<32x96xf32> to vector<32x8xf32>
    %103 = vector.shape_cast %102 : vector<32x8xf32> to vector<2x16x8xf32>
    %104 = vector.extract_strided_slice %16 {offsets = [0, 56], sizes = [32, 8], strides = [1, 1]} : vector<32x96xf32> to vector<32x8xf32>
    %105 = vector.shape_cast %104 : vector<32x8xf32> to vector<2x16x8xf32>
    %106 = vector.extract_strided_slice %16 {offsets = [0, 88], sizes = [32, 8], strides = [1, 1]} : vector<32x96xf32> to vector<32x8xf32>
    %107 = vector.shape_cast %106 : vector<32x8xf32> to vector<2x16x8xf32>
    %108 = arith.truncf %103 : vector<2x16x8xf32> to vector<2x16x8xbf16>
    %109 = arith.truncf %105 : vector<2x16x8xf32> to vector<2x16x8xbf16>
    "tpu.trace_start"() <{level = 10 : i32, message = "bqd,bkd->bqk"}> : () -> ()
    %cst_33 = arith.constant dense<0.000000e+00> : vector<2x16x16xf32>
    %110 = tpu.matmul %108, %109, %cst_33 {dimension_numbers = #tpu.dot_dimension_numbers<[2], [2], [1], [1], [0, 0, 0, 1, 1, 1], [0], [0]>} : vector<2x16x8xbf16>, vector<2x16x8xbf16>, vector<2x16x16xf32> -> vector<2x16x16xf32>
    "tpu.trace_stop"() : () -> ()
    %cst_34 = arith.constant dense<0xFF800000> : vector<2x16xf32>
    %111 = vector.multi_reduction <maximumf>, %110, %cst_34 [2] : vector<2x16x16xf32> to vector<2x16xf32>
    %112 = vector.shape_cast %111 : vector<2x16xf32> to vector<2x16x1xf32>
    %113 = vector.broadcast %112 : vector<2x16x1xf32> to vector<2x16x16xf32>
    %114 = arith.subf %110, %113 : vector<2x16x16xf32>
    %115 = math.exp %114 : vector<2x16x16xf32>
    %cst_35 = arith.constant dense<0.000000e+00> : vector<2x16xf32>
    %116 = vector.multi_reduction <add>, %115, %cst_35 [2] : vector<2x16x16xf32> to vector<2x16xf32>
    %117 = vector.shape_cast %116 : vector<2x16xf32> to vector<2x16x1xf32>
    %118 = tpu.reciprocal %117 {approx = true} : vector<2x16x1xf32> -> vector<2x16x1xf32>
    %119 = vector.broadcast %118 : vector<2x16x1xf32> to vector<2x16x16xf32>
    %120 = arith.mulf %115, %119 : vector<2x16x16xf32>
    %121 = arith.truncf %120 : vector<2x16x16xf32> to vector<2x16x16xbf16>
    %122 = arith.truncf %107 : vector<2x16x8xf32> to vector<2x16x8xbf16>
    "tpu.trace_start"() <{level = 10 : i32, message = "bqk,bkd->bqd"}> : () -> ()
    %cst_36 = arith.constant dense<0.000000e+00> : vector<2x16x8xf32>
    %123 = tpu.matmul %121, %122, %cst_36 {dimension_numbers = #tpu.dot_dimension_numbers<[2], [1], [1], [2], [0, 0, 0, 1, 1, 2], [0], [0]>} : vector<2x16x16xbf16>, vector<2x16x8xbf16>, vector<2x16x8xf32> -> vector<2x16x8xf32>
    "tpu.trace_stop"() : () -> ()
    %124 = vector.shape_cast %123 : vector<2x16x8xf32> to vector<32x8xf32>
    %125 = vector.extract_strided_slice %18 {offsets = [3, 0, 0], sizes = [1, 8, 32], strides = [1, 1, 1]} : vector<4x8x32xbf16> to vector<1x8x32xbf16>
    %126 = vector.shape_cast %125 : vector<1x8x32xbf16> to vector<8x32xbf16>
    %127 = arith.truncf %124 : vector<32x8xf32> to vector<32x8xbf16>
    %cst_37 = arith.constant dense<0.000000e+00> : vector<32x32xf32>
    %128 = tpu.matmul %127, %126, %cst_37 {dimension_numbers = #tpu.dot_dimension_numbers<[1], [0], [0], [1], [0, 0, 1, 1], [], []>} : vector<32x8xbf16>, vector<8x32xbf16>, vector<32x32xf32> -> vector<32x32xf32>
    %129 = arith.addf %101, %128 : vector<32x32xf32>
    %c0_38 = arith.constant 0 : index
    %c0_39 = arith.constant 0 : index
    %c0_40 = arith.constant 0 : index
    %130 = vector.load %arg7[%c0_38, %c0_39, %c0_40] : memref<2x1x32xf32, #tpu.memory_space<vmem>>, vector<1x1x32xf32>
    %131 = vector.shape_cast %130 : vector<1x1x32xf32> to vector<1x32xf32>
    %132 = vector.broadcast %131 : vector<1x32xf32> to vector<32x32xf32>
    %133 = arith.addf %129, %132 : vector<32x32xf32>
    %c0_41 = arith.constant 0 : index
    %c0_42 = arith.constant 0 : index
    %c0_43 = arith.constant 0 : index
    %134 = vector.load %arg12[%c0_41, %c0_42, %c0_43] : memref<2x1x32xf32, #tpu.memory_space<vmem>>, vector<1x1x32xf32>
    %135 = vector.shape_cast %134 : vector<1x1x32xf32> to vector<1x32xf32>
    %c0_44 = arith.constant 0 : index
    %c0_45 = arith.constant 0 : index
    %c0_46 = arith.constant 0 : index
    %136 = vector.load %arg13[%c0_44, %c0_45, %c0_46] : memref<2x1x32xf32, #tpu.memory_space<vmem>>, vector<1x1x32xf32>
    %137 = vector.shape_cast %136 : vector<1x1x32xf32> to vector<1x32xf32>
    %138 = arith.addf %8, %133 : vector<32x32xf32>
    %cst_47 = arith.constant dense<0.000000e+00> : vector<32xf32>
    %139 = vector.multi_reduction <add>, %138, %cst_47 [0] : vector<32x32xf32> to vector<32xf32>
    %140 = vector.shape_cast %139 : vector<32xf32> to vector<1x32xf32>
    %cst_48 = arith.constant 3.125000e-02 : f32
    %141 = vector.broadcast %cst_48 : f32 to vector<1x32xf32>
    %142 = arith.mulf %140, %141 : vector<1x32xf32>
    %143 = vector.broadcast %142 : vector<1x32xf32> to vector<32x32xf32>
    %144 = arith.subf %138, %143 : vector<32x32xf32>
    %145 = arith.mulf %144, %144 : vector<32x32xf32>
    %cst_49 = arith.constant dense<0.000000e+00> : vector<32xf32>
    %146 = vector.multi_reduction <add>, %145, %cst_49 [0] : vector<32x32xf32> to vector<32xf32>
    %147 = vector.shape_cast %146 : vector<32xf32> to vector<1x32xf32>
    %cst_50 = arith.constant 3.125000e-02 : f32
    %148 = vector.broadcast %cst_50 : f32 to vector<1x32xf32>
    %149 = arith.mulf %147, %148 : vector<1x32xf32>
    %cst_51 = arith.constant 9.99999974E-6 : f32
    %150 = vector.broadcast %cst_51 : f32 to vector<1x32xf32>
    %151 = arith.addf %149, %150 : vector<1x32xf32>
    %152 = math.rsqrt %151 : vector<1x32xf32>
    %153 = arith.mulf %152, %135 : vector<1x32xf32>
    %154 = vector.broadcast %153 : vector<1x32xf32> to vector<32x32xf32>
    %155 = arith.mulf %144, %154 : vector<32x32xf32>
    %156 = vector.broadcast %137 : vector<1x32xf32> to vector<32x32xf32>
    %157 = arith.addf %155, %156 : vector<32x32xf32>
    %c0_52 = arith.constant 0 : index
    %c0_53 = arith.constant 0 : index
    %c0_54 = arith.constant 0 : index
    %158 = vector.load %arg8[%c0_52, %c0_53, %c0_54] : memref<2x32x64xbf16, #tpu.memory_space<vmem>>, vector<1x32x64xbf16>
    %159 = vector.shape_cast %158 : vector<1x32x64xbf16> to vector<32x64xbf16>
    %160 = arith.truncf %157 : vector<32x32xf32> to vector<32x32xbf16>
    %cst_55 = arith.constant dense<0.000000e+00> : vector<32x64xf32>
    %161 = tpu.matmul %160, %159, %cst_55 {dimension_numbers = #tpu.dot_dimension_numbers<[1], [0], [0], [1], [0, 0, 1, 1], [], []>} : vector<32x32xbf16>, vector<32x64xbf16>, vector<32x64xf32> -> vector<32x64xf32>
    %c0_56 = arith.constant 0 : index
    %c0_57 = arith.constant 0 : index
    %c0_58 = arith.constant 0 : index
    %162 = vector.load %arg9[%c0_56, %c0_57, %c0_58] : memref<2x1x64xf32, #tpu.memory_space<vmem>>, vector<1x1x64xf32>
    %163 = vector.shape_cast %162 : vector<1x1x64xf32> to vector<1x64xf32>
    %164 = vector.broadcast %163 : vector<1x64xf32> to vector<32x64xf32>
    %165 = arith.addf %161, %164 : vector<32x64xf32>
    %cst_59 = arith.constant 5.000000e-01 : f32
    %166 = vector.broadcast %cst_59 : f32 to vector<32x64xf32>
    %167 = arith.mulf %166, %165 : vector<32x64xf32>
    %cst_60 = arith.constant 4.471500e-02 : f32
    %168 = vector.broadcast %cst_60 : f32 to vector<32x64xf32>
    %169 = arith.mulf %168, %165 : vector<32x64xf32>
    %170 = arith.mulf %169, %165 : vector<32x64xf32>
    %171 = arith.mulf %170, %165 : vector<32x64xf32>
    %172 = arith.addf %165, %171 : vector<32x64xf32>
    %cst_61 = arith.constant 0.797884583 : f32
    %173 = vector.broadcast %cst_61 : f32 to vector<32x64xf32>
    %174 = arith.mulf %173, %172 : vector<32x64xf32>
    %175 = math.tanh %174 : vector<32x64xf32>
    %cst_62 = arith.constant 1.000000e+00 : f32
    %176 = vector.broadcast %cst_62 : f32 to vector<32x64xf32>
    %177 = arith.addf %176, %175 : vector<32x64xf32>
    %178 = arith.mulf %167, %177 : vector<32x64xf32>
    %c0_63 = arith.constant 0 : index
    %c0_64 = arith.constant 0 : index
    %c0_65 = arith.constant 0 : index
    %179 = vector.load %arg10[%c0_63, %c0_64, %c0_65] : memref<2x64x32xbf16, #tpu.memory_space<vmem>>, vector<1x64x32xbf16>
    %180 = vector.shape_cast %179 : vector<1x64x32xbf16> to vector<64x32xbf16>
    %181 = arith.truncf %178 : vector<32x64xf32> to vector<32x64xbf16>
    %cst_66 = arith.constant dense<0.000000e+00> : vector<32x32xf32>
    %182 = tpu.matmul %181, %180, %cst_66 {dimension_numbers = #tpu.dot_dimension_numbers<[1], [0], [0], [1], [0, 0, 1, 1], [], []>} : vector<32x64xbf16>, vector<64x32xbf16>, vector<32x32xf32> -> vector<32x32xf32>
    %c0_67 = arith.constant 0 : index
    %c0_68 = arith.constant 0 : index
    %c0_69 = arith.constant 0 : index
    %183 = vector.load %arg11[%c0_67, %c0_68, %c0_69] : memref<2x1x32xf32, #tpu.memory_space<vmem>>, vector<1x1x32xf32>
    %184 = vector.shape_cast %183 : vector<1x1x32xf32> to vector<1x32xf32>
    %185 = vector.broadcast %184 : vector<1x32xf32> to vector<32x32xf32>
    %186 = arith.addf %182, %185 : vector<32x32xf32>
    %c0_70 = arith.constant 0 : index
    %c0_71 = arith.constant 0 : index
    %c0_72 = arith.constant 0 : index
    %187 = vector.load %arg14[%c0_70, %c0_71, %c0_72] : memref<2x1x32xf32, #tpu.memory_space<vmem>>, vector<1x1x32xf32>
    %188 = vector.shape_cast %187 : vector<1x1x32xf32> to vector<1x32xf32>
    %c0_73 = arith.constant 0 : index
    %c0_74 = arith.constant 0 : index
    %c0_75 = arith.constant 0 : index
    %189 = vector.load %arg15[%c0_73, %c0_74, %c0_75] : memref<2x1x32xf32, #tpu.memory_space<vmem>>, vector<1x1x32xf32>
    %190 = vector.shape_cast %189 : vector<1x1x32xf32> to vector<1x32xf32>
    %191 = arith.addf %157, %186 : vector<32x32xf32>
    %cst_76 = arith.constant dense<0.000000e+00> : vector<32xf32>
    %192 = vector.multi_reduction <add>, %191, %cst_76 [0] : vector<32x32xf32> to vector<32xf32>
    %193 = vector.shape_cast %192 : vector<32xf32> to vector<1x32xf32>
    %cst_77 = arith.constant 3.125000e-02 : f32
    %194 = vector.broadcast %cst_77 : f32 to vector<1x32xf32>
    %195 = arith.mulf %193, %194 : vector<1x32xf32>
    %196 = vector.broadcast %195 : vector<1x32xf32> to vector<32x32xf32>
    %197 = arith.subf %191, %196 : vector<32x32xf32>
    %198 = arith.mulf %197, %197 : vector<32x32xf32>
    %cst_78 = arith.constant dense<0.000000e+00> : vector<32xf32>
    %199 = vector.multi_reduction <add>, %198, %cst_78 [0] : vector<32x32xf32> to vector<32xf32>
    %200 = vector.shape_cast %199 : vector<32xf32> to vector<1x32xf32>
    %cst_79 = arith.constant 3.125000e-02 : f32
    %201 = vector.broadcast %cst_79 : f32 to vector<1x32xf32>
    %202 = arith.mulf %200, %201 : vector<1x32xf32>
    %cst_80 = arith.constant 9.99999974E-6 : f32
    %203 = vector.broadcast %cst_80 : f32 to vector<1x32xf32>
    %204 = arith.addf %202, %203 : vector<1x32xf32>
    %205 = math.rsqrt %204 : vector<1x32xf32>
    %206 = arith.mulf %205, %188 : vector<1x32xf32>
    %207 = vector.broadcast %206 : vector<1x32xf32> to vector<32x32xf32>
    %208 = arith.mulf %197, %207 : vector<32x32xf32>
    %209 = vector.broadcast %190 : vector<1x32xf32> to vector<32x32xf32>
    %210 = arith.addf %208, %209 : vector<32x32xf32>
    %c1 = arith.constant 1 : index
    %c0_81 = arith.constant 0 : index
    %c0_82 = arith.constant 0 : index
    %211 = vector.load %arg4[%c1, %c0_81, %c0_82] : memref<2x32x96xbf16, #tpu.memory_space<vmem>>, vector<1x32x96xbf16>
    %212 = vector.shape_cast %211 : vector<1x32x96xbf16> to vector<32x96xbf16>
    %213 = arith.truncf %210 : vector<32x32xf32> to vector<32x32xbf16>
    %cst_83 = arith.constant dense<0.000000e+00> : vector<32x96xf32>
    %214 = tpu.matmul %213, %212, %cst_83 {dimension_numbers = #tpu.dot_dimension_numbers<[1], [0], [0], [1], [0, 0, 1, 1], [], []>} : vector<32x32xbf16>, vector<32x96xbf16>, vector<32x96xf32> -> vector<32x96xf32>
    %c1_84 = arith.constant 1 : index
    %c0_85 = arith.constant 0 : index
    %c0_86 = arith.constant 0 : index
    %215 = vector.load %arg5[%c1_84, %c0_85, %c0_86] : memref<2x1x96xf32, #tpu.memory_space<vmem>>, vector<1x1x96xf32>
    %216 = vector.shape_cast %215 : vector<1x1x96xf32> to vector<1x96xf32>
    %217 = vector.broadcast %216 : vector<1x96xf32> to vector<32x96xf32>
    %218 = arith.addf %214, %217 : vector<32x96xf32>
    %c1_87 = arith.constant 1 : index
    %c0_88 = arith.constant 0 : index
    %c0_89 = arith.constant 0 : index
    %c0_90 = arith.constant 0 : index
    %219 = vector.load %arg6[%c1_87, %c0_88, %c0_89, %c0_90] : memref<2x4x8x32xbf16, #tpu.memory_space<vmem>>, vector<1x4x8x32xbf16>
    %220 = vector.shape_cast %219 : vector<1x4x8x32xbf16> to vector<4x8x32xbf16>
    %221 = vector.extract_strided_slice %218 {offsets = [0, 0], sizes = [32, 8], strides = [1, 1]} : vector<32x96xf32> to vector<32x8xf32>
    %222 = vector.shape_cast %221 : vector<32x8xf32> to vector<2x16x8xf32>
    %223 = vector.extract_strided_slice %218 {offsets = [0, 32], sizes = [32, 8], strides = [1, 1]} : vector<32x96xf32> to vector<32x8xf32>
    %224 = vector.shape_cast %223 : vector<32x8xf32> to vector<2x16x8xf32>
    %225 = vector.extract_strided_slice %218 {offsets = [0, 64], sizes = [32, 8], strides = [1, 1]} : vector<32x96xf32> to vector<32x8xf32>
    %226 = vector.shape_cast %225 : vector<32x8xf32> to vector<2x16x8xf32>
    %227 = arith.truncf %222 : vector<2x16x8xf32> to vector<2x16x8xbf16>
    %228 = arith.truncf %224 : vector<2x16x8xf32> to vector<2x16x8xbf16>
    "tpu.trace_start"() <{level = 10 : i32, message = "bqd,bkd->bqk"}> : () -> ()
    %cst_91 = arith.constant dense<0.000000e+00> : vector<2x16x16xf32>
    %229 = tpu.matmul %227, %228, %cst_91 {dimension_numbers = #tpu.dot_dimension_numbers<[2], [2], [1], [1], [0, 0, 0, 1, 1, 1], [0], [0]>} : vector<2x16x8xbf16>, vector<2x16x8xbf16>, vector<2x16x16xf32> -> vector<2x16x16xf32>
    "tpu.trace_stop"() : () -> ()
    %cst_92 = arith.constant dense<0xFF800000> : vector<2x16xf32>
    %230 = vector.multi_reduction <maximumf>, %229, %cst_92 [2] : vector<2x16x16xf32> to vector<2x16xf32>
    %231 = vector.shape_cast %230 : vector<2x16xf32> to vector<2x16x1xf32>
    %232 = vector.broadcast %231 : vector<2x16x1xf32> to vector<2x16x16xf32>
    %233 = arith.subf %229, %232 : vector<2x16x16xf32>
    %234 = math.exp %233 : vector<2x16x16xf32>
    %cst_93 = arith.constant dense<0.000000e+00> : vector<2x16xf32>
    %235 = vector.multi_reduction <add>, %234, %cst_93 [2] : vector<2x16x16xf32> to vector<2x16xf32>
    %236 = vector.shape_cast %235 : vector<2x16xf32> to vector<2x16x1xf32>
    %237 = tpu.reciprocal %236 {approx = true} : vector<2x16x1xf32> -> vector<2x16x1xf32>
    %238 = vector.broadcast %237 : vector<2x16x1xf32> to vector<2x16x16xf32>
    %239 = arith.mulf %234, %238 : vector<2x16x16xf32>
    %240 = arith.truncf %239 : vector<2x16x16xf32> to vector<2x16x16xbf16>
    %241 = arith.truncf %226 : vector<2x16x8xf32> to vector<2x16x8xbf16>
    "tpu.trace_start"() <{level = 10 : i32, message = "bqk,bkd->bqd"}> : () -> ()
    %cst_94 = arith.constant dense<0.000000e+00> : vector<2x16x8xf32>
    %242 = tpu.matmul %240, %241, %cst_94 {dimension_numbers = #tpu.dot_dimension_numbers<[2], [1], [1], [2], [0, 0, 0, 1, 1, 2], [0], [0]>} : vector<2x16x16xbf16>, vector<2x16x8xbf16>, vector<2x16x8xf32> -> vector<2x16x8xf32>
    "tpu.trace_stop"() : () -> ()
    %243 = vector.shape_cast %242 : vector<2x16x8xf32> to vector<32x8xf32>
    %244 = vector.extract_strided_slice %220 {offsets = [0, 0, 0], sizes = [1, 8, 32], strides = [1, 1, 1]} : vector<4x8x32xbf16> to vector<1x8x32xbf16>
    %245 = vector.shape_cast %244 : vector<1x8x32xbf16> to vector<8x32xbf16>
    %246 = arith.truncf %243 : vector<32x8xf32> to vector<32x8xbf16>
    %cst_95 = arith.constant dense<0.000000e+00> : vector<32x32xf32>
    %247 = tpu.matmul %246, %245, %cst_95 {dimension_numbers = #tpu.dot_dimension_numbers<[1], [0], [0], [1], [0, 0, 1, 1], [], []>} : vector<32x8xbf16>, vector<8x32xbf16>, vector<32x32xf32> -> vector<32x32xf32>
    %248 = vector.extract_strided_slice %218 {offsets = [0, 8], sizes = [32, 8], strides = [1, 1]} : vector<32x96xf32> to vector<32x8xf32>
    %249 = vector.shape_cast %248 : vector<32x8xf32> to vector<2x16x8xf32>
    %250 = vector.extract_strided_slice %218 {offsets = [0, 40], sizes = [32, 8], strides = [1, 1]} : vector<32x96xf32> to vector<32x8xf32>
    %251 = vector.shape_cast %250 : vector<32x8xf32> to vector<2x16x8xf32>
    %252 = vector.extract_strided_slice %218 {offsets = [0, 72], sizes = [32, 8], strides = [1, 1]} : vector<32x96xf32> to vector<32x8xf32>
    %253 = vector.shape_cast %252 : vector<32x8xf32> to vector<2x16x8xf32>
    %254 = arith.truncf %249 : vector<2x16x8xf32> to vector<2x16x8xbf16>
    %255 = arith.truncf %251 : vector<2x16x8xf32> to vector<2x16x8xbf16>
    "tpu.trace_start"() <{level = 10 : i32, message = "bqd,bkd->bqk"}> : () -> ()
    %cst_96 = arith.constant dense<0.000000e+00> : vector<2x16x16xf32>
    %256 = tpu.matmul %254, %255, %cst_96 {dimension_numbers = #tpu.dot_dimension_numbers<[2], [2], [1], [1], [0, 0, 0, 1, 1, 1], [0], [0]>} : vector<2x16x8xbf16>, vector<2x16x8xbf16>, vector<2x16x16xf32> -> vector<2x16x16xf32>
    "tpu.trace_stop"() : () -> ()
    %cst_97 = arith.constant dense<0xFF800000> : vector<2x16xf32>
    %257 = vector.multi_reduction <maximumf>, %256, %cst_97 [2] : vector<2x16x16xf32> to vector<2x16xf32>
    %258 = vector.shape_cast %257 : vector<2x16xf32> to vector<2x16x1xf32>
    %259 = vector.broadcast %258 : vector<2x16x1xf32> to vector<2x16x16xf32>
    %260 = arith.subf %256, %259 : vector<2x16x16xf32>
    %261 = math.exp %260 : vector<2x16x16xf32>
    %cst_98 = arith.constant dense<0.000000e+00> : vector<2x16xf32>
    %262 = vector.multi_reduction <add>, %261, %cst_98 [2] : vector<2x16x16xf32> to vector<2x16xf32>
    %263 = vector.shape_cast %262 : vector<2x16xf32> to vector<2x16x1xf32>
    %264 = tpu.reciprocal %263 {approx = true} : vector<2x16x1xf32> -> vector<2x16x1xf32>
    %265 = vector.broadcast %264 : vector<2x16x1xf32> to vector<2x16x16xf32>
    %266 = arith.mulf %261, %265 : vector<2x16x16xf32>
    %267 = arith.truncf %266 : vector<2x16x16xf32> to vector<2x16x16xbf16>
    %268 = arith.truncf %253 : vector<2x16x8xf32> to vector<2x16x8xbf16>
    "tpu.trace_start"() <{level = 10 : i32, message = "bqk,bkd->bqd"}> : () -> ()
    %cst_99 = arith.constant dense<0.000000e+00> : vector<2x16x8xf32>
    %269 = tpu.matmul %267, %268, %cst_99 {dimension_numbers = #tpu.dot_dimension_numbers<[2], [1], [1], [2], [0, 0, 0, 1, 1, 2], [0], [0]>} : vector<2x16x16xbf16>, vector<2x16x8xbf16>, vector<2x16x8xf32> -> vector<2x16x8xf32>
    "tpu.trace_stop"() : () -> ()
    %270 = vector.shape_cast %269 : vector<2x16x8xf32> to vector<32x8xf32>
    %271 = vector.extract_strided_slice %220 {offsets = [1, 0, 0], sizes = [1, 8, 32], strides = [1, 1, 1]} : vector<4x8x32xbf16> to vector<1x8x32xbf16>
    %272 = vector.shape_cast %271 : vector<1x8x32xbf16> to vector<8x32xbf16>
    %273 = arith.truncf %270 : vector<32x8xf32> to vector<32x8xbf16>
    %cst_100 = arith.constant dense<0.000000e+00> : vector<32x32xf32>
    %274 = tpu.matmul %273, %272, %cst_100 {dimension_numbers = #tpu.dot_dimension_numbers<[1], [0], [0], [1], [0, 0, 1, 1], [], []>} : vector<32x8xbf16>, vector<8x32xbf16>, vector<32x32xf32> -> vector<32x32xf32>
    %275 = arith.addf %247, %274 : vector<32x32xf32>
    %276 = vector.extract_strided_slice %218 {offsets = [0, 16], sizes = [32, 8], strides = [1, 1]} : vector<32x96xf32> to vector<32x8xf32>
    %277 = vector.shape_cast %276 : vector<32x8xf32> to vector<2x16x8xf32>
    %278 = vector.extract_strided_slice %218 {offsets = [0, 48], sizes = [32, 8], strides = [1, 1]} : vector<32x96xf32> to vector<32x8xf32>
    %279 = vector.shape_cast %278 : vector<32x8xf32> to vector<2x16x8xf32>
    %280 = vector.extract_strided_slice %218 {offsets = [0, 80], sizes = [32, 8], strides = [1, 1]} : vector<32x96xf32> to vector<32x8xf32>
    %281 = vector.shape_cast %280 : vector<32x8xf32> to vector<2x16x8xf32>
    %282 = arith.truncf %277 : vector<2x16x8xf32> to vector<2x16x8xbf16>
    %283 = arith.truncf %279 : vector<2x16x8xf32> to vector<2x16x8xbf16>
    "tpu.trace_start"() <{level = 10 : i32, message = "bqd,bkd->bqk"}> : () -> ()
    %cst_101 = arith.constant dense<0.000000e+00> : vector<2x16x16xf32>
    %284 = tpu.matmul %282, %283, %cst_101 {dimension_numbers = #tpu.dot_dimension_numbers<[2], [2], [1], [1], [0, 0, 0, 1, 1, 1], [0], [0]>} : vector<2x16x8xbf16>, vector<2x16x8xbf16>, vector<2x16x16xf32> -> vector<2x16x16xf32>
    "tpu.trace_stop"() : () -> ()
    %cst_102 = arith.constant dense<0xFF800000> : vector<2x16xf32>
    %285 = vector.multi_reduction <maximumf>, %284, %cst_102 [2] : vector<2x16x16xf32> to vector<2x16xf32>
    %286 = vector.shape_cast %285 : vector<2x16xf32> to vector<2x16x1xf32>
    %287 = vector.broadcast %286 : vector<2x16x1xf32> to vector<2x16x16xf32>
    %288 = arith.subf %284, %287 : vector<2x16x16xf32>
    %289 = math.exp %288 : vector<2x16x16xf32>
    %cst_103 = arith.constant dense<0.000000e+00> : vector<2x16xf32>
    %290 = vector.multi_reduction <add>, %289, %cst_103 [2] : vector<2x16x16xf32> to vector<2x16xf32>
    %291 = vector.shape_cast %290 : vector<2x16xf32> to vector<2x16x1xf32>
    %292 = tpu.reciprocal %291 {approx = true} : vector<2x16x1xf32> -> vector<2x16x1xf32>
    %293 = vector.broadcast %292 : vector<2x16x1xf32> to vector<2x16x16xf32>
    %294 = arith.mulf %289, %293 : vector<2x16x16xf32>
    %295 = arith.truncf %294 : vector<2x16x16xf32> to vector<2x16x16xbf16>
    %296 = arith.truncf %281 : vector<2x16x8xf32> to vector<2x16x8xbf16>
    "tpu.trace_start"() <{level = 10 : i32, message = "bqk,bkd->bqd"}> : () -> ()
    %cst_104 = arith.constant dense<0.000000e+00> : vector<2x16x8xf32>
    %297 = tpu.matmul %295, %296, %cst_104 {dimension_numbers = #tpu.dot_dimension_numbers<[2], [1], [1], [2], [0, 0, 0, 1, 1, 2], [0], [0]>} : vector<2x16x16xbf16>, vector<2x16x8xbf16>, vector<2x16x8xf32> -> vector<2x16x8xf32>
    "tpu.trace_stop"() : () -> ()
    %298 = vector.shape_cast %297 : vector<2x16x8xf32> to vector<32x8xf32>
    %299 = vector.extract_strided_slice %220 {offsets = [2, 0, 0], sizes = [1, 8, 32], strides = [1, 1, 1]} : vector<4x8x32xbf16> to vector<1x8x32xbf16>
    %300 = vector.shape_cast %299 : vector<1x8x32xbf16> to vector<8x32xbf16>
    %301 = arith.truncf %298 : vector<32x8xf32> to vector<32x8xbf16>
    %cst_105 = arith.constant dense<0.000000e+00> : vector<32x32xf32>
    %302 = tpu.matmul %301, %300, %cst_105 {dimension_numbers = #tpu.dot_dimension_numbers<[1], [0], [0], [1], [0, 0, 1, 1], [], []>} : vector<32x8xbf16>, vector<8x32xbf16>, vector<32x32xf32> -> vector<32x32xf32>
    %303 = arith.addf %275, %302 : vector<32x32xf32>
    %304 = vector.extract_strided_slice %218 {offsets = [0, 24], sizes = [32, 8], strides = [1, 1]} : vector<32x96xf32> to vector<32x8xf32>
    %305 = vector.shape_cast %304 : vector<32x8xf32> to vector<2x16x8xf32>
    %306 = vector.extract_strided_slice %218 {offsets = [0, 56], sizes = [32, 8], strides = [1, 1]} : vector<32x96xf32> to vector<32x8xf32>
    %307 = vector.shape_cast %306 : vector<32x8xf32> to vector<2x16x8xf32>
    %308 = vector.extract_strided_slice %218 {offsets = [0, 88], sizes = [32, 8], strides = [1, 1]} : vector<32x96xf32> to vector<32x8xf32>
    %309 = vector.shape_cast %308 : vector<32x8xf32> to vector<2x16x8xf32>
    %310 = arith.truncf %305 : vector<2x16x8xf32> to vector<2x16x8xbf16>
    %311 = arith.truncf %307 : vector<2x16x8xf32> to vector<2x16x8xbf16>
    "tpu.trace_start"() <{level = 10 : i32, message = "bqd,bkd->bqk"}> : () -> ()
    %cst_106 = arith.constant dense<0.000000e+00> : vector<2x16x16xf32>
    %312 = tpu.matmul %310, %311, %cst_106 {dimension_numbers = #tpu.dot_dimension_numbers<[2], [2], [1], [1], [0, 0, 0, 1, 1, 1], [0], [0]>} : vector<2x16x8xbf16>, vector<2x16x8xbf16>, vector<2x16x16xf32> -> vector<2x16x16xf32>
    "tpu.trace_stop"() : () -> ()
    %cst_107 = arith.constant dense<0xFF800000> : vector<2x16xf32>
    %313 = vector.multi_reduction <maximumf>, %312, %cst_107 [2] : vector<2x16x16xf32> to vector<2x16xf32>
    %314 = vector.shape_cast %313 : vector<2x16xf32> to vector<2x16x1xf32>
    %315 = vector.broadcast %314 : vector<2x16x1xf32> to vector<2x16x16xf32>
    %316 = arith.subf %312, %315 : vector<2x16x16xf32>
    %317 = math.exp %316 : vector<2x16x16xf32>
    %cst_108 = arith.constant dense<0.000000e+00> : vector<2x16xf32>
    %318 = vector.multi_reduction <add>, %317, %cst_108 [2] : vector<2x16x16xf32> to vector<2x16xf32>
    %319 = vector.shape_cast %318 : vector<2x16xf32> to vector<2x16x1xf32>
    %320 = tpu.reciprocal %319 {approx = true} : vector<2x16x1xf32> -> vector<2x16x1xf32>
    %321 = vector.broadcast %320 : vector<2x16x1xf32> to vector<2x16x16xf32>
    %322 = arith.mulf %317, %321 : vector<2x16x16xf32>
    %323 = arith.truncf %322 : vector<2x16x16xf32> to vector<2x16x16xbf16>
    %324 = arith.truncf %309 : vector<2x16x8xf32> to vector<2x16x8xbf16>
    "tpu.trace_start"() <{level = 10 : i32, message = "bqk,bkd->bqd"}> : () -> ()
    %cst_109 = arith.constant dense<0.000000e+00> : vector<2x16x8xf32>
    %325 = tpu.matmul %323, %324, %cst_109 {dimension_numbers = #tpu.dot_dimension_numbers<[2], [1], [1], [2], [0, 0, 0, 1, 1, 2], [0], [0]>} : vector<2x16x16xbf16>, vector<2x16x8xbf16>, vector<2x16x8xf32> -> vector<2x16x8xf32>
    "tpu.trace_stop"() : () -> ()
    %326 = vector.shape_cast %325 : vector<2x16x8xf32> to vector<32x8xf32>
    %327 = vector.extract_strided_slice %220 {offsets = [3, 0, 0], sizes = [1, 8, 32], strides = [1, 1, 1]} : vector<4x8x32xbf16> to vector<1x8x32xbf16>
    %328 = vector.shape_cast %327 : vector<1x8x32xbf16> to vector<8x32xbf16>
    %329 = arith.truncf %326 : vector<32x8xf32> to vector<32x8xbf16>
    %cst_110 = arith.constant dense<0.000000e+00> : vector<32x32xf32>
    %330 = tpu.matmul %329, %328, %cst_110 {dimension_numbers = #tpu.dot_dimension_numbers<[1], [0], [0], [1], [0, 0, 1, 1], [], []>} : vector<32x8xbf16>, vector<8x32xbf16>, vector<32x32xf32> -> vector<32x32xf32>
    %331 = arith.addf %303, %330 : vector<32x32xf32>
    %c1_111 = arith.constant 1 : index
    %c0_112 = arith.constant 0 : index
    %c0_113 = arith.constant 0 : index
    %332 = vector.load %arg7[%c1_111, %c0_112, %c0_113] : memref<2x1x32xf32, #tpu.memory_space<vmem>>, vector<1x1x32xf32>
    %333 = vector.shape_cast %332 : vector<1x1x32xf32> to vector<1x32xf32>
    %334 = vector.broadcast %333 : vector<1x32xf32> to vector<32x32xf32>
    %335 = arith.addf %331, %334 : vector<32x32xf32>
    %c1_114 = arith.constant 1 : index
    %c0_115 = arith.constant 0 : index
    %c0_116 = arith.constant 0 : index
    %336 = vector.load %arg12[%c1_114, %c0_115, %c0_116] : memref<2x1x32xf32, #tpu.memory_space<vmem>>, vector<1x1x32xf32>
    %337 = vector.shape_cast %336 : vector<1x1x32xf32> to vector<1x32xf32>
    %c1_117 = arith.constant 1 : index
    %c0_118 = arith.constant 0 : index
    %c0_119 = arith.constant 0 : index
    %338 = vector.load %arg13[%c1_117, %c0_118, %c0_119] : memref<2x1x32xf32, #tpu.memory_space<vmem>>, vector<1x1x32xf32>
    %339 = vector.shape_cast %338 : vector<1x1x32xf32> to vector<1x32xf32>
    %340 = arith.addf %210, %335 : vector<32x32xf32>
    %cst_120 = arith.constant dense<0.000000e+00> : vector<32xf32>
    %341 = vector.multi_reduction <add>, %340, %cst_120 [0] : vector<32x32xf32> to vector<32xf32>
    %342 = vector.shape_cast %341 : vector<32xf32> to vector<1x32xf32>
    %cst_121 = arith.constant 3.125000e-02 : f32
    %343 = vector.broadcast %cst_121 : f32 to vector<1x32xf32>
    %344 = arith.mulf %342, %343 : vector<1x32xf32>
    %345 = vector.broadcast %344 : vector<1x32xf32> to vector<32x32xf32>
    %346 = arith.subf %340, %345 : vector<32x32xf32>
    %347 = arith.mulf %346, %346 : vector<32x32xf32>
    %cst_122 = arith.constant dense<0.000000e+00> : vector<32xf32>
    %348 = vector.multi_reduction <add>, %347, %cst_122 [0] : vector<32x32xf32> to vector<32xf32>
    %349 = vector.shape_cast %348 : vector<32xf32> to vector<1x32xf32>
    %cst_123 = arith.constant 3.125000e-02 : f32
    %350 = vector.broadcast %cst_123 : f32 to vector<1x32xf32>
    %351 = arith.mulf %349, %350 : vector<1x32xf32>
    %cst_124 = arith.constant 9.99999974E-6 : f32
    %352 = vector.broadcast %cst_124 : f32 to vector<1x32xf32>
    %353 = arith.addf %351, %352 : vector<1x32xf32>
    %354 = math.rsqrt %353 : vector<1x32xf32>
    %355 = arith.mulf %354, %337 : vector<1x32xf32>
    %356 = vector.broadcast %355 : vector<1x32xf32> to vector<32x32xf32>
    %357 = arith.mulf %346, %356 : vector<32x32xf32>
    %358 = vector.broadcast %339 : vector<1x32xf32> to vector<32x32xf32>
    %359 = arith.addf %357, %358 : vector<32x32xf32>
    %c1_125 = arith.constant 1 : index
    %c0_126 = arith.constant 0 : index
    %c0_127 = arith.constant 0 : index
    %360 = vector.load %arg8[%c1_125, %c0_126, %c0_127] : memref<2x32x64xbf16, #tpu.memory_space<vmem>>, vector<1x32x64xbf16>
    %361 = vector.shape_cast %360 : vector<1x32x64xbf16> to vector<32x64xbf16>
    %362 = arith.truncf %359 : vector<32x32xf32> to vector<32x32xbf16>
    %cst_128 = arith.constant dense<0.000000e+00> : vector<32x64xf32>
    %363 = tpu.matmul %362, %361, %cst_128 {dimension_numbers = #tpu.dot_dimension_numbers<[1], [0], [0], [1], [0, 0, 1, 1], [], []>} : vector<32x32xbf16>, vector<32x64xbf16>, vector<32x64xf32> -> vector<32x64xf32>
    %c1_129 = arith.constant 1 : index
    %c0_130 = arith.constant 0 : index
    %c0_131 = arith.constant 0 : index
    %364 = vector.load %arg9[%c1_129, %c0_130, %c0_131] : memref<2x1x64xf32, #tpu.memory_space<vmem>>, vector<1x1x64xf32>
    %365 = vector.shape_cast %364 : vector<1x1x64xf32> to vector<1x64xf32>
    %366 = vector.broadcast %365 : vector<1x64xf32> to vector<32x64xf32>
    %367 = arith.addf %363, %366 : vector<32x64xf32>
    %cst_132 = arith.constant 5.000000e-01 : f32
    %368 = vector.broadcast %cst_132 : f32 to vector<32x64xf32>
    %369 = arith.mulf %368, %367 : vector<32x64xf32>
    %cst_133 = arith.constant 4.471500e-02 : f32
    %370 = vector.broadcast %cst_133 : f32 to vector<32x64xf32>
    %371 = arith.mulf %370, %367 : vector<32x64xf32>
    %372 = arith.mulf %371, %367 : vector<32x64xf32>
    %373 = arith.mulf %372, %367 : vector<32x64xf32>
    %374 = arith.addf %367, %373 : vector<32x64xf32>
    %cst_134 = arith.constant 0.797884583 : f32
    %375 = vector.broadcast %cst_134 : f32 to vector<32x64xf32>
    %376 = arith.mulf %375, %374 : vector<32x64xf32>
    %377 = math.tanh %376 : vector<32x64xf32>
    %cst_135 = arith.constant 1.000000e+00 : f32
    %378 = vector.broadcast %cst_135 : f32 to vector<32x64xf32>
    %379 = arith.addf %378, %377 : vector<32x64xf32>
    %380 = arith.mulf %369, %379 : vector<32x64xf32>
    %c1_136 = arith.constant 1 : index
    %c0_137 = arith.constant 0 : index
    %c0_138 = arith.constant 0 : index
    %381 = vector.load %arg10[%c1_136, %c0_137, %c0_138] : memref<2x64x32xbf16, #tpu.memory_space<vmem>>, vector<1x64x32xbf16>
    %382 = vector.shape_cast %381 : vector<1x64x32xbf16> to vector<64x32xbf16>
    %383 = arith.truncf %380 : vector<32x64xf32> to vector<32x64xbf16>
    %cst_139 = arith.constant dense<0.000000e+00> : vector<32x32xf32>
    %384 = tpu.matmul %383, %382, %cst_139 {dimension_numbers = #tpu.dot_dimension_numbers<[1], [0], [0], [1], [0, 0, 1, 1], [], []>} : vector<32x64xbf16>, vector<64x32xbf16>, vector<32x32xf32> -> vector<32x32xf32>
    %c1_140 = arith.constant 1 : index
    %c0_141 = arith.constant 0 : index
    %c0_142 = arith.constant 0 : index
    %385 = vector.load %arg11[%c1_140, %c0_141, %c0_142] : memref<2x1x32xf32, #tpu.memory_space<vmem>>, vector<1x1x32xf32>
    %386 = vector.shape_cast %385 : vector<1x1x32xf32> to vector<1x32xf32>
    %387 = vector.broadcast %386 : vector<1x32xf32> to vector<32x32xf32>
    %388 = arith.addf %384, %387 : vector<32x32xf32>
    %c1_143 = arith.constant 1 : index
    %c0_144 = arith.constant 0 : index
    %c0_145 = arith.constant 0 : index
    %389 = vector.load %arg14[%c1_143, %c0_144, %c0_145] : memref<2x1x32xf32, #tpu.memory_space<vmem>>, vector<1x1x32xf32>
    %390 = vector.shape_cast %389 : vector<1x1x32xf32> to vector<1x32xf32>
    %c1_146 = arith.constant 1 : index
    %c0_147 = arith.constant 0 : index
    %c0_148 = arith.constant 0 : index
    %391 = vector.load %arg15[%c1_146, %c0_147, %c0_148] : memref<2x1x32xf32, #tpu.memory_space<vmem>>, vector<1x1x32xf32>
    %392 = vector.shape_cast %391 : vector<1x1x32xf32> to vector<1x32xf32>
    %393 = arith.addf %359, %388 : vector<32x32xf32>
    %cst_149 = arith.constant dense<0.000000e+00> : vector<32xf32>
    %394 = vector.multi_reduction <add>, %393, %cst_149 [0] : vector<32x32xf32> to vector<32xf32>
    %395 = vector.shape_cast %394 : vector<32xf32> to vector<1x32xf32>
    %cst_150 = arith.constant 3.125000e-02 : f32
    %396 = vector.broadcast %cst_150 : f32 to vector<1x32xf32>
    %397 = arith.mulf %395, %396 : vector<1x32xf32>
    %398 = vector.broadcast %397 : vector<1x32xf32> to vector<32x32xf32>
    %399 = arith.subf %393, %398 : vector<32x32xf32>
    %400 = arith.mulf %399, %399 : vector<32x32xf32>
    %cst_151 = arith.constant dense<0.000000e+00> : vector<32xf32>
    %401 = vector.multi_reduction <add>, %400, %cst_151 [0] : vector<32x32xf32> to vector<32xf32>
    %402 = vector.shape_cast %401 : vector<32xf32> to vector<1x32xf32>
    %cst_152 = arith.constant 3.125000e-02 : f32
    %403 = vector.broadcast %cst_152 : f32 to vector<1x32xf32>
    %404 = arith.mulf %402, %403 : vector<1x32xf32>
    %cst_153 = arith.constant 9.99999974E-6 : f32
    %405 = vector.broadcast %cst_153 : f32 to vector<1x32xf32>
    %406 = arith.addf %404, %405 : vector<1x32xf32>
    %407 = math.rsqrt %406 : vector<1x32xf32>
    %408 = arith.mulf %407, %390 : vector<1x32xf32>
    %409 = vector.broadcast %408 : vector<1x32xf32> to vector<32x32xf32>
    %410 = arith.mulf %399, %409 : vector<32x32xf32>
    %411 = vector.broadcast %392 : vector<1x32xf32> to vector<32x32xf32>
    %412 = arith.addf %410, %411 : vector<32x32xf32>
    %cst_154 = arith.constant 5.000000e-01 : f32
    %413 = vector.broadcast %cst_154 : f32 to vector<32x32xf32>
    %414 = arith.mulf %413, %412 : vector<32x32xf32>
    %cst_155 = arith.constant 4.471500e-02 : f32
    %415 = vector.broadcast %cst_155 : f32 to vector<32x32xf32>
    %416 = arith.mulf %415, %412 : vector<32x32xf32>
    %417 = arith.mulf %416, %412 : vector<32x32xf32>
    %418 = arith.mulf %417, %412 : vector<32x32xf32>
    %419 = arith.addf %412, %418 : vector<32x32xf32>
    %cst_156 = arith.constant 0.797884583 : f32
    %420 = vector.broadcast %cst_156 : f32 to vector<32x32xf32>
    %421 = arith.mulf %420, %419 : vector<32x32xf32>
    %422 = math.tanh %421 : vector<32x32xf32>
    %cst_157 = arith.constant 1.000000e+00 : f32
    %423 = vector.broadcast %cst_157 : f32 to vector<32x32xf32>
    %424 = arith.addf %423, %422 : vector<32x32xf32>
    %425 = arith.mulf %414, %424 : vector<32x32xf32>
    %c0_158 = arith.constant 0 : index
    %c0_159 = arith.constant 0 : index
    %426 = vector.load %arg16[%c0_158, %c0_159] : memref<32x32xf32, #tpu.memory_space<vmem>>, vector<32x32xf32>
    tpu.vector_store %arg16[%c0_158, %c0_159], %425 {strides = array<i32>} : memref<32x32xf32, #tpu.memory_space<vmem>>, vector<32x32xf32>,
    return
  }
}

module attributes {stable_mosaic.version = 11 : i64} {
  func.func @classifier_kernel(%arg0: memref<2x512xf32, #tpu.memory_space<vmem>>, %arg1: memref<512x128xbf16, #tpu.memory_space<vmem>>, %arg2: memref<1x128xf32, #tpu.memory_space<vmem>>, %arg3: memref<2x128xf32, #tpu.memory_space<vmem>>) attributes {dimension_semantics = [], scalar_prefetch = 0 : i64, scratch_operands = 0 : i64, tpu.core_type = #tpu.core_type<tc>} {
    %c0 = arith.constant 0 : index
    %c0_0 = arith.constant 0 : index
    %0 = vector.load %arg0[%c0, %c0_0] : memref<2x512xf32, #tpu.memory_space<vmem>>, vector<2x512xf32>
    %c0_1 = arith.constant 0 : index
    %c0_2 = arith.constant 0 : index
    %1 = vector.load %arg1[%c0_1, %c0_2] : memref<512x128xbf16, #tpu.memory_space<vmem>>, vector<512x128xbf16>
    %2 = arith.truncf %0 : vector<2x512xf32> to vector<2x512xbf16>
    %cst = arith.constant dense<0.000000e+00> : vector<2x128xf32>
    %3 = tpu.matmul %2, %1, %cst {dimension_numbers = #tpu.dot_dimension_numbers<[1], [0], [0], [1], [0, 0, 1, 1], [], []>} : vector<2x512xbf16>, vector<512x128xbf16>, vector<2x128xf32> -> vector<2x128xf32>
    %c0_3 = arith.constant 0 : index
    %c0_4 = arith.constant 0 : index
    %4 = vector.load %arg2[%c0_3, %c0_4] : memref<1x128xf32, #tpu.memory_space<vmem>>, vector<1x128xf32>
    %5 = vector.broadcast %4 : vector<1x128xf32> to vector<2x128xf32>
    %6 = arith.addf %3, %5 : vector<2x128xf32>
    %c0_5 = arith.constant 0 : index
    %c0_6 = arith.constant 0 : index
    %7 = vector.load %arg3[%c0_5, %c0_6] : memref<2x128xf32, #tpu.memory_space<vmem>>, vector<2x128xf32>
    tpu.vector_store %arg3[%c0_5, %c0_6], %6 {strides = array<i32>} : memref<2x128xf32, #tpu.memory_space<vmem>>, vector<2x128xf32>,
    return
  }
}

</mosaic_0001>

<llo_original>
// kernel: ts_transformer_forward.3
$region0: #{ts_transformer_forward.3}
  #allocation0 [shape = 'u32[]', space=smem, size = 0x4, offset = 0x4, fixed_abs, tag = 'smem constant byte address 0x4 - core index']
  #allocation1 [shape = 'u32[72,128]{1,0:T(1,128)}', space=vmem, size = 0x9000, scoped, tag = 'internal scratch']
  %s0 = inlined_call_operand.vmem [shape: f32[2,512], index: 0, kind: input, shape index: {}]
  %s1 = inlined_call_operand.hbm [shape: bf16[512,128], index: 1, kind: input, shape index: {}]
  %s2 = inlined_call_operand.vmem [shape: f32[1,128], index: 2, kind: input, shape index: {}]
  %s3 = inlined_call_operand.hbm [shape: f32[2,128], index: 3, kind: output, shape index: {}]
  %s4 = sld [smem:[#allocation0]]
  $region26: #{ts_transformer_forward.3} parent=0
    _
  %s6 = ssub.s32 1, %s4
  %s7 = scalar_select 0, %s6, %s4
  $region1: #{ts_transformer_forward.3} parent=0
    #allocation2 [shape = 'u8[131072]{0}', space=vmem, size = 0x20000, scoped, tag = 'input window, operand 1, single buffered']
    #allocation3 [shape = 's32[1]{0}', space=sflag, size = 0x4, scoped, tag = 'scoped memory for ts_transformer_forward.3']
    #allocation4 [shape = 's32[1]{0}', space=sflag, size = 0x4, scoped, tag = 'scoped memory for ts_transformer_forward.3']
    #allocation5 [shape = 'u8[1024]{0}', space=vmem, size = 0x400, scoped, tag = 'output window, operand 0, single buffered']
    %8 = vsyncpa [#allocation3], 0
    %9 = vsyncpa [#allocation4], 0
    // Predicated region
    $region2: #{ts_transformer_forward.3} parent=1 // pred_check
      _
    $region3: #{ts_transformer_forward.3} parent=1 // pred_check_branch
      %11 = sbr.rel (0) target = $region5
    $region4: #{ts_transformer_forward.3} parent=1 // pred_region
      _
    $region5: #{ts_transformer_forward.3} parent=1 // pred_fallthru
      _
    // Predicated region
    $region6: #{ts_transformer_forward.3} parent=1 // pred_check
      _
    $region7: #{ts_transformer_forward.3} parent=1 // pred_check_branch
      %13 = sbr.rel (0) target = $region9
    $region8: #{ts_transformer_forward.3} parent=1 // pred_region
      %15 = vsyncadd [#allocation3], 0
      %s16 = sshll.u32 %s1, 4
      %s17 = int_to_ptr.hbm [resolvable:$true] %s16
      %s18 = sshll.u32 [#allocation2], 4
      %s19 = int_to_ptr.vmem [resolvable:$true] %s18
      %24 = dma.hbm_to_vmem [thread:$0]  %s17, 4096, %s19, [#allocation3], 64, 64, 4
    $region9: #{ts_transformer_forward.3} parent=1 // pred_fallthru
      _
    // Predicated region
    $region10: #{ts_transformer_forward.3} parent=1 // pred_check
      _
    $region11: #{ts_transformer_forward.3} parent=1 // pred_check_branch
      %26 = sbr.rel (0) target = $region13
    $region12: #{ts_transformer_forward.3} parent=1 // pred_region
      _
    $region13: #{ts_transformer_forward.3} parent=1 // pred_fallthru
      _
    // Predicated region
    $region14: #{ts_transformer_forward.3} parent=1 // pred_check
      _
    $region15: #{ts_transformer_forward.3} parent=1 // pred_check_branch
      %28 = sbr.rel (0) target = $region17
    $region16: #{ts_transformer_forward.3} parent=1 // pred_region
      %30 = dma.done [#allocation3], 4096
    $region17: #{ts_transformer_forward.3} parent=1 // pred_fallthru
      _
    %v31 = vld [vmem:[%s0] sm:$0xff]
    %v32 = vld [vmem:[#allocation2] sm:$0xf]
    %v33 = vld [vmem:[#allocation2 + $0x4] sm:$0xf]
    %v34 = vld [vmem:[#allocation2 + $0x8] sm:$0xf]
    %v35 = vld [vmem:[#allocation2 + $0xc] sm:$0xf]
    %v36 = vld [vmem:[#allocation2 + $0x10] sm:$0xf]
    %v37 = vld [vmem:[#allocation2 + $0x14] sm:$0xf]
    %v38 = vld [vmem:[#allocation2 + $0x18] sm:$0xf]
    %v39 = vld [vmem:[#allocation2 + $0x1c] sm:$0xf]
    %v40 = vld [vmem:[#allocation2 + $0x20] sm:$0xf]
    %v41 = vld [vmem:[#allocation2 + $0x24] sm:$0xf]
    %v42 = vld [vmem:[#allocation2 + $0x28] sm:$0xf]
    %v43 = vld [vmem:[#allocation2 + $0x2c] sm:$0xf]
    %v44 = vld [vmem:[#allocation2 + $0x30] sm:$0xf]
    %v45 = vld [vmem:[#allocation2 + $0x34] sm:$0xf]
    %v46 = vld [vmem:[#allocation2 + $0x38] sm:$0xf]
    %v47 = vld [vmem:[#allocation2 + $0x3c] sm:$0xf]
    %v48 = vld [vmem:[#allocation2 + $0x40] sm:$0xf]
    %v49 = vld [vmem:[#allocation2 + $0x44] sm:$0xf]
    %v50 = vld [vmem:[#allocation2 + $0x48] sm:$0xf]
    %v51 = vld [vmem:[#allocation2 + $0x4c] sm:$0xf]
    %v52 = vld [vmem:[#allocation2 + $0x50] sm:$0xf]
    %v53 = vld [vmem:[#allocation2 + $0x54] sm:$0xf]
    %v54 = vld [vmem:[#allocation2 + $0x58] sm:$0xf]
    %v55 = vld [vmem:[#allocation2 + $0x5c] sm:$0xf]
    %v56 = vld [vmem:[#allocation2 + $0x60] sm:$0xf]
    %v57 = vld [vmem:[#allocation2 + $0x64] sm:$0xf]
    %v58 = vld [vmem:[#allocation2 + $0x68] sm:$0xf]
    %v59 = vld [vmem:[#allocation2 + $0x6c] sm:$0xf]
    %v60 = vld [vmem:[#allocation2 + $0x70] sm:$0xf]
    %v61 = vld [vmem:[#allocation2 + $0x74] sm:$0xf]
    %v62 = vld [vmem:[#allocation2 + $0x78] sm:$0xf]
    %v63 = vld [vmem:[#allocation2 + $0x7c] sm:$0xf]
    %v64 = vld [vmem:[#allocation2 + $0x80] sm:$0xf]
    %v65 = vld [vmem:[#allocation2 + $0x84] sm:$0xf]
    %v66 = vld [vmem:[#allocation2 + $0x88] sm:$0xf]
    %v67 = vld [vmem:[#allocation2 + $0x8c] sm:$0xf]
    %v68 = vld [vmem:[#allocation2 + $0x90] sm:$0xf]
    %v69 = vld [vmem:[#allocation2 + $0x94] sm:$0xf]
    %v70 = vld [vmem:[#allocation2 + $0x98] sm:$0xf]
    %v71 = vld [vmem:[#allocation2 + $0x9c] sm:$0xf]
    %v72 = vld [vmem:[#allocation2 + $0xa0] sm:$0xf]
    %v73 = vld [vmem:[#allocation2 + $0xa4] sm:$0xf]
    %v74 = vld [vmem:[#allocation2 + $0xa8] sm:$0xf]
    %v75 = vld [vmem:[#allocation2 + $0xac] sm:$0xf]
    %v76 = vld [vmem:[#allocation2 + $0xb0] sm:$0xf]
    %v77 = vld [vmem:[#allocation2 + $0xb4] sm:$0xf]
    %v78 = vld [vmem:[#allocation2 + $0xb8] sm:$0xf]
    %v79 = vld [vmem:[#allocation2 + $0xbc] sm:$0xf]
    %v80 = vld [vmem:[#allocation2 + $0xc0] sm:$0xf]
    %v81 = vld [vmem:[#allocation2 + $0xc4] sm:$0xf]
    %v82 = vld [vmem:[#allocation2 + $0xc8] sm:$0xf]
    %v83 = vld [vmem:[#allocation2 + $0xcc] sm:$0xf]
    %v84 = vld [vmem:[#allocation2 + $0xd0] sm:$0xf]
    %v85 = vld [vmem:[#allocation2 + $0xd4] sm:$0xf]
    %v86 = vld [vmem:[#allocation2 + $0xd8] sm:$0xf]
    %v87 = vld [vmem:[#allocation2 + $0xdc] sm:$0xf]
    %v88 = vld [vmem:[#allocation2 + $0xe0] sm:$0xf]
    %v89 = vld [vmem:[#allocation2 + $0xe4] sm:$0xf]
    %v90 = vld [vmem:[#allocation2 + $0xe8] sm:$0xf]
    %v91 = vld [vmem:[#allocation2 + $0xec] sm:$0xf]
    %v92 = vld [vmem:[#allocation2 + $0xf0] sm:$0xf]
    %v93 = vld [vmem:[#allocation2 + $0xf4] sm:$0xf]
    %v94 = vld [vmem:[#allocation2 + $0xf8] sm:$0xf]
    %v95 = vld [vmem:[#allocation2 + $0xfc] sm:$0xf]
    %97 = vst [vmem:[#allocation1] ss:$4 sm:$0xff] %v31
    %v98 = vld.sshfl [vmem:[#allocation1] sm:$0xff pattern:$0x73625140]
    %v99 = vld.sshfl [vmem:[#allocation1 + $0x8] sm:$0xff pattern:$0x73625140]
    %v100 = vld.sshfl [vmem:[#allocation1 + $0x10] sm:$0xff pattern:$0x73625140]
    %v101 = vld.sshfl [vmem:[#allocation1 + $0x18] sm:$0xff pattern:$0x73625140]
    %v106 = vpack.c.bf16 %v98, %v98
    %v107 = vpack.c.bf16 %v99, %v99
    %v108 = vpack.c.bf16 %v100, %v100
    %v109 = vpack.c.bf16 %v101, %v101
    %v110 = vld [vmem:[%s2] sm:$0x1]
    %v112 = vperm.slane %v110, 0
    %v178 = vunpack.c.l.b16 %v32
    %v179 = vunpack.c.l.b16 %v33
    %v180 = vunpack.c.l.b16 %v34
    %v181 = vunpack.c.l.b16 %v35
    %v182 = vunpack.c.l.b16 %v36
    %v183 = vunpack.c.l.b16 %v37
    %v184 = vunpack.c.l.b16 %v38
    %v185 = vunpack.c.l.b16 %v39
    %v186 = vunpack.c.l.b16 %v40
    %v187 = vunpack.c.l.b16 %v41
    %v188 = vunpack.c.l.b16 %v42
    %v189 = vunpack.c.l.b16 %v43
    %v190 = vunpack.c.l.b16 %v44
    %v191 = vunpack.c.l.b16 %v45
    %v192 = vunpack.c.l.b16 %v46
    %v193 = vunpack.c.l.b16 %v47
    %v194 = vunpack.c.l.b16 %v48
    %v195 = vunpack.c.l.b16 %v49
    %v196 = vunpack.c.l.b16 %v50
    %v197 = vunpack.c.l.b16 %v51
    %v198 = vunpack.c.l.b16 %v52
    %v199 = vunpack.c.l.b16 %v53
    %v200 = vunpack.c.l.b16 %v54
    %v201 = vunpack.c.l.b16 %v55
    %v202 = vunpack.c.l.b16 %v56
    %v203 = vunpack.c.l.b16 %v57
    %v204 = vunpack.c.l.b16 %v58
    %v205 = vunpack.c.l.b16 %v59
    %v206 = vunpack.c.l.b16 %v60
    %v207 = vunpack.c.l.b16 %v61
    %v208 = vunpack.c.l.b16 %v62
    %v209 = vunpack.c.l.b16 %v63
    %v210 = vunpack.c.l.b16 %v64
    %v211 = vunpack.c.l.b16 %v65
    %v212 = vunpack.c.l.b16 %v66
    %v213 = vunpack.c.l.b16 %v67
    %v214 = vunpack.c.l.b16 %v68
    %v215 = vunpack.c.l.b16 %v69
    %v216 = vunpack.c.l.b16 %v70
    %v217 = vunpack.c.l.b16 %v71
    %v218 = vunpack.c.l.b16 %v72
    %v219 = vunpack.c.l.b16 %v73
    %v220 = vunpack.c.l.b16 %v74
    %v221 = vunpack.c.l.b16 %v75
    %v222 = vunpack.c.l.b16 %v76
    %v223 = vunpack.c.l.b16 %v77
    %v224 = vunpack.c.l.b16 %v78
    %v225 = vunpack.c.l.b16 %v79
    %v226 = vunpack.c.l.b16 %v80
    %v227 = vunpack.c.l.b16 %v81
    %v228 = vunpack.c.l.b16 %v82
    %v229 = vunpack.c.l.b16 %v83
    %v230 = vunpack.c.l.b16 %v84
    %v231 = vunpack.c.l.b16 %v85
    %v232 = vunpack.c.l.b16 %v86
    %v233 = vunpack.c.l.b16 %v87
    %v234 = vunpack.c.l.b16 %v88
    %v235 = vunpack.c.l.b16 %v89
    %v236 = vunpack.c.l.b16 %v90
    %v237 = vunpack.c.l.b16 %v91
    %v238 = vunpack.c.l.b16 %v92
    %v239 = vunpack.c.l.b16 %v93
    %v240 = vunpack.c.l.b16 %v94
    %v241 = vunpack.c.l.b16 %v95
    %v242 = vpack.c.b16 %v179, %v178
    %v243 = vpack.c.b16 %v181, %v180
    %v244 = vpack.c.b16 %v183, %v182
    %v245 = vpack.c.b16 %v185, %v184
    %v246 = vpack.c.b16 %v187, %v186
    %v247 = vpack.c.b16 %v189, %v188
    %v248 = vpack.c.b16 %v191, %v190
    %v249 = vpack.c.b16 %v193, %v192
    %v250 = vpack.c.b16 %v195, %v194
    %v251 = vpack.c.b16 %v197, %v196
    %v252 = vpack.c.b16 %v199, %v198
    %v253 = vpack.c.b16 %v201, %v200
    %v254 = vpack.c.b16 %v203, %v202
    %v255 = vpack.c.b16 %v205, %v204
    %v256 = vpack.c.b16 %v207, %v206
    %v257 = vpack.c.b16 %v209, %v208
    %v258 = vpack.c.b16 %v211, %v210
    %v259 = vpack.c.b16 %v213, %v212
    %v260 = vpack.c.b16 %v215, %v214
    %v261 = vpack.c.b16 %v217, %v216
    %v262 = vpack.c.b16 %v219, %v218
    %v263 = vpack.c.b16 %v221, %v220
    %v264 = vpack.c.b16 %v223, %v222
    %v265 = vpack.c.b16 %v225, %v224
    %v266 = vpack.c.b16 %v227, %v226
    %v267 = vpack.c.b16 %v229, %v228
    %v268 = vpack.c.b16 %v231, %v230
    %v269 = vpack.c.b16 %v233, %v232
    %v270 = vpack.c.b16 %v235, %v234
    %v271 = vpack.c.b16 %v237, %v236
    %v272 = vpack.c.b16 %v239, %v238
    %v273 = vpack.c.b16 %v241, %v240
    %306 = vmatpush.bf16.msra.mxu0 %v249
    %307 = vmatpush.bf16.msra.mxu0 %v248
    %308 = vmatpush.bf16.msra.mxu0 %v247
    %309 = vmatpush.bf16.msra.mxu0 %v246
    %310 = vmatpush.bf16.msra.mxu0 %v245
    %311 = vmatpush.bf16.msra.mxu0 %v244
    %312 = vmatpush.bf16.msra.mxu0 %v243
    %313 = vmatpush.bf16.msra.mxu0 %v242
    %314 = vmatmul.bf16.gmra.mxu0 %v106
    %v315 = vpop.f32.mrf.mxu0
    %v316 = vadd.f32 %v112, %v315
    %v317 = vpop.f32.mrf.mxu0
    %318 = vdwg.mxu0
    %319 = vmatpush.bf16.msra.mxu0 %v257
    %320 = vmatpush.bf16.msra.mxu0 %v256
    %321 = vmatpush.bf16.msra.mxu0 %v255
    %322 = vmatpush.bf16.msra.mxu0 %v254
    %323 = vmatpush.bf16.msra.mxu0 %v253
    %324 = vmatpush.bf16.msra.mxu0 %v252
    %325 = vmatpush.bf16.msra.mxu0 %v251
    %326 = vmatpush.bf16.msra.mxu0 %v250
    %327 = vmatmul.bf16.gmra.mxu0 %v107
    %v328 = vpop.f32.mrf.mxu0
    %v329 = vadd.f32 %v316, %v328
    %v330 = vpop.f32.mrf.mxu0
    %331 = vdwg.mxu0
    %332 = vmatpush.bf16.msra.mxu0 %v265
    %333 = vmatpush.bf16.msra.mxu0 %v264
    %334 = vmatpush.bf16.msra.mxu0 %v263
    %335 = vmatpush.bf16.msra.mxu0 %v262
    %336 = vmatpush.bf16.msra.mxu0 %v261
    %337 = vmatpush.bf16.msra.mxu0 %v260
    %338 = vmatpush.bf16.msra.mxu0 %v259
    %339 = vmatpush.bf16.msra.mxu0 %v258
    %340 = vmatmul.bf16.gmra.mxu0 %v108
    %v341 = vpop.f32.mrf.mxu0
    %v342 = vadd.f32 %v329, %v341
    %v343 = vpop.f32.mrf.mxu0
    %344 = vdwg.mxu0
    %345 = vmatpush.bf16.msra.mxu0 %v273
    %346 = vmatpush.bf16.msra.mxu0 %v272
    %347 = vmatpush.bf16.msra.mxu0 %v271
    %348 = vmatpush.bf16.msra.mxu0 %v270
    %349 = vmatpush.bf16.msra.mxu0 %v269
    %350 = vmatpush.bf16.msra.mxu0 %v268
    %351 = vmatpush.bf16.msra.mxu0 %v267
    %352 = vmatpush.bf16.msra.mxu0 %v266
    %353 = vmatmul.bf16.gmra.mxu0 %v109
    %v354 = vpop.f32.mrf.mxu0
    %v355 = vadd.f32 %v342, %v354
    %v356 = vpop.f32.mrf.mxu0
    %357 = vdwg.mxu0
    %358 = vst [vmem:[#allocation5] sm:$0x3] %v355
    // Predicated region
    $region18: #{ts_transformer_forward.3} parent=1 // pred_check
      _
    $region19: #{ts_transformer_forward.3} parent=1 // pred_check_branch
      %360 = sbr.rel (0) target = $region21
    $region20: #{ts_transformer_forward.3} parent=1 // pred_region
      %362 = vsyncadd [#allocation4], 0
      %s364 = sshll.u32 [#allocation5], 4
      %s365 = int_to_ptr.vmem [resolvable:$true] %s364
      %s366 = sshll.u32 %s3, 4
      %s367 = int_to_ptr.hbm [resolvable:$true] %s366
      %369 = dma.vmem_to_hbm [thread:$0]  %s365, 32, %s367, [#allocation4]
    $region21: #{ts_transformer_forward.3} parent=1 // pred_fallthru
      _
    // Predicated region
    $region22: #{ts_transformer_forward.3} parent=1 // pred_check
      _
    $region23: #{ts_transformer_forward.3} parent=1 // pred_check_branch
      %371 = sbr.rel (0) target = $region25
    $region24: #{ts_transformer_forward.3} parent=1 // pred_region
      %373 = dma.done [#allocation4], 32
    $region25: #{ts_transformer_forward.3} parent=1 // pred_fallthru
      _
    %374 = vsyncpa [#allocation3], 1
    %375 = vsyncpa [#allocation4], 1

// kernel: ts_transformer_forward.2
$region0: #{ts_transformer_forward.2}
  #allocation0 [shape = 'u32[]', space=smem, size = 0x4, offset = 0x4, fixed_abs, tag = 'smem constant byte address 0x4 - core index']
  #allocation1 [shape = 'u32[72,128]{1,0:T(1,128)}', space=vmem, size = 0x9000, scoped, tag = 'internal scratch']
  %s0 = inlined_call_operand.vmem [shape: f32[32,4], index: 0, kind: input, shape index: {}]
  %s1 = inlined_call_operand.vmem [shape: f32[32,32], index: 1, kind: input, shape index: {}]
  %s2 = inlined_call_operand.vmem [shape: bf16[4,32], index: 2, kind: input, shape index: {}]
  %s3 = inlined_call_operand.vmem [shape: f32[1,32], index: 3, kind: input, shape index: {}]
  %s4 = inlined_call_operand.vmem [shape: bf16[2,32,96], index: 4, kind: input, shape index: {}]
  %s5 = inlined_call_operand.vmem [shape: f32[2,1,96], index: 5, kind: input, shape index: {}]
  %s6 = inlined_call_operand.vmem [shape: bf16[2,4,8,32], index: 6, kind: input, shape index: {}]
  %s7 = inlined_call_operand.vmem [shape: f32[2,1,32], index: 7, kind: input, shape index: {}]
  %s8 = inlined_call_operand.vmem [shape: bf16[2,32,64], index: 8, kind: input, shape index: {}]
  %s9 = inlined_call_operand.vmem [shape: f32[2,1,64], index: 9, kind: input, shape index: {}]
  %s10 = inlined_call_operand.vmem [shape: bf16[2,64,32], index: 10, kind: input, shape index: {}]
  %s11 = inlined_call_operand.vmem [shape: f32[2,1,32], index: 11, kind: input, shape index: {}]
  %s12 = inlined_call_operand.vmem [shape: f32[2,1,32], index: 12, kind: input, shape index: {}]
  %s13 = inlined_call_operand.vmem [shape: f32[2,1,32], index: 13, kind: input, shape index: {}]
  %s14 = inlined_call_operand.vmem [shape: f32[2,1,32], index: 14, kind: input, shape index: {}]
  %s15 = inlined_call_operand.vmem [shape: f32[2,1,32], index: 15, kind: input, shape index: {}]
  %s16 = inlined_call_operand.vmem [shape: f32[32,32], index: 16, kind: output, shape index: {}]
  %s17 = sld [smem:[#allocation0]]
  $region74: #{ts_transformer_forward.2} parent=0
    _
  %s19 = ssub.s32 1, %s17
  %s20 = scalar_select 0, %s19, %s17
  // Predicated region
  $region2: #{ts_transformer_forward.2} parent=0 // pred_check
    _
  $region3: #{ts_transformer_forward.2} parent=0 // pred_check_branch
    %22 = sbr.rel (0) target = $region5
  $region4: #{ts_transformer_forward.2} parent=0 // pred_region
    _
  $region5: #{ts_transformer_forward.2} parent=0 // pred_fallthru
    _
  // Predicated region
  $region6: #{ts_transformer_forward.2} parent=0 // pred_check
    _
  $region7: #{ts_transformer_forward.2} parent=0 // pred_check_branch
    %24 = sbr.rel (0) target = $region9
  $region8: #{ts_transformer_forward.2} parent=0 // pred_region
    _
  $region9: #{ts_transformer_forward.2} parent=0 // pred_fallthru
    _
  // Predicated region
  $region10: #{ts_transformer_forward.2} parent=0 // pred_check
    _
  $region11: #{ts_transformer_forward.2} parent=0 // pred_check_branch
    %26 = sbr.rel (0) target = $region13
  $region12: #{ts_transformer_forward.2} parent=0 // pred_region
    _
  $region13: #{ts_transformer_forward.2} parent=0 // pred_fallthru
    _
  // Predicated region
  $region14: #{ts_transformer_forward.2} parent=0 // pred_check
    _
  $region15: #{ts_transformer_forward.2} parent=0 // pred_check_branch
    %28 = sbr.rel (0) target = $region17
  $region16: #{ts_transformer_forward.2} parent=0 // pred_region
    _
  $region17: #{ts_transformer_forward.2} parent=0 // pred_fallthru
    _
  // Predicated region
  $region18: #{ts_transformer_forward.2} parent=0 // pred_check
    _
  $region19: #{ts_transformer_forward.2} parent=0 // pred_check_branch
    %30 = sbr.rel (0) target = $region21
  $region20: #{ts_transformer_forward.2} parent=0 // pred_region
    _
  $region21: #{ts_transformer_forward.2} parent=0 // pred_fallthru
    _
  // Predicated region
  $region22: #{ts_transformer_forward.2} parent=0 // pred_check
    _
  $region23: #{ts_transformer_forward.2} parent=0 // pred_check_branch
    %32 = sbr.rel (0) target = $region25
  $region24: #{ts_transformer_forward.2} parent=0 // pred_region
    _
  $region25: #{ts_transformer_forward.2} parent=0 // pred_fallthru
    _
  // Predicated region
  $region26: #{ts_transformer_forward.2} parent=0 // pred_check
    _
  $region27: #{ts_transformer_forward.2} parent=0 // pred_check_branch
    %34 = sbr.rel (0) target = $region29
  $region28: #{ts_transformer_forward.2} parent=0 // pred_region
    _
  $region29: #{ts_transformer_forward.2} parent=0 // pred_fallthru
    _
  // Predicated region
  $region30: #{ts_transformer_forward.2} parent=0 // pred_check
    _
  $region31: #{ts_transformer_forward.2} parent=0 // pred_check_branch
    %36 = sbr.rel (0) target = $region33
  $region32: #{ts_transformer_forward.2} parent=0 // pred_region
    _
  $region33: #{ts_transformer_forward.2} parent=0 // pred_fallthru
    _
  // Predicated region
  $region34: #{ts_transformer_forward.2} parent=0 // pred_check
    _
  $region35: #{ts_transformer_forward.2} parent=0 // pred_check_branch
    %38 = sbr.rel (0) target = $region37
  $region36: #{ts_transformer_forward.2} parent=0 // pred_region
    _
  $region37: #{ts_transformer_forward.2} parent=0 // pred_fallthru
    _
  // Predicated region
  $region38: #{ts_transformer_forward.2} parent=0 // pred_check
    _
  $region39: #{ts_transformer_forward.2} parent=0 // pred_check_branch
    %40 = sbr.rel (0) target = $region41
  $region40: #{ts_transformer_forward.2} parent=0 // pred_region
    _
  $region41: #{ts_transformer_forward.2} parent=0 // pred_fallthru
    _
  // Predicated region
  $region42: #{ts_transformer_forward.2} parent=0 // pred_check
    _
  $region43: #{ts_transformer_forward.2} parent=0 // pred_check_branch
    %42 = sbr.rel (0) target = $region45
  $region44: #{ts_transformer_forward.2} parent=0 // pred_region
    _
  $region45: #{ts_transformer_forward.2} parent=0 // pred_fallthru
    _
  // Predicated region
  $region46: #{ts_transformer_forward.2} parent=0 // pred_check
    _
  $region47: #{ts_transformer_forward.2} parent=0 // pred_check_branch
    %44 = sbr.rel (0) target = $region49
  $region48: #{ts_transformer_forward.2} parent=0 // pred_region
    _
  $region49: #{ts_transformer_forward.2} parent=0 // pred_fallthru
    _
  // Predicated region
  $region50: #{ts_transformer_forward.2} parent=0 // pred_check
    _
  $region51: #{ts_transformer_forward.2} parent=0 // pred_check_branch
    %46 = sbr.rel (0) target = $region53
  $region52: #{ts_transformer_forward.2} parent=0 // pred_region
    _
  $region53: #{ts_transformer_forward.2} parent=0 // pred_fallthru
    _
  // Predicated region
  $region54: #{ts_transformer_forward.2} parent=0 // pred_check
    _
  $region55: #{ts_transformer_forward.2} parent=0 // pred_check_branch
    %48 = sbr.rel (0) target = $region57
  $region56: #{ts_transformer_forward.2} parent=0 // pred_region
    _
  $region57: #{ts_transformer_forward.2} parent=0 // pred_fallthru
    _
  // Predicated region
  $region58: #{ts_transformer_forward.2} parent=0 // pred_check
    _
  $region59: #{ts_transformer_forward.2} parent=0 // pred_check_branch
    %50 = sbr.rel (0) target = $region61
  $region60: #{ts_transformer_forward.2} parent=0 // pred_region
    _
  $region61: #{ts_transformer_forward.2} parent=0 // pred_fallthru
    _
  // Predicated region
  $region62: #{ts_transformer_forward.2} parent=0 // pred_check
    _
  $region63: #{ts_transformer_forward.2} parent=0 // pred_check_branch
    %52 = sbr.rel (0) target = $region65
  $region64: #{ts_transformer_forward.2} parent=0 // pred_region
    _
  $region65: #{ts_transformer_forward.2} parent=0 // pred_fallthru
    _
  %v54 = vld [vmem:[%s0] sm:$0xff]
  %v55 = vld [vmem:[%s0 + $0x8] sm:$0xff]
  %v56 = vld [vmem:[%s0 + $0x10] sm:$0xff]
  %v57 = vld [vmem:[%s0 + $0x18] sm:$0xff]
  %v58 = vld [vmem:[%s2] sm:$0x3]
  %v59 = vpack.c.bf16 %v55, %v54
  %v60 = vpack.c.bf16 %v57, %v56
  %v61 = vld [vmem:[%s3] sm:$0x1]
  %v63 = vperm.slane %v61, 0
  %vm65 = vcmask 31744
  %v67 = vsel %vm65, %v59, 0
  %v70 = vsel %vm65, %v60, 0
  %vm72 = vcmask 1041408
  %v74 = vsel %vm72, %v58, 0
  %76 = vmatpush.bf16.msra.mxu0 0
  %77 = vmatpush.bf16.msra.mxu0 0
  %78 = vmatpush.bf16.msra.mxu0 0
  %79 = vmatpush.bf16.msra.mxu0 0
  %80 = vmatpush.bf16.msra.mxu0 0
  %81 = vmatpush.bf16.msra.mxu0 0
  %82 = vmatpush.bf16.msra.mxu0 0
  %83 = vmatpush.bf16.msra.mxu0 %v74
  %84 = vmatmul.bf16.gmra.mxu0 %v67
  %v85 = vpop.f32.mrf.mxu0
  %v86 = vadd.f32 %v63, %v85
  %v87 = vpop.f32.mrf.mxu0
  %v88 = vadd.f32 %v63, %v87
  %89 = vmatmul.bf16.gmra.mxu0 %v70
  %v90 = vpop.f32.mrf.mxu0
  %v91 = vadd.f32 %v63, %v90
  %v92 = vpop.f32.mrf.mxu0
  %v93 = vadd.f32 %v63, %v92
  %94 = vdwg.mxu0
  %v95 = vld [vmem:[%s1] sm:$0xff]
  %v96 = vld [vmem:[%s1 + $0x8] sm:$0xff]
  %v97 = vld [vmem:[%s1 + $0x10] sm:$0xff]
  %v98 = vld [vmem:[%s1 + $0x18] sm:$0xff]
  %v99 = vadd.f32 %v86, %v95
  %v100 = vadd.f32 %v88, %v96
  %v101 = vadd.f32 %v91, %v97
  %v102 = vadd.f32 %v93, %v98
  %v103 = vld [vmem:[%s4] sm:$0xf]
  %v104 = vld [vmem:[%s4 + $0x4] sm:$0xf]
  %v105 = vld [vmem:[%s4 + $0x8] sm:$0xf]
  %v106 = vld [vmem:[%s4 + $0xc] sm:$0xf]
  %v107 = vpack.c.bf16 %v100, %v99
  %v108 = vpack.c.bf16 %v102, %v101
  %v109 = vld [vmem:[%s5] sm:$0x1]
  %v111 = vperm.slane %v109, 0
  %v117 = vunpack.c.l.b16 %v103
  %v118 = vunpack.c.l.b16 %v104
  %v119 = vunpack.c.l.b16 %v105
  %v120 = vunpack.c.l.b16 %v106
  %v121 = vpack.c.b16 %v118, %v117
  %v122 = vpack.c.b16 %v120, %v119
  %vm125 = vcmask 261120
  %v127 = vsel %vm125, %v107, 0
  %v130 = vsel %vm125, %v108, 0
  %132 = vmatpush.bf16.msra.mxu0 0
  %133 = vmatpush.bf16.msra.mxu0 0
  %134 = vmatpush.bf16.msra.mxu0 0
  %135 = vmatpush.bf16.msra.mxu0 0
  %136 = vmatpush.bf16.msra.mxu0 0
  %137 = vmatpush.bf16.msra.mxu0 0
  %138 = vmatpush.bf16.msra.mxu0 %v122
  %139 = vmatpush.bf16.msra.mxu0 %v121
  %140 = vmatmul.bf16.gmra.mxu0 %v127
  %v141 = vpop.f32.mrf.mxu0
  %v142 = vadd.f32 %v111, %v141
  %v143 = vpop.f32.mrf.mxu0
  %v144 = vadd.f32 %v111, %v143
  %145 = vmatmul.bf16.gmra.mxu0 %v130
  %v146 = vpop.f32.mrf.mxu0
  %v147 = vadd.f32 %v111, %v146
  %v148 = vpop.f32.mrf.mxu0
  %v149 = vadd.f32 %v111, %v148
  %150 = vdwg.mxu0
  %v151 = vld [vmem:[%s6] sm:$0xf]
  %v152 = vld [vmem:[%s6 + $0x4] sm:$0xf]
  %v153 = vld [vmem:[%s6 + $0x8] sm:$0xf]
  %v154 = vld [vmem:[%s6 + $0xc] sm:$0xf]
  %v155 = vpack.c.bf16 %v142, %v142
  %v156 = vpack.c.bf16 %v144, %v144
  %v157 = vpack.c.bf16 %v147, %v147
  %v158 = vpack.c.bf16 %v149, %v149
  %v161 = vunpack.c.l.b16 %v155
  %v162 = vunpack.c.l.b16 %v156
  %v163 = vpack.c.b16 %v162, %v161
  %164 = vrot.lane.b32.xlu0 %v163, 96
  %v165 = vpop.permute.xlu0 %164
  %vm166 = vcmask 64512
  %v168 = vsel %vm166, %v163, 0
  %v171 = vsel %vm166, %v165, 0
  %173 = vmatpush.bf16.xpose.msra.mxu0 0
  %174 = vmatpush.bf16.xpose.msra.mxu0 0
  %175 = vmatpush.bf16.xpose.msra.mxu0 0
  %176 = vmatpush.bf16.xpose.msra.mxu0 0
  %177 = vmatpush.bf16.xpose.msra.mxu0 0
  %178 = vmatpush.bf16.xpose.msra.mxu0 0
  %179 = vmatpush.bf16.xpose.msra.mxu0 0
  %180 = vmatpush.bf16.xpose.msra.mxu0 %v171
  %181 = vmatmul.bf16.gmra.mxu0 %v168
  %v182 = vpop.f32.mrf.mxu0
  %v183 = vadd.f32 0.0, %v182
  %v184 = vpop.f32.mrf.mxu0
  %v185 = vadd.f32 0.0, %v184
  %186 = vdwg.mxu0
  %v189 = vunpack.c.l.b16 %v157
  %v190 = vunpack.c.l.b16 %v158
  %v191 = vpack.c.b16 %v190, %v189
  %192 = vrot.lane.b32.xlu0 %v191, 96
  %v193 = vpop.permute.xlu0 %192
  %v195 = vsel %vm166, %v191, 0
  %v198 = vsel %vm166, %v193, 0
  %200 = vmatpush.bf16.xpose.msra.mxu0 0
  %201 = vmatpush.bf16.xpose.msra.mxu0 0
  %202 = vmatpush.bf16.xpose.msra.mxu0 0
  %203 = vmatpush.bf16.xpose.msra.mxu0 0
  %204 = vmatpush.bf16.xpose.msra.mxu0 0
  %205 = vmatpush.bf16.xpose.msra.mxu0 0
  %206 = vmatpush.bf16.xpose.msra.mxu0 0
  %207 = vmatpush.bf16.xpose.msra.mxu0 %v198
  %208 = vmatmul.bf16.gmra.mxu0 %v195
  %v209 = vpop.f32.mrf.mxu0
  %v210 = vadd.f32 0.0, %v209
  %v211 = vpop.f32.mrf.mxu0
  %v212 = vadd.f32 0.0, %v211
  %213 = vdwg.mxu0
  %vm214 = vcmask 130048
  %v215 = vsel %vm214, %v183, -inf
  %216 = vmax.xlane.f32.xlu0 %v215
  %v217 = vpop.xlane.xlu0 %216
  %v218 = vsel %vm214, %v185, -inf
  %219 = vmax.xlane.f32.xlu0 %v218
  %v220 = vpop.xlane.xlu0 %219
  %v221 = vsel %vm214, %v210, -inf
  %222 = vmax.xlane.f32.xlu0 %v221
  %v223 = vpop.xlane.xlu0 %222
  %v224 = vsel %vm214, %v212, -inf
  %225 = vmax.xlane.f32.xlu0 %v224
  %v226 = vpop.xlane.xlu0 %225
  %v227 = vsub.f32 %v183, %v217
  %v228 = vsub.f32 %v185, %v220
  %v229 = vsub.f32 %v210, %v223
  %v230 = vsub.f32 %v212, %v226
  %v231 = vmul.f32 %v227, 1.442695
  %v232 = vpow.pop %v231
  %v233 = vmul.f32 %v228, 1.442695
  %v234 = vpow.pop %v233
  %v235 = vmul.f32 %v229, 1.442695
  %v236 = vpow.pop %v235
  %v237 = vmul.f32 %v230, 1.442695
  %v238 = vpow.pop %v237
  %v239 = vsel %vm214, %v232, 0.0
  %240 = vadd.xlane.f32.xlu0 %v239
  %v241 = vpop.xlane.xlu0 %240
  %v242 = vsel %vm214, %v234, 0.0
  %243 = vadd.xlane.f32.xlu0 %v242
  %v244 = vpop.xlane.xlu0 %243
  %v245 = vsel %vm214, %v236, 0.0
  %246 = vadd.xlane.f32.xlu0 %v245
  %v247 = vpop.xlane.xlu0 %246
  %v248 = vsel %vm214, %v238, 0.0
  %249 = vadd.xlane.f32.xlu0 %v248
  %v250 = vpop.xlane.xlu0 %249
  %v251 = vrcp.pop %v241
  %v252 = vrcp.pop %v244
  %v253 = vrcp.pop %v247
  %v254 = vrcp.pop %v250
  %v255 = vmul.f32 %v232, %v251
  %v256 = vmul.f32 %v234, %v252
  %v257 = vmul.f32 %v236, %v253
  %v258 = vmul.f32 %v238, %v254
  %v259 = vpack.c.bf16 %v255, %v255
  %v260 = vpack.c.bf16 %v256, %v256
  %v261 = vpack.c.bf16 %v257, %v257
  %v262 = vpack.c.bf16 %v258, %v258
  %v265 = vunpack.c.l.b16 %v259
  %v266 = vunpack.c.l.b16 %v260
  %v267 = vpack.c.b16 %v266, %v265
  %268 = vrot.lane.b32.xlu0 %v163, 64
  %v269 = vpop.permute.xlu0 %268
  %v272 = vsel %vm214, %v267, 0
  %274 = vmatpush.bf16.msra.mxu0 0
  %275 = vmatpush.bf16.msra.mxu0 0
  %276 = vmatpush.bf16.msra.mxu0 0
  %277 = vmatpush.bf16.msra.mxu0 0
  %278 = vmatpush.bf16.msra.mxu0 0
  %279 = vmatpush.bf16.msra.mxu0 0
  %280 = vmatpush.bf16.msra.mxu0 0
  %281 = vmatpush.bf16.msra.mxu0 %v269
  %282 = vmatmul.bf16.gmra.mxu0 %v272
  %v283 = vpop.f32.mrf.mxu0
  %v284 = vadd.f32 0.0, %v283
  %v285 = vpop.f32.mrf.mxu0
  %v286 = vadd.f32 0.0, %v285
  %287 = vdwg.mxu0
  %v290 = vunpack.c.l.b16 %v261
  %v291 = vunpack.c.l.b16 %v262
  %v292 = vpack.c.b16 %v291, %v290
  %293 = vrot.lane.b32.xlu0 %v191, 64
  %v294 = vpop.permute.xlu0 %293
  %v297 = vsel %vm214, %v292, 0
  %299 = vmatpush.bf16.msra.mxu0 0
  %300 = vmatpush.bf16.msra.mxu0 0
  %301 = vmatpush.bf16.msra.mxu0 0
  %302 = vmatpush.bf16.msra.mxu0 0
  %303 = vmatpush.bf16.msra.mxu0 0
  %304 = vmatpush.bf16.msra.mxu0 0
  %305 = vmatpush.bf16.msra.mxu0 0
  %306 = vmatpush.bf16.msra.mxu0 %v294
  %307 = vmatmul.bf16.gmra.mxu0 %v297
  %v308 = vpop.f32.mrf.mxu0
  %v309 = vadd.f32 0.0, %v308
  %v310 = vpop.f32.mrf.mxu0
  %v311 = vadd.f32 0.0, %v310
  %312 = vdwg.mxu0
  %v313 = vpack.c.bf16 %v286, %v284
  %v314 = vpack.c.bf16 %v311, %v309
  %315 = vrot.lane.b32.xlu0 %v163, 120
  %v316 = vpop.permute.xlu0 %315
  %317 = vrot.lane.b32.xlu0 %v163, 88
  %v318 = vpop.permute.xlu0 %317
  %v320 = vsel %vm166, %v316, 0
  %v323 = vsel %vm166, %v318, 0
  %325 = vmatpush.bf16.xpose.msra.mxu0 0
  %326 = vmatpush.bf16.xpose.msra.mxu0 0
  %327 = vmatpush.bf16.xpose.msra.mxu0 0
  %328 = vmatpush.bf16.xpose.msra.mxu0 0
  %329 = vmatpush.bf16.xpose.msra.mxu0 0
  %330 = vmatpush.bf16.xpose.msra.mxu0 0
  %331 = vmatpush.bf16.xpose.msra.mxu0 0
  %332 = vmatpush.bf16.xpose.msra.mxu0 %v323
  %333 = vmatmul.bf16.gmra.mxu0 %v320
  %v334 = vpop.f32.mrf.mxu0
  %v335 = vadd.f32 0.0, %v334
  %v336 = vpop.f32.mrf.mxu0
  %v337 = vadd.f32 0.0, %v336
  %338 = vdwg.mxu0
  %339 = vrot.lane.b32.xlu0 %v191, 120
  %v340 = vpop.permute.xlu0 %339
  %341 = vrot.lane.b32.xlu0 %v191, 88
  %v342 = vpop.permute.xlu0 %341
  %v344 = vsel %vm166, %v340, 0
  %v347 = vsel %vm166, %v342, 0
  %349 = vmatpush.bf16.xpose.msra.mxu0 0
  %350 = vmatpush.bf16.xpose.msra.mxu0 0
  %351 = vmatpush.bf16.xpose.msra.mxu0 0
  %352 = vmatpush.bf16.xpose.msra.mxu0 0
  %353 = vmatpush.bf16.xpose.msra.mxu0 0
  %354 = vmatpush.bf16.xpose.msra.mxu0 0
  %355 = vmatpush.bf16.xpose.msra.mxu0 0
  %356 = vmatpush.bf16.xpose.msra.mxu0 %v347
  %357 = vmatmul.bf16.gmra.mxu0 %v344
  %v358 = vpop.f32.mrf.mxu0
  %v359 = vadd.f32 0.0, %v358
  %v360 = vpop.f32.mrf.mxu0
  %v361 = vadd.f32 0.0, %v360
  %362 = vdwg.mxu0
  %v363 = vsel %vm214, %v335, -inf
  %364 = vmax.xlane.f32.xlu0 %v363
  %v365 = vpop.xlane.xlu0 %364
  %v366 = vsel %vm214, %v337, -inf
  %367 = vmax.xlane.f32.xlu0 %v366
  %v368 = vpop.xlane.xlu0 %367
  %v369 = vsel %vm214, %v359, -inf
  %370 = vmax.xlane.f32.xlu0 %v369
  %v371 = vpop.xlane.xlu0 %370
  %v372 = vsel %vm214, %v361, -inf
  %373 = vmax.xlane.f32.xlu0 %v372
  %v374 = vpop.xlane.xlu0 %373
  %v375 = vsub.f32 %v335, %v365
  %v376 = vsub.f32 %v337, %v368
  %v377 = vsub.f32 %v359, %v371
  %v378 = vsub.f32 %v361, %v374
  %v379 = vmul.f32 %v375, 1.442695
  %v380 = vpow.pop %v379
  %v381 = vmul.f32 %v376, 1.442695
  %v382 = vpow.pop %v381
  %v383 = vmul.f32 %v377, 1.442695
  %v384 = vpow.pop %v383
  %v385 = vmul.f32 %v378, 1.442695
  %v386 = vpow.pop %v385
  %v387 = vsel %vm214, %v380, 0.0
  %388 = vadd.xlane.f32.xlu0 %v387
  %v389 = vpop.xlane.xlu0 %388
  %v390 = vsel %vm214, %v382, 0.0
  %391 = vadd.xlane.f32.xlu0 %v390
  %v392 = vpop.xlane.xlu0 %391
  %v393 = vsel %vm214, %v384, 0.0
  %394 = vadd.xlane.f32.xlu0 %v393
  %v395 = vpop.xlane.xlu0 %394
  %v396 = vsel %vm214, %v386, 0.0
  %397 = vadd.xlane.f32.xlu0 %v396
  %v398 = vpop.xlane.xlu0 %397
  %v399 = vrcp.pop %v389
  %v400 = vrcp.pop %v392
  %v401 = vrcp.pop %v395
  %v402 = vrcp.pop %v398
  %v403 = vmul.f32 %v380, %v399
  %v404 = vmul.f32 %v382, %v400
  %v405 = vmul.f32 %v384, %v401
  %v406 = vmul.f32 %v386, %v402
  %v407 = vpack.c.bf16 %v403, %v403
  %v408 = vpack.c.bf16 %v404, %v404
  %v409 = vpack.c.bf16 %v405, %v405
  %v410 = vpack.c.bf16 %v406, %v406
  %v413 = vunpack.c.l.b16 %v407
  %v414 = vunpack.c.l.b16 %v408
  %v415 = vpack.c.b16 %v414, %v413
  %416 = vrot.lane.b32.xlu0 %v163, 56
  %v417 = vpop.permute.xlu0 %416
  %v420 = vsel %vm214, %v415, 0
  %422 = vmatpush.bf16.msra.mxu0 0
  %423 = vmatpush.bf16.msra.mxu0 0
  %424 = vmatpush.bf16.msra.mxu0 0
  %425 = vmatpush.bf16.msra.mxu0 0
  %426 = vmatpush.bf16.msra.mxu0 0
  %427 = vmatpush.bf16.msra.mxu0 0
  %428 = vmatpush.bf16.msra.mxu0 0
  %429 = vmatpush.bf16.msra.mxu0 %v417
  %430 = vmatmul.bf16.gmra.mxu0 %v420
  %v431 = vpop.f32.mrf.mxu0
  %v432 = vadd.f32 0.0, %v431
  %v433 = vpop.f32.mrf.mxu0
  %v434 = vadd.f32 0.0, %v433
  %435 = vdwg.mxu0
  %v438 = vunpack.c.l.b16 %v409
  %v439 = vunpack.c.l.b16 %v410
  %v440 = vpack.c.b16 %v439, %v438
  %441 = vrot.lane.b32.xlu0 %v191, 56
  %v442 = vpop.permute.xlu0 %441
  %v445 = vsel %vm214, %v440, 0
  %447 = vmatpush.bf16.msra.mxu0 0
  %448 = vmatpush.bf16.msra.mxu0 0
  %449 = vmatpush.bf16.msra.mxu0 0
  %450 = vmatpush.bf16.msra.mxu0 0
  %451 = vmatpush.bf16.msra.mxu0 0
  %452 = vmatpush.bf16.msra.mxu0 0
  %453 = vmatpush.bf16.msra.mxu0 0
  %454 = vmatpush.bf16.msra.mxu0 %v442
  %455 = vmatmul.bf16.gmra.mxu0 %v445
  %v456 = vpop.f32.mrf.mxu0
  %v457 = vadd.f32 0.0, %v456
  %v458 = vpop.f32.mrf.mxu0
  %v459 = vadd.f32 0.0, %v458
  %460 = vdwg.mxu0
  %v461 = vpack.c.bf16 %v434, %v432
  %v462 = vpack.c.bf16 %v459, %v457
  %v464 = vsel %vm166, %v461, 0
  %v467 = vsel %vm166, %v462, 0
  %vm469 = vcmask 1043456
  %v471 = vsel %vm469, %v152, 0
  %473 = vmatpush.bf16.msra.mxu0 0
  %474 = vmatpush.bf16.msra.mxu0 0
  %475 = vmatpush.bf16.msra.mxu0 0
  %476 = vmatpush.bf16.msra.mxu0 0
  %477 = vmatpush.bf16.msra.mxu0 0
  %478 = vmatpush.bf16.msra.mxu0 0
  %479 = vmatpush.bf16.msra.mxu0 0
  %480 = vmatpush.bf16.msra.mxu0 %v471
  %481 = vmatmul.bf16.gmra.mxu0 %v464
  %v482 = vpop.f32.mrf.mxu0
  %v483 = vadd.f32 0.0, %v482
  %v484 = vpop.f32.mrf.mxu0
  %v485 = vadd.f32 0.0, %v484
  %486 = vmatmul.bf16.gmra.mxu0 %v467
  %v487 = vpop.f32.mrf.mxu0
  %v488 = vadd.f32 0.0, %v487
  %v489 = vpop.f32.mrf.mxu0
  %v490 = vadd.f32 0.0, %v489
  %491 = vdwg.mxu0
  %v493 = vsel %vm166, %v313, 0
  %v496 = vsel %vm166, %v314, 0
  %v499 = vsel %vm469, %v151, 0
  %501 = vmatpush.bf16.msra.mxu0 0
  %502 = vmatpush.bf16.msra.mxu0 0
  %503 = vmatpush.bf16.msra.mxu0 0
  %504 = vmatpush.bf16.msra.mxu0 0
  %505 = vmatpush.bf16.msra.mxu0 0
  %506 = vmatpush.bf16.msra.mxu0 0
  %507 = vmatpush.bf16.msra.mxu0 0
  %508 = vmatpush.bf16.msra.mxu0 %v499
  %509 = vmatmul.bf16.gmra.mxu0 %v493
  %v510 = vpop.f32.mrf.mxu0
  %v511 = vadd.f32 %v483, %v510
  %v512 = vpop.f32.mrf.mxu0
  %v513 = vadd.f32 %v485, %v512
  %514 = vmatmul.bf16.gmra.mxu0 %v496
  %v515 = vpop.f32.mrf.mxu0
  %v516 = vadd.f32 %v488, %v515
  %v517 = vpop.f32.mrf.mxu0
  %v518 = vadd.f32 %v490, %v517
  %519 = vdwg.mxu0
  %520 = vrot.lane.b32.xlu0 %v163, 112
  %v521 = vpop.permute.xlu0 %520
  %522 = vrot.lane.b32.xlu0 %v163, 80
  %v523 = vpop.permute.xlu0 %522
  %v525 = vsel %vm166, %v521, 0
  %v528 = vsel %vm166, %v523, 0
  %530 = vmatpush.bf16.xpose.msra.mxu0 0
  %531 = vmatpush.bf16.xpose.msra.mxu0 0
  %532 = vmatpush.bf16.xpose.msra.mxu0 0
  %533 = vmatpush.bf16.xpose.msra.mxu0 0
  %534 = vmatpush.bf16.xpose.msra.mxu0 0
  %535 = vmatpush.bf16.xpose.msra.mxu0 0
  %536 = vmatpush.bf16.xpose.msra.mxu0 0
  %537 = vmatpush.bf16.xpose.msra.mxu0 %v528
  %538 = vmatmul.bf16.gmra.mxu0 %v525
  %v539 = vpop.f32.mrf.mxu0
  %v540 = vadd.f32 0.0, %v539
  %v541 = vpop.f32.mrf.mxu0
  %v542 = vadd.f32 0.0, %v541
  %543 = vdwg.mxu0
  %544 = vrot.lane.b32.xlu0 %v191, 112
  %v545 = vpop.permute.xlu0 %544
  %546 = vrot.lane.b32.xlu0 %v191, 80
  %v547 = vpop.permute.xlu0 %546
  %v549 = vsel %vm166, %v545, 0
  %v552 = vsel %vm166, %v547, 0
  %554 = vmatpush.bf16.xpose.msra.mxu0 0
  %555 = vmatpush.bf16.xpose.msra.mxu0 0
  %556 = vmatpush.bf16.xpose.msra.mxu0 0
  %557 = vmatpush.bf16.xpose.msra.mxu0 0
  %558 = vmatpush.bf16.xpose.msra.mxu0 0
  %559 = vmatpush.bf16.xpose.msra.mxu0 0
  %560 = vmatpush.bf16.xpose.msra.mxu0 0
  %561 = vmatpush.bf16.xpose.msra.mxu0 %v552
  %562 = vmatmul.bf16.gmra.mxu0 %v549
  %v563 = vpop.f32.mrf.mxu0
  %v564 = vadd.f32 0.0, %v563
  %v565 = vpop.f32.mrf.mxu0
  %v566 = vadd.f32 0.0, %v565
  %567 = vdwg.mxu0
  %v568 = vsel %vm214, %v540, -inf
  %569 = vmax.xlane.f32.xlu0 %v568
  %v570 = vpop.xlane.xlu0 %569
  %v571 = vsel %vm214, %v542, -inf
  %572 = vmax.xlane.f32.xlu0 %v571
  %v573 = vpop.xlane.xlu0 %572
  %v574 = vsel %vm214, %v564, -inf
  %575 = vmax.xlane.f32.xlu0 %v574
  %v576 = vpop.xlane.xlu0 %575
  %v577 = vsel %vm214, %v566, -inf
  %578 = vmax.xlane.f32.xlu0 %v577
  %v579 = vpop.xlane.xlu0 %578
  %v580 = vsub.f32 %v540, %v570
  %v581 = vsub.f32 %v542, %v573
  %v582 = vsub.f32 %v564, %v576
  %v583 = vsub.f32 %v566, %v579
  %v584 = vmul.f32 %v580, 1.442695
  %v585 = vpow.pop %v584
  %v586 = vmul.f32 %v581, 1.442695
  %v587 = vpow.pop %v586
  %v588 = vmul.f32 %v582, 1.442695
  %v589 = vpow.pop %v588
  %v590 = vmul.f32 %v583, 1.442695
  %v591 = vpow.pop %v590
  %v592 = vsel %vm214, %v585, 0.0
  %593 = vadd.xlane.f32.xlu0 %v592
  %v594 = vpop.xlane.xlu0 %593
  %v595 = vsel %vm214, %v587, 0.0
  %596 = vadd.xlane.f32.xlu0 %v595
  %v597 = vpop.xlane.xlu0 %596
  %v598 = vsel %vm214, %v589, 0.0
  %599 = vadd.xlane.f32.xlu0 %v598
  %v600 = vpop.xlane.xlu0 %599
  %v601 = vsel %vm214, %v591, 0.0
  %602 = vadd.xlane.f32.xlu0 %v601
  %v603 = vpop.xlane.xlu0 %602
  %v604 = vrcp.pop %v594
  %v605 = vrcp.pop %v597
  %v606 = vrcp.pop %v600
  %v607 = vrcp.pop %v603
  %v608 = vmul.f32 %v585, %v604
  %v609 = vmul.f32 %v587, %v605
  %v610 = vmul.f32 %v589, %v606
  %v611 = vmul.f32 %v591, %v607
  %v612 = vpack.c.bf16 %v608, %v608
  %v613 = vpack.c.bf16 %v609, %v609
  %v614 = vpack.c.bf16 %v610, %v610
  %v615 = vpack.c.bf16 %v611, %v611
  %v618 = vunpack.c.l.b16 %v612
  %v619 = vunpack.c.l.b16 %v613
  %v620 = vpack.c.b16 %v619, %v618
  %621 = vrot.lane.b32.xlu0 %v163, 48
  %v622 = vpop.permute.xlu0 %621
  %v625 = vsel %vm214, %v620, 0
  %627 = vmatpush.bf16.msra.mxu0 0
  %628 = vmatpush.bf16.msra.mxu0 0
  %629 = vmatpush.bf16.msra.mxu0 0
  %630 = vmatpush.bf16.msra.mxu0 0
  %631 = vmatpush.bf16.msra.mxu0 0
  %632 = vmatpush.bf16.msra.mxu0 0
  %633 = vmatpush.bf16.msra.mxu0 0
  %634 = vmatpush.bf16.msra.mxu0 %v622
  %635 = vmatmul.bf16.gmra.mxu0 %v625
  %v636 = vpop.f32.mrf.mxu0
  %v637 = vadd.f32 0.0, %v636
  %v638 = vpop.f32.mrf.mxu0
  %v639 = vadd.f32 0.0, %v638
  %640 = vdwg.mxu0
  %v643 = vunpack.c.l.b16 %v614
  %v644 = vunpack.c.l.b16 %v615
  %v645 = vpack.c.b16 %v644, %v643
  %646 = vrot.lane.b32.xlu0 %v191, 48
  %v647 = vpop.permute.xlu0 %646
  %v650 = vsel %vm214, %v645, 0
  %652 = vmatpush.bf16.msra.mxu0 0
  %653 = vmatpush.bf16.msra.mxu0 0
  %654 = vmatpush.bf16.msra.mxu0 0
  %655 = vmatpush.bf16.msra.mxu0 0
  %656 = vmatpush.bf16.msra.mxu0 0
  %657 = vmatpush.bf16.msra.mxu0 0
  %658 = vmatpush.bf16.msra.mxu0 0
  %659 = vmatpush.bf16.msra.mxu0 %v647
  %660 = vmatmul.bf16.gmra.mxu0 %v650
  %v661 = vpop.f32.mrf.mxu0
  %v662 = vadd.f32 0.0, %v661
  %v663 = vpop.f32.mrf.mxu0
  %v664 = vadd.f32 0.0, %v663
  %665 = vdwg.mxu0
  %v666 = vpack.c.bf16 %v639, %v637
  %v667 = vpack.c.bf16 %v664, %v662
  %v669 = vsel %vm166, %v666, 0
  %v672 = vsel %vm166, %v667, 0
  %v675 = vsel %vm469, %v153, 0
  %677 = vmatpush.bf16.msra.mxu0 0
  %678 = vmatpush.bf16.msra.mxu0 0
  %679 = vmatpush.bf16.msra.mxu0 0
  %680 = vmatpush.bf16.msra.mxu0 0
  %681 = vmatpush.bf16.msra.mxu0 0
  %682 = vmatpush.bf16.msra.mxu0 0
  %683 = vmatpush.bf16.msra.mxu0 0
  %684 = vmatpush.bf16.msra.mxu0 %v675
  %685 = vmatmul.bf16.gmra.mxu0 %v669
  %v686 = vpop.f32.mrf.mxu0
  %v687 = vadd.f32 0.0, %v686
  %v688 = vpop.f32.mrf.mxu0
  %v689 = vadd.f32 0.0, %v688
  %690 = vmatmul.bf16.gmra.mxu0 %v672
  %v691 = vpop.f32.mrf.mxu0
  %v692 = vadd.f32 0.0, %v691
  %v693 = vpop.f32.mrf.mxu0
  %v694 = vadd.f32 0.0, %v693
  %695 = vdwg.mxu0
  %v696 = vadd.f32 %v511, %v687
  %v697 = vadd.f32 %v513, %v689
  %v698 = vadd.f32 %v516, %v692
  %v699 = vadd.f32 %v518, %v694
  %700 = vrot.lane.b32.xlu0 %v163, 104
  %v701 = vpop.permute.xlu0 %700
  %702 = vrot.lane.b32.xlu0 %v163, 72
  %v703 = vpop.permute.xlu0 %702
  %v705 = vsel %vm166, %v701, 0
  %v708 = vsel %vm166, %v703, 0
  %710 = vmatpush.bf16.xpose.msra.mxu0 0
  %711 = vmatpush.bf16.xpose.msra.mxu0 0
  %712 = vmatpush.bf16.xpose.msra.mxu0 0
  %713 = vmatpush.bf16.xpose.msra.mxu0 0
  %714 = vmatpush.bf16.xpose.msra.mxu0 0
  %715 = vmatpush.bf16.xpose.msra.mxu0 0
  %716 = vmatpush.bf16.xpose.msra.mxu0 0
  %717 = vmatpush.bf16.xpose.msra.mxu0 %v708
  %718 = vmatmul.bf16.gmra.mxu0 %v705
  %v719 = vpop.f32.mrf.mxu0
  %v720 = vadd.f32 0.0, %v719
  %v721 = vpop.f32.mrf.mxu0
  %v722 = vadd.f32 0.0, %v721
  %723 = vdwg.mxu0
  %724 = vrot.lane.b32.xlu0 %v191, 104
  %v725 = vpop.permute.xlu0 %724
  %726 = vrot.lane.b32.xlu0 %v191, 72
  %v727 = vpop.permute.xlu0 %726
  %v729 = vsel %vm166, %v725, 0
  %v732 = vsel %vm166, %v727, 0
  %734 = vmatpush.bf16.xpose.msra.mxu0 0
  %735 = vmatpush.bf16.xpose.msra.mxu0 0
  %736 = vmatpush.bf16.xpose.msra.mxu0 0
  %737 = vmatpush.bf16.xpose.msra.mxu0 0
  %738 = vmatpush.bf16.xpose.msra.mxu0 0
  %739 = vmatpush.bf16.xpose.msra.mxu0 0
  %740 = vmatpush.bf16.xpose.msra.mxu0 0
  %741 = vmatpush.bf16.xpose.msra.mxu0 %v732
  %742 = vmatmul.bf16.gmra.mxu0 %v729
  %v743 = vpop.f32.mrf.mxu0
  %v744 = vadd.f32 0.0, %v743
  %v745 = vpop.f32.mrf.mxu0
  %v746 = vadd.f32 0.0, %v745
  %747 = vdwg.mxu0
  %v748 = vsel %vm214, %v720, -inf
  %749 = vmax.xlane.f32.xlu0 %v748
  %v750 = vpop.xlane.xlu0 %749
  %v751 = vsel %vm214, %v722, -inf
  %752 = vmax.xlane.f32.xlu0 %v751
  %v753 = vpop.xlane.xlu0 %752
  %v754 = vsel %vm214, %v744, -inf
  %755 = vmax.xlane.f32.xlu0 %v754
  %v756 = vpop.xlane.xlu0 %755
  %v757 = vsel %vm214, %v746, -inf
  %758 = vmax.xlane.f32.xlu0 %v757
  %v759 = vpop.xlane.xlu0 %758
  %v760 = vsub.f32 %v720, %v750
  %v761 = vsub.f32 %v722, %v753
  %v762 = vsub.f32 %v744, %v756
  %v763 = vsub.f32 %v746, %v759
  %v764 = vmul.f32 %v760, 1.442695
  %v765 = vpow.pop %v764
  %v766 = vmul.f32 %v761, 1.442695
  %v767 = vpow.pop %v766
  %v768 = vmul.f32 %v762, 1.442695
  %v769 = vpow.pop %v768
  %v770 = vmul.f32 %v763, 1.442695
  %v771 = vpow.pop %v770
  %v772 = vsel %vm214, %v765, 0.0
  %773 = vadd.xlane.f32.xlu0 %v772
  %v774 = vpop.xlane.xlu0 %773
  %v775 = vsel %vm214, %v767, 0.0
  %776 = vadd.xlane.f32.xlu0 %v775
  %v777 = vpop.xlane.xlu0 %776
  %v778 = vsel %vm214, %v769, 0.0
  %779 = vadd.xlane.f32.xlu0 %v778
  %v780 = vpop.xlane.xlu0 %779
  %v781 = vsel %vm214, %v771, 0.0
  %782 = vadd.xlane.f32.xlu0 %v781
  %v783 = vpop.xlane.xlu0 %782
  %v784 = vrcp.pop %v774
  %v785 = vrcp.pop %v777
  %v786 = vrcp.pop %v780
  %v787 = vrcp.pop %v783
  %v788 = vmul.f32 %v765, %v784
  %v789 = vmul.f32 %v767, %v785
  %v790 = vmul.f32 %v769, %v786
  %v791 = vmul.f32 %v771, %v787
  %v792 = vpack.c.bf16 %v788, %v788
  %v793 = vpack.c.bf16 %v789, %v789
  %v794 = vpack.c.bf16 %v790, %v790
  %v795 = vpack.c.bf16 %v791, %v791
  %v798 = vunpack.c.l.b16 %v792
  %v799 = vunpack.c.l.b16 %v793
  %v800 = vpack.c.b16 %v799, %v798
  %801 = vrot.lane.b32.xlu0 %v163, 40
  %v802 = vpop.permute.xlu0 %801
  %v805 = vsel %vm214, %v800, 0
  %807 = vmatpush.bf16.msra.mxu0 0
  %808 = vmatpush.bf16.msra.mxu0 0
  %809 = vmatpush.bf16.msra.mxu0 0
  %810 = vmatpush.bf16.msra.mxu0 0
  %811 = vmatpush.bf16.msra.mxu0 0
  %812 = vmatpush.bf16.msra.mxu0 0
  %813 = vmatpush.bf16.msra.mxu0 0
  %814 = vmatpush.bf16.msra.mxu0 %v802
  %815 = vmatmul.bf16.gmra.mxu0 %v805
  %v816 = vpop.f32.mrf.mxu0
  %v817 = vadd.f32 0.0, %v816
  %v818 = vpop.f32.mrf.mxu0
  %v819 = vadd.f32 0.0, %v818
  %820 = vdwg.mxu0
  %v823 = vunpack.c.l.b16 %v794
  %v824 = vunpack.c.l.b16 %v795
  %v825 = vpack.c.b16 %v824, %v823
  %826 = vrot.lane.b32.xlu0 %v191, 40
  %v827 = vpop.permute.xlu0 %826
  %v830 = vsel %vm214, %v825, 0
  %832 = vmatpush.bf16.msra.mxu0 0
  %833 = vmatpush.bf16.msra.mxu0 0
  %834 = vmatpush.bf16.msra.mxu0 0
  %835 = vmatpush.bf16.msra.mxu0 0
  %836 = vmatpush.bf16.msra.mxu0 0
  %837 = vmatpush.bf16.msra.mxu0 0
  %838 = vmatpush.bf16.msra.mxu0 0
  %839 = vmatpush.bf16.msra.mxu0 %v827
  %840 = vmatmul.bf16.gmra.mxu0 %v830
  %v841 = vpop.f32.mrf.mxu0
  %v842 = vadd.f32 0.0, %v841
  %v843 = vpop.f32.mrf.mxu0
  %v844 = vadd.f32 0.0, %v843
  %845 = vdwg.mxu0
  %v846 = vpack.c.bf16 %v819, %v817
  %v847 = vpack.c.bf16 %v844, %v842
  %v849 = vsel %vm166, %v846, 0
  %v852 = vsel %vm166, %v847, 0
  %v855 = vsel %vm469, %v154, 0
  %857 = vmatpush.bf16.msra.mxu0 0
  %858 = vmatpush.bf16.msra.mxu0 0
  %859 = vmatpush.bf16.msra.mxu0 0
  %860 = vmatpush.bf16.msra.mxu0 0
  %861 = vmatpush.bf16.msra.mxu0 0
  %862 = vmatpush.bf16.msra.mxu0 0
  %863 = vmatpush.bf16.msra.mxu0 0
  %864 = vmatpush.bf16.msra.mxu0 %v855
  %865 = vmatmul.bf16.gmra.mxu0 %v849
  %v866 = vpop.f32.mrf.mxu0
  %v867 = vadd.f32 0.0, %v866
  %v868 = vpop.f32.mrf.mxu0
  %v869 = vadd.f32 0.0, %v868
  %870 = vmatmul.bf16.gmra.mxu0 %v852
  %v871 = vpop.f32.mrf.mxu0
  %v872 = vadd.f32 0.0, %v871
  %v873 = vpop.f32.mrf.mxu0
  %v874 = vadd.f32 0.0, %v873
  %875 = vdwg.mxu0
  %v876 = vadd.f32 %v696, %v867
  %v877 = vadd.f32 %v697, %v869
  %v878 = vadd.f32 %v698, %v872
  %v879 = vadd.f32 %v699, %v874
  %v880 = vld [vmem:[%s7] sm:$0x1]
  %v882 = vperm.slane %v880, 0
  %v884 = vadd.f32 %v876, %v882
  %v885 = vadd.f32 %v877, %v882
  %v886 = vadd.f32 %v878, %v882
  %v887 = vadd.f32 %v879, %v882
  %v888 = vld [vmem:[%s12] sm:$0x1]
  %v889 = vld [vmem:[%s13] sm:$0x1]
  %v890 = vadd.f32 %v99, %v884
  %v891 = vadd.f32 %v100, %v885
  %v892 = vadd.f32 %v101, %v886
  %v893 = vadd.f32 %v102, %v887
  %v894 = vsel %vm125, %v890, 0.0
  %v895 = vsel %vm125, %v891, 0.0
  %v896 = vadd.f32 %v894, %v895
  %v897 = vsel %vm125, %v892, 0.0
  %v898 = vadd.f32 %v896, %v897
  %v899 = vsel %vm125, %v893, 0.0
  %v900 = vadd.f32 %v898, %v899
  %v901 = vrot.slane %v900, 4
  %v902 = vadd.f32 %v900, %v901
  %v903 = vrot.slane %v902, 2
  %v904 = vadd.f32 %v902, %v903
  %v905 = vrot.slane %v904, 1
  %v906 = vadd.f32 %v904, %v905
  %v907 = vmul.f32 %v906, 0.03125
  %v908 = vsub.f32 %v890, %v907
  %v909 = vsub.f32 %v891, %v907
  %v910 = vsub.f32 %v892, %v907
  %v911 = vsub.f32 %v893, %v907
  %v912 = vmul.f32 %v908, %v908
  %v913 = vmul.f32 %v909, %v909
  %v914 = vmul.f32 %v910, %v910
  %v915 = vmul.f32 %v911, %v911
  %v916 = vsel %vm125, %v912, 0.0
  %v917 = vsel %vm125, %v913, 0.0
  %v918 = vadd.f32 %v916, %v917
  %v919 = vsel %vm125, %v914, 0.0
  %v920 = vadd.f32 %v918, %v919
  %v921 = vsel %vm125, %v915, 0.0
  %v922 = vadd.f32 %v920, %v921
  %v923 = vrot.slane %v922, 4
  %v924 = vadd.f32 %v922, %v923
  %v925 = vrot.slane %v924, 2
  %v926 = vadd.f32 %v924, %v925
  %v927 = vrot.slane %v926, 1
  %v928 = vadd.f32 %v926, %v927
  %v929 = vmul.f32 %v928, 0.03125
  %v930 = vadd.f32 %v929, 1e-05
  %v931 = vrsqrt.pop %v930
  %v932 = vmul.f32 %v931, %v930
  %v933 = vmul.f32 %v932, %v931
  %v934 = vmul.f32 0.5, %v933
  %v935 = vsub.f32 1.5, %v934
  %v936 = vmul.f32 %v931, %v935
  %vm937 = vweird.f32 %v930
  %vm938 = vweird.f32 %v931
  %vm939 = vmor %vm937, %vm938
  %v940 = vsel %vm939, %v931, %v936
  %v941 = vmul.f32 %v940, %v888
  %v942 = vperm.slane %v941, 0
  %v943 = vmul.f32 %v908, %v942
  %v944 = vmul.f32 %v909, %v942
  %v945 = vmul.f32 %v910, %v942
  %v946 = vmul.f32 %v911, %v942
  %v948 = vperm.slane %v889, 0
  %v950 = vadd.f32 %v943, %v948
  %v951 = vadd.f32 %v944, %v948
  %v952 = vadd.f32 %v945, %v948
  %v953 = vadd.f32 %v946, %v948
  %v954 = vld [vmem:[%s8] sm:$0xf]
  %v955 = vld [vmem:[%s8 + $0x4] sm:$0xf]
  %v956 = vld [vmem:[%s8 + $0x8] sm:$0xf]
  %v957 = vld [vmem:[%s8 + $0xc] sm:$0xf]
  %v958 = vpack.c.bf16 %v951, %v950
  %v959 = vpack.c.bf16 %v953, %v952
  %v960 = vld [vmem:[%s9] sm:$0x1]
  %v962 = vperm.slane %v960, 0
  %v968 = vunpack.c.l.b16 %v954
  %v969 = vunpack.c.l.b16 %v955
  %v970 = vunpack.c.l.b16 %v956
  %v971 = vunpack.c.l.b16 %v957
  %v972 = vpack.c.b16 %v969, %v968
  %v973 = vpack.c.b16 %v971, %v970
  %v977 = vsel %vm125, %v958, 0
  %v980 = vsel %vm125, %v959, 0
  %982 = vmatpush.bf16.msra.mxu0 0
  %983 = vmatpush.bf16.msra.mxu0 0
  %984 = vmatpush.bf16.msra.mxu0 0
  %985 = vmatpush.bf16.msra.mxu0 0
  %986 = vmatpush.bf16.msra.mxu0 0
  %987 = vmatpush.bf16.msra.mxu0 0
  %988 = vmatpush.bf16.msra.mxu0 %v973
  %989 = vmatpush.bf16.msra.mxu0 %v972
  %990 = vmatmul.bf16.gmra.mxu0 %v977
  %v991 = vpop.f32.mrf.mxu0
  %v992 = vadd.f32 %v962, %v991
  %v993 = vpop.f32.mrf.mxu0
  %v994 = vadd.f32 %v962, %v993
  %995 = vmatmul.bf16.gmra.mxu0 %v980
  %v996 = vpop.f32.mrf.mxu0
  %v997 = vadd.f32 %v962, %v996
  %v998 = vpop.f32.mrf.mxu0
  %v999 = vadd.f32 %v962, %v998
  %1000 = vdwg.mxu0
  %v1001 = vmul.f32 %v992, 0.5
  %v1002 = vmul.f32 %v994, 0.5
  %v1003 = vmul.f32 %v997, 0.5
  %v1004 = vmul.f32 %v999, 0.5
  %v1005 = vmul.f32 %v992, 0.044715
  %v1006 = vmul.f32 %v994, 0.044715
  %v1007 = vmul.f32 %v997, 0.044715
  %v1008 = vmul.f32 %v999, 0.044715
  %v1009 = vmul.f32 %v1005, %v992
  %v1010 = vmul.f32 %v1006, %v994
  %v1011 = vmul.f32 %v1007, %v997
  %v1012 = vmul.f32 %v1008, %v999
  %v1013 = vmul.f32 %v1009, %v992
  %v1014 = vmul.f32 %v1010, %v994
  %v1015 = vmul.f32 %v1011, %v997
  %v1016 = vmul.f32 %v1012, %v999
  %v1017 = vadd.f32 %v992, %v1013
  %v1018 = vadd.f32 %v994, %v1014
  %v1019 = vadd.f32 %v997, %v1015
  %v1020 = vadd.f32 %v999, %v1016
  %v1021 = vmul.f32 %v1017, 0.7978846
  %v1022 = vmul.f32 %v1018, 0.7978846
  %v1023 = vmul.f32 %v1019, 0.7978846
  %v1024 = vmul.f32 %v1020, 0.7978846
  %v1025 = vtanh.pop %v1021
  %v1026 = vtanh.pop %v1022
  %v1027 = vtanh.pop %v1023
  %v1028 = vtanh.pop %v1024
  %v1029 = vadd.f32 %v1025, 1.0
  %v1030 = vadd.f32 %v1026, 1.0
  %v1031 = vadd.f32 %v1027, 1.0
  %v1032 = vadd.f32 %v1028, 1.0
  %v1033 = vmul.f32 %v1001, %v1029
  %v1034 = vmul.f32 %v1002, %v1030
  %v1035 = vmul.f32 %v1003, %v1031
  %v1036 = vmul.f32 %v1004, %v1032
  %v1037 = vld [vmem:[%s10] sm:$0xf]
  %v1038 = vld [vmem:[%s10 + $0x4] sm:$0xf]
  %v1039 = vld [vmem:[%s10 + $0x8] sm:$0xf]
  %v1040 = vld [vmem:[%s10 + $0xc] sm:$0xf]
  %v1041 = vld [vmem:[%s10 + $0x10] sm:$0xf]
  %v1042 = vld [vmem:[%s10 + $0x14] sm:$0xf]
  %v1043 = vld [vmem:[%s10 + $0x18] sm:$0xf]
  %v1044 = vld [vmem:[%s10 + $0x1c] sm:$0xf]
  %v1045 = vpack.c.bf16 %v1034, %v1033
  %v1046 = vpack.c.bf16 %v1036, %v1035
  %v1047 = vld [vmem:[%s11] sm:$0x1]
  %v1049 = vperm.slane %v1047, 0
  %v1059 = vunpack.c.l.b16 %v1037
  %v1060 = vunpack.c.l.b16 %v1038
  %v1061 = vunpack.c.l.b16 %v1039
  %v1062 = vunpack.c.l.b16 %v1040
  %v1063 = vunpack.c.l.b16 %v1041
  %v1064 = vunpack.c.l.b16 %v1042
  %v1065 = vunpack.c.l.b16 %v1043
  %v1066 = vunpack.c.l.b16 %v1044
  %v1067 = vpack.c.b16 %v1060, %v1059
  %v1068 = vpack.c.b16 %v1062, %v1061
  %v1069 = vpack.c.b16 %v1064, %v1063
  %v1070 = vpack.c.b16 %v1066, %v1065
  %vm1075 = vcmask 523264
  %v1077 = vsel %vm1075, %v1045, 0
  %v1080 = vsel %vm1075, %v1046, 0
  %1082 = vmatpush.bf16.msra.mxu0 0
  %1083 = vmatpush.bf16.msra.mxu0 0
  %1084 = vmatpush.bf16.msra.mxu0 0
  %1085 = vmatpush.bf16.msra.mxu0 0
  %1086 = vmatpush.bf16.msra.mxu0 %v1070
  %1087 = vmatpush.bf16.msra.mxu0 %v1069
  %1088 = vmatpush.bf16.msra.mxu0 %v1068
  %1089 = vmatpush.bf16.msra.mxu0 %v1067
  %1090 = vmatmul.bf16.gmra.mxu0 %v1077
  %v1091 = vpop.f32.mrf.mxu0
  %v1092 = vadd.f32 %v1049, %v1091
  %v1093 = vpop.f32.mrf.mxu0
  %v1094 = vadd.f32 %v1049, %v1093
  %1095 = vmatmul.bf16.gmra.mxu0 %v1080
  %v1096 = vpop.f32.mrf.mxu0
  %v1097 = vadd.f32 %v1049, %v1096
  %v1098 = vpop.f32.mrf.mxu0
  %v1099 = vadd.f32 %v1049, %v1098
  %1100 = vdwg.mxu0
  %v1101 = vld [vmem:[%s14] sm:$0x1]
  %v1102 = vld [vmem:[%s15] sm:$0x1]
  %v1103 = vadd.f32 %v950, %v1092
  %v1104 = vadd.f32 %v951, %v1094
  %v1105 = vadd.f32 %v952, %v1097
  %v1106 = vadd.f32 %v953, %v1099
  %v1107 = vsel %vm125, %v1103, 0.0
  %v1108 = vsel %vm125, %v1104, 0.0
  %v1109 = vadd.f32 %v1107, %v1108
  %v1110 = vsel %vm125, %v1105, 0.0
  %v1111 = vadd.f32 %v1109, %v1110
  %v1112 = vsel %vm125, %v1106, 0.0
  %v1113 = vadd.f32 %v1111, %v1112
  %v1114 = vrot.slane %v1113, 4
  %v1115 = vadd.f32 %v1113, %v1114
  %v1116 = vrot.slane %v1115, 2
  %v1117 = vadd.f32 %v1115, %v1116
  %v1118 = vrot.slane %v1117, 1
  %v1119 = vadd.f32 %v1117, %v1118
  %v1120 = vmul.f32 %v1119, 0.03125
  %v1121 = vsub.f32 %v1103, %v1120
  %v1122 = vsub.f32 %v1104, %v1120
  %v1123 = vsub.f32 %v1105, %v1120
  %v1124 = vsub.f32 %v1106, %v1120
  %v1125 = vmul.f32 %v1121, %v1121
  %v1126 = vmul.f32 %v1122, %v1122
  %v1127 = vmul.f32 %v1123, %v1123
  %v1128 = vmul.f32 %v1124, %v1124
  %v1129 = vsel %vm125, %v1125, 0.0
  %v1130 = vsel %vm125, %v1126, 0.0
  %v1131 = vadd.f32 %v1129, %v1130
  %v1132 = vsel %vm125, %v1127, 0.0
  %v1133 = vadd.f32 %v1131, %v1132
  %v1134 = vsel %vm125, %v1128, 0.0
  %v1135 = vadd.f32 %v1133, %v1134
  %v1136 = vrot.slane %v1135, 4
  %v1137 = vadd.f32 %v1135, %v1136
  %v1138 = vrot.slane %v1137, 2
  %v1139 = vadd.f32 %v1137, %v1138
  %v1140 = vrot.slane %v1139, 1
  %v1141 = vadd.f32 %v1139, %v1140
  %v1142 = vmul.f32 %v1141, 0.03125
  %v1143 = vadd.f32 %v1142, 1e-05
  %v1144 = vrsqrt.pop %v1143
  %v1145 = vmul.f32 %v1144, %v1143
  %v1146 = vmul.f32 %v1145, %v1144
  %v1147 = vmul.f32 0.5, %v1146
  %v1148 = vsub.f32 1.5, %v1147
  %v1149 = vmul.f32 %v1144, %v1148
  %vm1150 = vweird.f32 %v1143
  %vm1151 = vweird.f32 %v1144
  %vm1152 = vmor %vm1150, %vm1151
  %v1153 = vsel %vm1152, %v1144, %v1149
  %v1154 = vmul.f32 %v1153, %v1101
  %v1155 = vperm.slane %v1154, 0
  %v1156 = vmul.f32 %v1121, %v1155
  %v1157 = vmul.f32 %v1122, %v1155
  %v1158 = vmul.f32 %v1123, %v1155
  %v1159 = vmul.f32 %v1124, %v1155
  %v1161 = vperm.slane %v1102, 0
  %v1163 = vadd.f32 %v1156, %v1161
  %v1164 = vadd.f32 %v1157, %v1161
  %v1165 = vadd.f32 %v1158, %v1161
  %v1166 = vadd.f32 %v1159, %v1161
  %s1167 = scalar_lea.vmem %s4, 16
  %v1168 = vld [vmem:[%s1167] sm:$0xf]
  %v1169 = vld [vmem:[%s1167 + $0x4] sm:$0xf]
  %v1170 = vld [vmem:[%s1167 + $0x8] sm:$0xf]
  %v1171 = vld [vmem:[%s1167 + $0xc] sm:$0xf]
  %v1172 = vpack.c.bf16 %v1164, %v1163
  %v1173 = vpack.c.bf16 %v1166, %v1165
  %s1174 = scalar_lea.vmem %s5, 1
  %v1175 = vld [vmem:[%s1174] sm:$0x1]
  %v1177 = vperm.slane %v1175, 0
  %v1183 = vunpack.c.l.b16 %v1168
  %v1184 = vunpack.c.l.b16 %v1169
  %v1185 = vunpack.c.l.b16 %v1170
  %v1186 = vunpack.c.l.b16 %v1171
  %v1187 = vpack.c.b16 %v1184, %v1183
  %v1188 = vpack.c.b16 %v1186, %v1185
  %v1192 = vsel %vm125, %v1172, 0
  %v1195 = vsel %vm125, %v1173, 0
  %1197 = vmatpush.bf16.msra.mxu0 0
  %1198 = vmatpush.bf16.msra.mxu0 0
  %1199 = vmatpush.bf16.msra.mxu0 0
  %1200 = vmatpush.bf16.msra.mxu0 0
  %1201 = vmatpush.bf16.msra.mxu0 0
  %1202 = vmatpush.bf16.msra.mxu0 0
  %1203 = vmatpush.bf16.msra.mxu0 %v1188
  %1204 = vmatpush.bf16.msra.mxu0 %v1187
  %1205 = vmatmul.bf16.gmra.mxu0 %v1192
  %v1206 = vpop.f32.mrf.mxu0
  %v1207 = vadd.f32 %v1177, %v1206
  %v1208 = vpop.f32.mrf.mxu0
  %v1209 = vadd.f32 %v1177, %v1208
  %1210 = vmatmul.bf16.gmra.mxu0 %v1195
  %v1211 = vpop.f32.mrf.mxu0
  %v1212 = vadd.f32 %v1177, %v1211
  %v1213 = vpop.f32.mrf.mxu0
  %v1214 = vadd.f32 %v1177, %v1213
  %1215 = vdwg.mxu0
  %s1216 = scalar_lea.vmem %s6, 16
  %v1217 = vld [vmem:[%s1216] sm:$0xf]
  %v1218 = vld [vmem:[%s1216 + $0x4] sm:$0xf]
  %v1219 = vld [vmem:[%s1216 + $0x8] sm:$0xf]
  %v1220 = vld [vmem:[%s1216 + $0xc] sm:$0xf]
  %v1221 = vpack.c.bf16 %v1207, %v1207
  %v1222 = vpack.c.bf16 %v1209, %v1209
  %v1223 = vpack.c.bf16 %v1212, %v1212
  %v1224 = vpack.c.bf16 %v1214, %v1214
  %v1227 = vunpack.c.l.b16 %v1221
  %v1228 = vunpack.c.l.b16 %v1222
  %v1229 = vpack.c.b16 %v1228, %v1227
  %1230 = vrot.lane.b32.xlu0 %v1229, 96
  %v1231 = vpop.permute.xlu0 %1230
  %v1233 = vsel %vm166, %v1229, 0
  %v1236 = vsel %vm166, %v1231, 0
  %1238 = vmatpush.bf16.xpose.msra.mxu0 0
  %1239 = vmatpush.bf16.xpose.msra.mxu0 0
  %1240 = vmatpush.bf16.xpose.msra.mxu0 0
  %1241 = vmatpush.bf16.xpose.msra.mxu0 0
  %1242 = vmatpush.bf16.xpose.msra.mxu0 0
  %1243 = vmatpush.bf16.xpose.msra.mxu0 0
  %1244 = vmatpush.bf16.xpose.msra.mxu0 0
  %1245 = vmatpush.bf16.xpose.msra.mxu0 %v1236
  %1246 = vmatmul.bf16.gmra.mxu0 %v1233
  %v1247 = vpop.f32.mrf.mxu0
  %v1248 = vadd.f32 0.0, %v1247
  %v1249 = vpop.f32.mrf.mxu0
  %v1250 = vadd.f32 0.0, %v1249
  %1251 = vdwg.mxu0
  %v1254 = vunpack.c.l.b16 %v1223
  %v1255 = vunpack.c.l.b16 %v1224
  %v1256 = vpack.c.b16 %v1255, %v1254
  %1257 = vrot.lane.b32.xlu0 %v1256, 96
  %v1258 = vpop.permute.xlu0 %1257
  %v1260 = vsel %vm166, %v1256, 0
  %v1263 = vsel %vm166, %v1258, 0
  %1265 = vmatpush.bf16.xpose.msra.mxu0 0
  %1266 = vmatpush.bf16.xpose.msra.mxu0 0
  %1267 = vmatpush.bf16.xpose.msra.mxu0 0
  %1268 = vmatpush.bf16.xpose.msra.mxu0 0
  %1269 = vmatpush.bf16.xpose.msra.mxu0 0
  %1270 = vmatpush.bf16.xpose.msra.mxu0 0
  %1271 = vmatpush.bf16.xpose.msra.mxu0 0
  %1272 = vmatpush.bf16.xpose.msra.mxu0 %v1263
  %1273 = vmatmul.bf16.gmra.mxu0 %v1260
  %v1274 = vpop.f32.mrf.mxu0
  %v1275 = vadd.f32 0.0, %v1274
  %v1276 = vpop.f32.mrf.mxu0
  %v1277 = vadd.f32 0.0, %v1276
  %1278 = vdwg.mxu0
  %v1279 = vsel %vm214, %v1248, -inf
  %1280 = vmax.xlane.f32.xlu0 %v1279
  %v1281 = vpop.xlane.xlu0 %1280
  %v1282 = vsel %vm214, %v1250, -inf
  %1283 = vmax.xlane.f32.xlu0 %v1282
  %v1284 = vpop.xlane.xlu0 %1283
  %v1285 = vsel %vm214, %v1275, -inf
  %1286 = vmax.xlane.f32.xlu0 %v1285
  %v1287 = vpop.xlane.xlu0 %1286
  %v1288 = vsel %vm214, %v1277, -inf
  %1289 = vmax.xlane.f32.xlu0 %v1288
  %v1290 = vpop.xlane.xlu0 %1289
  %v1291 = vsub.f32 %v1248, %v1281
  %v1292 = vsub.f32 %v1250, %v1284
  %v1293 = vsub.f32 %v1275, %v1287
  %v1294 = vsub.f32 %v1277, %v1290
  %v1295 = vmul.f32 %v1291, 1.442695
  %v1296 = vpow.pop %v1295
  %v1297 = vmul.f32 %v1292, 1.442695
  %v1298 = vpow.pop %v1297
  %v1299 = vmul.f32 %v1293, 1.442695
  %v1300 = vpow.pop %v1299
  %v1301 = vmul.f32 %v1294, 1.442695
  %v1302 = vpow.pop %v1301
  %v1303 = vsel %vm214, %v1296, 0.0
  %1304 = vadd.xlane.f32.xlu0 %v1303
  %v1305 = vpop.xlane.xlu0 %1304
  %v1306 = vsel %vm214, %v1298, 0.0
  %1307 = vadd.xlane.f32.xlu0 %v1306
  %v1308 = vpop.xlane.xlu0 %1307
  %v1309 = vsel %vm214, %v1300, 0.0
  %1310 = vadd.xlane.f32.xlu0 %v1309
  %v1311 = vpop.xlane.xlu0 %1310
  %v1312 = vsel %vm214, %v1302, 0.0
  %1313 = vadd.xlane.f32.xlu0 %v1312
  %v1314 = vpop.xlane.xlu0 %1313
  %v1315 = vrcp.pop %v1305
  %v1316 = vrcp.pop %v1308
  %v1317 = vrcp.pop %v1311
  %v1318 = vrcp.pop %v1314
  %v1319 = vmul.f32 %v1296, %v1315
  %v1320 = vmul.f32 %v1298, %v1316
  %v1321 = vmul.f32 %v1300, %v1317
  %v1322 = vmul.f32 %v1302, %v1318
  %v1323 = vpack.c.bf16 %v1319, %v1319
  %v1324 = vpack.c.bf16 %v1320, %v1320
  %v1325 = vpack.c.bf16 %v1321, %v1321
  %v1326 = vpack.c.bf16 %v1322, %v1322
  %v1329 = vunpack.c.l.b16 %v1323
  %v1330 = vunpack.c.l.b16 %v1324
  %v1331 = vpack.c.b16 %v1330, %v1329
  %1332 = vrot.lane.b32.xlu0 %v1229, 64
  %v1333 = vpop.permute.xlu0 %1332
  %v1336 = vsel %vm214, %v1331, 0
  %1338 = vmatpush.bf16.msra.mxu0 0
  %1339 = vmatpush.bf16.msra.mxu0 0
  %1340 = vmatpush.bf16.msra.mxu0 0
  %1341 = vmatpush.bf16.msra.mxu0 0
  %1342 = vmatpush.bf16.msra.mxu0 0
  %1343 = vmatpush.bf16.msra.mxu0 0
  %1344 = vmatpush.bf16.msra.mxu0 0
  %1345 = vmatpush.bf16.msra.mxu0 %v1333
  %1346 = vmatmul.bf16.gmra.mxu0 %v1336
  %v1347 = vpop.f32.mrf.mxu0
  %v1348 = vadd.f32 0.0, %v1347
  %v1349 = vpop.f32.mrf.mxu0
  %v1350 = vadd.f32 0.0, %v1349
  %1351 = vdwg.mxu0
  %v1354 = vunpack.c.l.b16 %v1325
  %v1355 = vunpack.c.l.b16 %v1326
  %v1356 = vpack.c.b16 %v1355, %v1354
  %1357 = vrot.lane.b32.xlu0 %v1256, 64
  %v1358 = vpop.permute.xlu0 %1357
  %v1361 = vsel %vm214, %v1356, 0
  %1363 = vmatpush.bf16.msra.mxu0 0
  %1364 = vmatpush.bf16.msra.mxu0 0
  %1365 = vmatpush.bf16.msra.mxu0 0
  %1366 = vmatpush.bf16.msra.mxu0 0
  %1367 = vmatpush.bf16.msra.mxu0 0
  %1368 = vmatpush.bf16.msra.mxu0 0
  %1369 = vmatpush.bf16.msra.mxu0 0
  %1370 = vmatpush.bf16.msra.mxu0 %v1358
  %1371 = vmatmul.bf16.gmra.mxu0 %v1361
  %v1372 = vpop.f32.mrf.mxu0
  %v1373 = vadd.f32 0.0, %v1372
  %v1374 = vpop.f32.mrf.mxu0
  %v1375 = vadd.f32 0.0, %v1374
  %1376 = vdwg.mxu0
  %v1377 = vpack.c.bf16 %v1350, %v1348
  %v1378 = vpack.c.bf16 %v1375, %v1373
  %1379 = vrot.lane.b32.xlu0 %v1229, 120
  %v1380 = vpop.permute.xlu0 %1379
  %1381 = vrot.lane.b32.xlu0 %v1229, 88
  %v1382 = vpop.permute.xlu0 %1381
  %v1384 = vsel %vm166, %v1380, 0
  %v1387 = vsel %vm166, %v1382, 0
  %1389 = vmatpush.bf16.xpose.msra.mxu0 0
  %1390 = vmatpush.bf16.xpose.msra.mxu0 0
  %1391 = vmatpush.bf16.xpose.msra.mxu0 0
  %1392 = vmatpush.bf16.xpose.msra.mxu0 0
  %1393 = vmatpush.bf16.xpose.msra.mxu0 0
  %1394 = vmatpush.bf16.xpose.msra.mxu0 0
  %1395 = vmatpush.bf16.xpose.msra.mxu0 0
  %1396 = vmatpush.bf16.xpose.msra.mxu0 %v1387
  %1397 = vmatmul.bf16.gmra.mxu0 %v1384
  %v1398 = vpop.f32.mrf.mxu0
  %v1399 = vadd.f32 0.0, %v1398
  %v1400 = vpop.f32.mrf.mxu0
  %v1401 = vadd.f32 0.0, %v1400
  %1402 = vdwg.mxu0
  %1403 = vrot.lane.b32.xlu0 %v1256, 120
  %v1404 = vpop.permute.xlu0 %1403
  %1405 = vrot.lane.b32.xlu0 %v1256, 88
  %v1406 = vpop.permute.xlu0 %1405
  %v1408 = vsel %vm166, %v1404, 0
  %v1411 = vsel %vm166, %v1406, 0
  %1413 = vmatpush.bf16.xpose.msra.mxu0 0
  %1414 = vmatpush.bf16.xpose.msra.mxu0 0
  %1415 = vmatpush.bf16.xpose.msra.mxu0 0
  %1416 = vmatpush.bf16.xpose.msra.mxu0 0
  %1417 = vmatpush.bf16.xpose.msra.mxu0 0
  %1418 = vmatpush.bf16.xpose.msra.mxu0 0
  %1419 = vmatpush.bf16.xpose.msra.mxu0 0
  %1420 = vmatpush.bf16.xpose.msra.mxu0 %v1411
  %1421 = vmatmul.bf16.gmra.mxu0 %v1408
  %v1422 = vpop.f32.mrf.mxu0
  %v1423 = vadd.f32 0.0, %v1422
  %v1424 = vpop.f32.mrf.mxu0
  %v1425 = vadd.f32 0.0, %v1424
  %1426 = vdwg.mxu0
  %v1427 = vsel %vm214, %v1399, -inf
  %1428 = vmax.xlane.f32.xlu0 %v1427
  %v1429 = vpop.xlane.xlu0 %1428
  %v1430 = vsel %vm214, %v1401, -inf
  %1431 = vmax.xlane.f32.xlu0 %v1430
  %v1432 = vpop.xlane.xlu0 %1431
  %v1433 = vsel %vm214, %v1423, -inf
  %1434 = vmax.xlane.f32.xlu0 %v1433
  %v1435 = vpop.xlane.xlu0 %1434
  %v1436 = vsel %vm214, %v1425, -inf
  %1437 = vmax.xlane.f32.xlu0 %v1436
  %v1438 = vpop.xlane.xlu0 %1437
  %v1439 = vsub.f32 %v1399, %v1429
  %v1440 = vsub.f32 %v1401, %v1432
  %v1441 = vsub.f32 %v1423, %v1435
  %v1442 = vsub.f32 %v1425, %v1438
  %v1443 = vmul.f32 %v1439, 1.442695
  %v1444 = vpow.pop %v1443
  %v1445 = vmul.f32 %v1440, 1.442695
  %v1446 = vpow.pop %v1445
  %v1447 = vmul.f32 %v1441, 1.442695
  %v1448 = vpow.pop %v1447
  %v1449 = vmul.f32 %v1442, 1.442695
  %v1450 = vpow.pop %v1449
  %v1451 = vsel %vm214, %v1444, 0.0
  %1452 = vadd.xlane.f32.xlu0 %v1451
  %v1453 = vpop.xlane.xlu0 %1452
  %v1454 = vsel %vm214, %v1446, 0.0
  %1455 = vadd.xlane.f32.xlu0 %v1454
  %v1456 = vpop.xlane.xlu0 %1455
  %v1457 = vsel %vm214, %v1448, 0.0
  %1458 = vadd.xlane.f32.xlu0 %v1457
  %v1459 = vpop.xlane.xlu0 %1458
  %v1460 = vsel %vm214, %v1450, 0.0
  %1461 = vadd.xlane.f32.xlu0 %v1460
  %v1462 = vpop.xlane.xlu0 %1461
  %v1463 = vrcp.pop %v1453
  %v1464 = vrcp.pop %v1456
  %v1465 = vrcp.pop %v1459
  %v1466 = vrcp.pop %v1462
  %v1467 = vmul.f32 %v1444, %v1463
  %v1468 = vmul.f32 %v1446, %v1464
  %v1469 = vmul.f32 %v1448, %v1465
  %v1470 = vmul.f32 %v1450, %v1466
  %v1471 = vpack.c.bf16 %v1467, %v1467
  %v1472 = vpack.c.bf16 %v1468, %v1468
  %v1473 = vpack.c.bf16 %v1469, %v1469
  %v1474 = vpack.c.bf16 %v1470, %v1470
  %v1477 = vunpack.c.l.b16 %v1471
  %v1478 = vunpack.c.l.b16 %v1472
  %v1479 = vpack.c.b16 %v1478, %v1477
  %1480 = vrot.lane.b32.xlu0 %v1229, 56
  %v1481 = vpop.permute.xlu0 %1480
  %v1484 = vsel %vm214, %v1479, 0
  %1486 = vmatpush.bf16.msra.mxu0 0
  %1487 = vmatpush.bf16.msra.mxu0 0
  %1488 = vmatpush.bf16.msra.mxu0 0
  %1489 = vmatpush.bf16.msra.mxu0 0
  %1490 = vmatpush.bf16.msra.mxu0 0
  %1491 = vmatpush.bf16.msra.mxu0 0
  %1492 = vmatpush.bf16.msra.mxu0 0
  %1493 = vmatpush.bf16.msra.mxu0 %v1481
  %1494 = vmatmul.bf16.gmra.mxu0 %v1484
  %v1495 = vpop.f32.mrf.mxu0
  %v1496 = vadd.f32 0.0, %v1495
  %v1497 = vpop.f32.mrf.mxu0
  %v1498 = vadd.f32 0.0, %v1497
  %1499 = vdwg.mxu0
  %v1502 = vunpack.c.l.b16 %v1473
  %v1503 = vunpack.c.l.b16 %v1474
  %v1504 = vpack.c.b16 %v1503, %v1502
  %1505 = vrot.lane.b32.xlu0 %v1256, 56
  %v1506 = vpop.permute.xlu0 %1505
  %v1509 = vsel %vm214, %v1504, 0
  %1511 = vmatpush.bf16.msra.mxu0 0
  %1512 = vmatpush.bf16.msra.mxu0 0
  %1513 = vmatpush.bf16.msra.mxu0 0
  %1514 = vmatpush.bf16.msra.mxu0 0
  %1515 = vmatpush.bf16.msra.mxu0 0
  %1516 = vmatpush.bf16.msra.mxu0 0
  %1517 = vmatpush.bf16.msra.mxu0 0
  %1518 = vmatpush.bf16.msra.mxu0 %v1506
  %1519 = vmatmul.bf16.gmra.mxu0 %v1509
  %v1520 = vpop.f32.mrf.mxu0
  %v1521 = vadd.f32 0.0, %v1520
  %v1522 = vpop.f32.mrf.mxu0
  %v1523 = vadd.f32 0.0, %v1522
  %1524 = vdwg.mxu0
  %v1525 = vpack.c.bf16 %v1498, %v1496
  %v1526 = vpack.c.bf16 %v1523, %v1521
  %v1528 = vsel %vm166, %v1525, 0
  %v1531 = vsel %vm166, %v1526, 0
  %v1534 = vsel %vm469, %v1218, 0
  %1536 = vmatpush.bf16.msra.mxu0 0
  %1537 = vmatpush.bf16.msra.mxu0 0
  %1538 = vmatpush.bf16.msra.mxu0 0
  %1539 = vmatpush.bf16.msra.mxu0 0
  %1540 = vmatpush.bf16.msra.mxu0 0
  %1541 = vmatpush.bf16.msra.mxu0 0
  %1542 = vmatpush.bf16.msra.mxu0 0
  %1543 = vmatpush.bf16.msra.mxu0 %v1534
  %1544 = vmatmul.bf16.gmra.mxu0 %v1528
  %v1545 = vpop.f32.mrf.mxu0
  %v1546 = vadd.f32 0.0, %v1545
  %v1547 = vpop.f32.mrf.mxu0
  %v1548 = vadd.f32 0.0, %v1547
  %1549 = vmatmul.bf16.gmra.mxu0 %v1531
  %v1550 = vpop.f32.mrf.mxu0
  %v1551 = vadd.f32 0.0, %v1550
  %v1552 = vpop.f32.mrf.mxu0
  %v1553 = vadd.f32 0.0, %v1552
  %1554 = vdwg.mxu0
  %v1556 = vsel %vm166, %v1377, 0
  %v1559 = vsel %vm166, %v1378, 0
  %v1562 = vsel %vm469, %v1217, 0
  %1564 = vmatpush.bf16.msra.mxu0 0
  %1565 = vmatpush.bf16.msra.mxu0 0
  %1566 = vmatpush.bf16.msra.mxu0 0
  %1567 = vmatpush.bf16.msra.mxu0 0
  %1568 = vmatpush.bf16.msra.mxu0 0
  %1569 = vmatpush.bf16.msra.mxu0 0
  %1570 = vmatpush.bf16.msra.mxu0 0
  %1571 = vmatpush.bf16.msra.mxu0 %v1562
  %1572 = vmatmul.bf16.gmra.mxu0 %v1556
  %v1573 = vpop.f32.mrf.mxu0
  %v1574 = vadd.f32 %v1546, %v1573
  %v1575 = vpop.f32.mrf.mxu0
  %v1576 = vadd.f32 %v1548, %v1575
  %1577 = vmatmul.bf16.gmra.mxu0 %v1559
  %v1578 = vpop.f32.mrf.mxu0
  %v1579 = vadd.f32 %v1551, %v1578
  %v1580 = vpop.f32.mrf.mxu0
  %v1581 = vadd.f32 %v1553, %v1580
  %1582 = vdwg.mxu0
  %1583 = vrot.lane.b32.xlu0 %v1229, 112
  %v1584 = vpop.permute.xlu0 %1583
  %1585 = vrot.lane.b32.xlu0 %v1229, 80
  %v1586 = vpop.permute.xlu0 %1585
  %v1588 = vsel %vm166, %v1584, 0
  %v1591 = vsel %vm166, %v1586, 0
  %1593 = vmatpush.bf16.xpose.msra.mxu0 0
  %1594 = vmatpush.bf16.xpose.msra.mxu0 0
  %1595 = vmatpush.bf16.xpose.msra.mxu0 0
  %1596 = vmatpush.bf16.xpose.msra.mxu0 0
  %1597 = vmatpush.bf16.xpose.msra.mxu0 0
  %1598 = vmatpush.bf16.xpose.msra.mxu0 0
  %1599 = vmatpush.bf16.xpose.msra.mxu0 0
  %1600 = vmatpush.bf16.xpose.msra.mxu0 %v1591
  %1601 = vmatmul.bf16.gmra.mxu0 %v1588
  %v1602 = vpop.f32.mrf.mxu0
  %v1603 = vadd.f32 0.0, %v1602
  %v1604 = vpop.f32.mrf.mxu0
  %v1605 = vadd.f32 0.0, %v1604
  %1606 = vdwg.mxu0
  %1607 = vrot.lane.b32.xlu0 %v1256, 112
  %v1608 = vpop.permute.xlu0 %1607
  %1609 = vrot.lane.b32.xlu0 %v1256, 80
  %v1610 = vpop.permute.xlu0 %1609
  %v1612 = vsel %vm166, %v1608, 0
  %v1615 = vsel %vm166, %v1610, 0
  %1617 = vmatpush.bf16.xpose.msra.mxu0 0
  %1618 = vmatpush.bf16.xpose.msra.mxu0 0
  %1619 = vmatpush.bf16.xpose.msra.mxu0 0
  %1620 = vmatpush.bf16.xpose.msra.mxu0 0
  %1621 = vmatpush.bf16.xpose.msra.mxu0 0
  %1622 = vmatpush.bf16.xpose.msra.mxu0 0
  %1623 = vmatpush.bf16.xpose.msra.mxu0 0
  %1624 = vmatpush.bf16.xpose.msra.mxu0 %v1615
  %1625 = vmatmul.bf16.gmra.mxu0 %v1612
  %v1626 = vpop.f32.mrf.mxu0
  %v1627 = vadd.f32 0.0, %v1626
  %v1628 = vpop.f32.mrf.mxu0
  %v1629 = vadd.f32 0.0, %v1628
  %1630 = vdwg.mxu0
  %v1631 = vsel %vm214, %v1603, -inf
  %1632 = vmax.xlane.f32.xlu0 %v1631
  %v1633 = vpop.xlane.xlu0 %1632
  %v1634 = vsel %vm214, %v1605, -inf
  %1635 = vmax.xlane.f32.xlu0 %v1634
  %v1636 = vpop.xlane.xlu0 %1635
  %v1637 = vsel %vm214, %v1627, -inf
  %1638 = vmax.xlane.f32.xlu0 %v1637
  %v1639 = vpop.xlane.xlu0 %1638
  %v1640 = vsel %vm214, %v1629, -inf
  %1641 = vmax.xlane.f32.xlu0 %v1640
  %v1642 = vpop.xlane.xlu0 %1641
  %v1643 = vsub.f32 %v1603, %v1633
  %v1644 = vsub.f32 %v1605, %v1636
  %v1645 = vsub.f32 %v1627, %v1639
  %v1646 = vsub.f32 %v1629, %v1642
  %v1647 = vmul.f32 %v1643, 1.442695
  %v1648 = vpow.pop %v1647
  %v1649 = vmul.f32 %v1644, 1.442695
  %v1650 = vpow.pop %v1649
  %v1651 = vmul.f32 %v1645, 1.442695
  %v1652 = vpow.pop %v1651
  %v1653 = vmul.f32 %v1646, 1.442695
  %v1654 = vpow.pop %v1653
  %v1655 = vsel %vm214, %v1648, 0.0
  %1656 = vadd.xlane.f32.xlu0 %v1655
  %v1657 = vpop.xlane.xlu0 %1656
  %v1658 = vsel %vm214, %v1650, 0.0
  %1659 = vadd.xlane.f32.xlu0 %v1658
  %v1660 = vpop.xlane.xlu0 %1659
  %v1661 = vsel %vm214, %v1652, 0.0
  %1662 = vadd.xlane.f32.xlu0 %v1661
  %v1663 = vpop.xlane.xlu0 %1662
  %v1664 = vsel %vm214, %v1654, 0.0
  %1665 = vadd.xlane.f32.xlu0 %v1664
  %v1666 = vpop.xlane.xlu0 %1665
  %v1667 = vrcp.pop %v1657
  %v1668 = vrcp.pop %v1660
  %v1669 = vrcp.pop %v1663
  %v1670 = vrcp.pop %v1666
  %v1671 = vmul.f32 %v1648, %v1667
  %v1672 = vmul.f32 %v1650, %v1668
  %v1673 = vmul.f32 %v1652, %v1669
  %v1674 = vmul.f32 %v1654, %v1670
  %v1675 = vpack.c.bf16 %v1671, %v1671
  %v1676 = vpack.c.bf16 %v1672, %v1672
  %v1677 = vpack.c.bf16 %v1673, %v1673
  %v1678 = vpack.c.bf16 %v1674, %v1674
  %v1681 = vunpack.c.l.b16 %v1675
  %v1682 = vunpack.c.l.b16 %v1676
  %v1683 = vpack.c.b16 %v1682, %v1681
  %1684 = vrot.lane.b32.xlu0 %v1229, 48
  %v1685 = vpop.permute.xlu0 %1684
  %v1688 = vsel %vm214, %v1683, 0
  %1690 = vmatpush.bf16.msra.mxu0 0
  %1691 = vmatpush.bf16.msra.mxu0 0
  %1692 = vmatpush.bf16.msra.mxu0 0
  %1693 = vmatpush.bf16.msra.mxu0 0
  %1694 = vmatpush.bf16.msra.mxu0 0
  %1695 = vmatpush.bf16.msra.mxu0 0
  %1696 = vmatpush.bf16.msra.mxu0 0
  %1697 = vmatpush.bf16.msra.mxu0 %v1685
  %1698 = vmatmul.bf16.gmra.mxu0 %v1688
  %v1699 = vpop.f32.mrf.mxu0
  %v1700 = vadd.f32 0.0, %v1699
  %v1701 = vpop.f32.mrf.mxu0
  %v1702 = vadd.f32 0.0, %v1701
  %1703 = vdwg.mxu0
  %v1706 = vunpack.c.l.b16 %v1677
  %v1707 = vunpack.c.l.b16 %v1678
  %v1708 = vpack.c.b16 %v1707, %v1706
  %1709 = vrot.lane.b32.xlu0 %v1256, 48
  %v1710 = vpop.permute.xlu0 %1709
  %v1713 = vsel %vm214, %v1708, 0
  %1715 = vmatpush.bf16.msra.mxu0 0
  %1716 = vmatpush.bf16.msra.mxu0 0
  %1717 = vmatpush.bf16.msra.mxu0 0
  %1718 = vmatpush.bf16.msra.mxu0 0
  %1719 = vmatpush.bf16.msra.mxu0 0
  %1720 = vmatpush.bf16.msra.mxu0 0
  %1721 = vmatpush.bf16.msra.mxu0 0
  %1722 = vmatpush.bf16.msra.mxu0 %v1710
  %1723 = vmatmul.bf16.gmra.mxu0 %v1713
  %v1724 = vpop.f32.mrf.mxu0
  %v1725 = vadd.f32 0.0, %v1724
  %v1726 = vpop.f32.mrf.mxu0
  %v1727 = vadd.f32 0.0, %v1726
  %1728 = vdwg.mxu0
  %v1729 = vpack.c.bf16 %v1702, %v1700
  %v1730 = vpack.c.bf16 %v1727, %v1725
  %v1732 = vsel %vm166, %v1729, 0
  %v1735 = vsel %vm166, %v1730, 0
  %v1738 = vsel %vm469, %v1219, 0
  %1740 = vmatpush.bf16.msra.mxu0 0
  %1741 = vmatpush.bf16.msra.mxu0 0
  %1742 = vmatpush.bf16.msra.mxu0 0
  %1743 = vmatpush.bf16.msra.mxu0 0
  %1744 = vmatpush.bf16.msra.mxu0 0
  %1745 = vmatpush.bf16.msra.mxu0 0
  %1746 = vmatpush.bf16.msra.mxu0 0
  %1747 = vmatpush.bf16.msra.mxu0 %v1738
  %1748 = vmatmul.bf16.gmra.mxu0 %v1732
  %v1749 = vpop.f32.mrf.mxu0
  %v1750 = vadd.f32 0.0, %v1749
  %v1751 = vpop.f32.mrf.mxu0
  %v1752 = vadd.f32 0.0, %v1751
  %1753 = vmatmul.bf16.gmra.mxu0 %v1735
  %v1754 = vpop.f32.mrf.mxu0
  %v1755 = vadd.f32 0.0, %v1754
  %v1756 = vpop.f32.mrf.mxu0
  %v1757 = vadd.f32 0.0, %v1756
  %1758 = vdwg.mxu0
  %v1759 = vadd.f32 %v1574, %v1750
  %v1760 = vadd.f32 %v1576, %v1752
  %v1761 = vadd.f32 %v1579, %v1755
  %v1762 = vadd.f32 %v1581, %v1757
  %1763 = vrot.lane.b32.xlu0 %v1229, 104
  %v1764 = vpop.permute.xlu0 %1763
  %1765 = vrot.lane.b32.xlu0 %v1229, 72
  %v1766 = vpop.permute.xlu0 %1765
  %v1768 = vsel %vm166, %v1764, 0
  %v1771 = vsel %vm166, %v1766, 0
  %1773 = vmatpush.bf16.xpose.msra.mxu0 0
  %1774 = vmatpush.bf16.xpose.msra.mxu0 0
  %1775 = vmatpush.bf16.xpose.msra.mxu0 0
  %1776 = vmatpush.bf16.xpose.msra.mxu0 0
  %1777 = vmatpush.bf16.xpose.msra.mxu0 0
  %1778 = vmatpush.bf16.xpose.msra.mxu0 0
  %1779 = vmatpush.bf16.xpose.msra.mxu0 0
  %1780 = vmatpush.bf16.xpose.msra.mxu0 %v1771
  %1781 = vmatmul.bf16.gmra.mxu0 %v1768
  %v1782 = vpop.f32.mrf.mxu0
  %v1783 = vadd.f32 0.0, %v1782
  %v1784 = vpop.f32.mrf.mxu0
  %v1785 = vadd.f32 0.0, %v1784
  %1786 = vdwg.mxu0
  %1787 = vrot.lane.b32.xlu0 %v1256, 104
  %v1788 = vpop.permute.xlu0 %1787
  %1789 = vrot.lane.b32.xlu0 %v1256, 72
  %v1790 = vpop.permute.xlu0 %1789
  %v1792 = vsel %vm166, %v1788, 0
  %v1795 = vsel %vm166, %v1790, 0
  %1797 = vmatpush.bf16.xpose.msra.mxu0 0
  %1798 = vmatpush.bf16.xpose.msra.mxu0 0
  %1799 = vmatpush.bf16.xpose.msra.mxu0 0
  %1800 = vmatpush.bf16.xpose.msra.mxu0 0
  %1801 = vmatpush.bf16.xpose.msra.mxu0 0
  %1802 = vmatpush.bf16.xpose.msra.mxu0 0
  %1803 = vmatpush.bf16.xpose.msra.mxu0 0
  %1804 = vmatpush.bf16.xpose.msra.mxu0 %v1795
  %1805 = vmatmul.bf16.gmra.mxu0 %v1792
  %v1806 = vpop.f32.mrf.mxu0
  %v1807 = vadd.f32 0.0, %v1806
  %v1808 = vpop.f32.mrf.mxu0
  %v1809 = vadd.f32 0.0, %v1808
  %1810 = vdwg.mxu0
  %v1811 = vsel %vm214, %v1783, -inf
  %1812 = vmax.xlane.f32.xlu0 %v1811
  %v1813 = vpop.xlane.xlu0 %1812
  %v1814 = vsel %vm214, %v1785, -inf
  %1815 = vmax.xlane.f32.xlu0 %v1814
  %v1816 = vpop.xlane.xlu0 %1815
  %v1817 = vsel %vm214, %v1807, -inf
  %1818 = vmax.xlane.f32.xlu0 %v1817
  %v1819 = vpop.xlane.xlu0 %1818
  %v1820 = vsel %vm214, %v1809, -inf
  %1821 = vmax.xlane.f32.xlu0 %v1820
  %v1822 = vpop.xlane.xlu0 %1821
  %v1823 = vsub.f32 %v1783, %v1813
  %v1824 = vsub.f32 %v1785, %v1816
  %v1825 = vsub.f32 %v1807, %v1819
  %v1826 = vsub.f32 %v1809, %v1822
  %v1827 = vmul.f32 %v1823, 1.442695
  %v1828 = vpow.pop %v1827
  %v1829 = vmul.f32 %v1824, 1.442695
  %v1830 = vpow.pop %v1829
  %v1831 = vmul.f32 %v1825, 1.442695
  %v1832 = vpow.pop %v1831
  %v1833 = vmul.f32 %v1826, 1.442695
  %v1834 = vpow.pop %v1833
  %v1835 = vsel %vm214, %v1828, 0.0
  %1836 = vadd.xlane.f32.xlu0 %v1835
  %v1837 = vpop.xlane.xlu0 %1836
  %v1838 = vsel %vm214, %v1830, 0.0
  %1839 = vadd.xlane.f32.xlu0 %v1838
  %v1840 = vpop.xlane.xlu0 %1839
  %v1841 = vsel %vm214, %v1832, 0.0
  %1842 = vadd.xlane.f32.xlu0 %v1841
  %v1843 = vpop.xlane.xlu0 %1842
  %v1844 = vsel %vm214, %v1834, 0.0
  %1845 = vadd.xlane.f32.xlu0 %v1844
  %v1846 = vpop.xlane.xlu0 %1845
  %v1847 = vrcp.pop %v1837
  %v1848 = vrcp.pop %v1840
  %v1849 = vrcp.pop %v1843
  %v1850 = vrcp.pop %v1846
  %v1851 = vmul.f32 %v1828, %v1847
  %v1852 = vmul.f32 %v1830, %v1848
  %v1853 = vmul.f32 %v1832, %v1849
  %v1854 = vmul.f32 %v1834, %v1850
  %v1855 = vpack.c.bf16 %v1851, %v1851
  %v1856 = vpack.c.bf16 %v1852, %v1852
  %v1857 = vpack.c.bf16 %v1853, %v1853
  %v1858 = vpack.c.bf16 %v1854, %v1854
  %v1861 = vunpack.c.l.b16 %v1855
  %v1862 = vunpack.c.l.b16 %v1856
  %v1863 = vpack.c.b16 %v1862, %v1861
  %1864 = vrot.lane.b32.xlu0 %v1229, 40
  %v1865 = vpop.permute.xlu0 %1864
  %v1868 = vsel %vm214, %v1863, 0
  %1870 = vmatpush.bf16.msra.mxu0 0
  %1871 = vmatpush.bf16.msra.mxu0 0
  %1872 = vmatpush.bf16.msra.mxu0 0
  %1873 = vmatpush.bf16.msra.mxu0 0
  %1874 = vmatpush.bf16.msra.mxu0 0
  %1875 = vmatpush.bf16.msra.mxu0 0
  %1876 = vmatpush.bf16.msra.mxu0 0
  %1877 = vmatpush.bf16.msra.mxu0 %v1865
  %1878 = vmatmul.bf16.gmra.mxu0 %v1868
  %v1879 = vpop.f32.mrf.mxu0
  %v1880 = vadd.f32 0.0, %v1879
  %v1881 = vpop.f32.mrf.mxu0
  %v1882 = vadd.f32 0.0, %v1881
  %1883 = vdwg.mxu0
  %v1886 = vunpack.c.l.b16 %v1857
  %v1887 = vunpack.c.l.b16 %v1858
  %v1888 = vpack.c.b16 %v1887, %v1886
  %1889 = vrot.lane.b32.xlu0 %v1256, 40
  %v1890 = vpop.permute.xlu0 %1889
  %v1893 = vsel %vm214, %v1888, 0
  %1895 = vmatpush.bf16.msra.mxu0 0
  %1896 = vmatpush.bf16.msra.mxu0 0
  %1897 = vmatpush.bf16.msra.mxu0 0
  %1898 = vmatpush.bf16.msra.mxu0 0
  %1899 = vmatpush.bf16.msra.mxu0 0
  %1900 = vmatpush.bf16.msra.mxu0 0
  %1901 = vmatpush.bf16.msra.mxu0 0
  %1902 = vmatpush.bf16.msra.mxu0 %v1890
  %1903 = vmatmul.bf16.gmra.mxu0 %v1893
  %v1904 = vpop.f32.mrf.mxu0
  %v1905 = vadd.f32 0.0, %v1904
  %v1906 = vpop.f32.mrf.mxu0
  %v1907 = vadd.f32 0.0, %v1906
  %1908 = vdwg.mxu0
  %v1909 = vpack.c.bf16 %v1882, %v1880
  %v1910 = vpack.c.bf16 %v1907, %v1905
  %v1912 = vsel %vm166, %v1909, 0
  %v1915 = vsel %vm166, %v1910, 0
  %v1918 = vsel %vm469, %v1220, 0
  %1920 = vmatpush.bf16.msra.mxu0 0
  %1921 = vmatpush.bf16.msra.mxu0 0
  %1922 = vmatpush.bf16.msra.mxu0 0
  %1923 = vmatpush.bf16.msra.mxu0 0
  %1924 = vmatpush.bf16.msra.mxu0 0
  %1925 = vmatpush.bf16.msra.mxu0 0
  %1926 = vmatpush.bf16.msra.mxu0 0
  %1927 = vmatpush.bf16.msra.mxu0 %v1918
  %1928 = vmatmul.bf16.gmra.mxu0 %v1912
  %v1929 = vpop.f32.mrf.mxu0
  %v1930 = vadd.f32 0.0, %v1929
  %v1931 = vpop.f32.mrf.mxu0
  %v1932 = vadd.f32 0.0, %v1931
  %1933 = vmatmul.bf16.gmra.mxu0 %v1915
  %v1934 = vpop.f32.mrf.mxu0
  %v1935 = vadd.f32 0.0, %v1934
  %v1936 = vpop.f32.mrf.mxu0
  %v1937 = vadd.f32 0.0, %v1936
  %1938 = vdwg.mxu0
  %v1939 = vadd.f32 %v1759, %v1930
  %v1940 = vadd.f32 %v1760, %v1932
  %v1941 = vadd.f32 %v1761, %v1935
  %v1942 = vadd.f32 %v1762, %v1937
  %s1943 = scalar_lea.vmem %s7, 1
  %v1944 = vld [vmem:[%s1943] sm:$0x1]
  %v1946 = vperm.slane %v1944, 0
  %v1948 = vadd.f32 %v1939, %v1946
  %v1949 = vadd.f32 %v1940, %v1946
  %v1950 = vadd.f32 %v1941, %v1946
  %v1951 = vadd.f32 %v1942, %v1946
  %s1952 = scalar_lea.vmem %s12, 1
  %v1953 = vld [vmem:[%s1952] sm:$0x1]
  %s1954 = scalar_lea.vmem %s13, 1
  %v1955 = vld [vmem:[%s1954] sm:$0x1]
  %v1956 = vadd.f32 %v1163, %v1948
  %v1957 = vadd.f32 %v1164, %v1949
  %v1958 = vadd.f32 %v1165, %v1950
  %v1959 = vadd.f32 %v1166, %v1951
  %v1960 = vsel %vm125, %v1956, 0.0
  %v1961 = vsel %vm125, %v1957, 0.0
  %v1962 = vadd.f32 %v1960, %v1961
  %v1963 = vsel %vm125, %v1958, 0.0
  %v1964 = vadd.f32 %v1962, %v1963
  %v1965 = vsel %vm125, %v1959, 0.0
  %v1966 = vadd.f32 %v1964, %v1965
  %v1967 = vrot.slane %v1966, 4
  %v1968 = vadd.f32 %v1966, %v1967
  %v1969 = vrot.slane %v1968, 2
  %v1970 = vadd.f32 %v1968, %v1969
  %v1971 = vrot.slane %v1970, 1
  %v1972 = vadd.f32 %v1970, %v1971
  %v1973 = vmul.f32 %v1972, 0.03125
  %v1974 = vsub.f32 %v1956, %v1973
  %v1975 = vsub.f32 %v1957, %v1973
  %v1976 = vsub.f32 %v1958, %v1973
  %v1977 = vsub.f32 %v1959, %v1973
  %v1978 = vmul.f32 %v1974, %v1974
  %v1979 = vmul.f32 %v1975, %v1975
  %v1980 = vmul.f32 %v1976, %v1976
  %v1981 = vmul.f32 %v1977, %v1977
  %v1982 = vsel %vm125, %v1978, 0.0
  %v1983 = vsel %vm125, %v1979, 0.0
  %v1984 = vadd.f32 %v1982, %v1983
  %v1985 = vsel %vm125, %v1980, 0.0
  %v1986 = vadd.f32 %v1984, %v1985
  %v1987 = vsel %vm125, %v1981, 0.0
  %v1988 = vadd.f32 %v1986, %v1987
  %v1989 = vrot.slane %v1988, 4
  %v1990 = vadd.f32 %v1988, %v1989
  %v1991 = vrot.slane %v1990, 2
  %v1992 = vadd.f32 %v1990, %v1991
  %v1993 = vrot.slane %v1992, 1
  %v1994 = vadd.f32 %v1992, %v1993
  %v1995 = vmul.f32 %v1994, 0.03125
  %v1996 = vadd.f32 %v1995, 1e-05
  %v1997 = vrsqrt.pop %v1996
  %v1998 = vmul.f32 %v1997, %v1996
  %v1999 = vmul.f32 %v1998, %v1997
  %v2000 = vmul.f32 0.5, %v1999
  %v2001 = vsub.f32 1.5, %v2000
  %v2002 = vmul.f32 %v1997, %v2001
  %vm2003 = vweird.f32 %v1996
  %vm2004 = vweird.f32 %v1997
  %vm2005 = vmor %vm2003, %vm2004
  %v2006 = vsel %vm2005, %v1997, %v2002
  %v2007 = vmul.f32 %v2006, %v1953
  %v2008 = vperm.slane %v2007, 0
  %v2009 = vmul.f32 %v1974, %v2008
  %v2010 = vmul.f32 %v1975, %v2008
  %v2011 = vmul.f32 %v1976, %v2008
  %v2012 = vmul.f32 %v1977, %v2008
  %v2014 = vperm.slane %v1955, 0
  %v2016 = vadd.f32 %v2009, %v2014
  %v2017 = vadd.f32 %v2010, %v2014
  %v2018 = vadd.f32 %v2011, %v2014
  %v2019 = vadd.f32 %v2012, %v2014
  %s2020 = scalar_lea.vmem %s8, 16
  %v2021 = vld [vmem:[%s2020] sm:$0xf]
  %v2022 = vld [vmem:[%s2020 + $0x4] sm:$0xf]
  %v2023 = vld [vmem:[%s2020 + $0x8] sm:$0xf]
  %v2024 = vld [vmem:[%s2020 + $0xc] sm:$0xf]
  %v2025 = vpack.c.bf16 %v2017, %v2016
  %v2026 = vpack.c.bf16 %v2019, %v2018
  %s2027 = scalar_lea.vmem %s9, 1
  %v2028 = vld [vmem:[%s2027] sm:$0x1]
  %v2030 = vperm.slane %v2028, 0
  %v2036 = vunpack.c.l.b16 %v2021
  %v2037 = vunpack.c.l.b16 %v2022
  %v2038 = vunpack.c.l.b16 %v2023
  %v2039 = vunpack.c.l.b16 %v2024
  %v2040 = vpack.c.b16 %v2037, %v2036
  %v2041 = vpack.c.b16 %v2039, %v2038
  %v2045 = vsel %vm125, %v2025, 0
  %v2048 = vsel %vm125, %v2026, 0
  %2050 = vmatpush.bf16.msra.mxu0 0
  %2051 = vmatpush.bf16.msra.mxu0 0
  %2052 = vmatpush.bf16.msra.mxu0 0
  %2053 = vmatpush.bf16.msra.mxu0 0
  %2054 = vmatpush.bf16.msra.mxu0 0
  %2055 = vmatpush.bf16.msra.mxu0 0
  %2056 = vmatpush.bf16.msra.mxu0 %v2041
  %2057 = vmatpush.bf16.msra.mxu0 %v2040
  %2058 = vmatmul.bf16.gmra.mxu0 %v2045
  %v2059 = vpop.f32.mrf.mxu0
  %v2060 = vadd.f32 %v2030, %v2059
  %v2061 = vpop.f32.mrf.mxu0
  %v2062 = vadd.f32 %v2030, %v2061
  %2063 = vmatmul.bf16.gmra.mxu0 %v2048
  %v2064 = vpop.f32.mrf.mxu0
  %v2065 = vadd.f32 %v2030, %v2064
  %v2066 = vpop.f32.mrf.mxu0
  %v2067 = vadd.f32 %v2030, %v2066
  %2068 = vdwg.mxu0
  %v2069 = vmul.f32 %v2060, 0.5
  %v2070 = vmul.f32 %v2062, 0.5
  %v2071 = vmul.f32 %v2065, 0.5
  %v2072 = vmul.f32 %v2067, 0.5
  %v2073 = vmul.f32 %v2060, 0.044715
  %v2074 = vmul.f32 %v2062, 0.044715
  %v2075 = vmul.f32 %v2065, 0.044715
  %v2076 = vmul.f32 %v2067, 0.044715
  %v2077 = vmul.f32 %v2073, %v2060
  %v2078 = vmul.f32 %v2074, %v2062
  %v2079 = vmul.f32 %v2075, %v2065
  %v2080 = vmul.f32 %v2076, %v2067
  %v2081 = vmul.f32 %v2077, %v2060
  %v2082 = vmul.f32 %v2078, %v2062
  %v2083 = vmul.f32 %v2079, %v2065
  %v2084 = vmul.f32 %v2080, %v2067
  %v2085 = vadd.f32 %v2060, %v2081
  %v2086 = vadd.f32 %v2062, %v2082
  %v2087 = vadd.f32 %v2065, %v2083
  %v2088 = vadd.f32 %v2067, %v2084
  %v2089 = vmul.f32 %v2085, 0.7978846
  %v2090 = vmul.f32 %v2086, 0.7978846
  %v2091 = vmul.f32 %v2087, 0.7978846
  %v2092 = vmul.f32 %v2088, 0.7978846
  %v2093 = vtanh.pop %v2089
  %v2094 = vtanh.pop %v2090
  %v2095 = vtanh.pop %v2091
  %v2096 = vtanh.pop %v2092
  %v2097 = vadd.f32 %v2093, 1.0
  %v2098 = vadd.f32 %v2094, 1.0
  %v2099 = vadd.f32 %v2095, 1.0
  %v2100 = vadd.f32 %v2096, 1.0
  %v2101 = vmul.f32 %v2069, %v2097
  %v2102 = vmul.f32 %v2070, %v2098
  %v2103 = vmul.f32 %v2071, %v2099
  %v2104 = vmul.f32 %v2072, %v2100
  %s2105 = scalar_lea.vmem %s10, 32
  %v2106 = vld [vmem:[%s2105] sm:$0xf]
  %v2107 = vld [vmem:[%s2105 + $0x4] sm:$0xf]
  %v2108 = vld [vmem:[%s2105 + $0x8] sm:$0xf]
  %v2109 = vld [vmem:[%s2105 + $0xc] sm:$0xf]
  %v2110 = vld [vmem:[%s2105 + $0x10] sm:$0xf]
  %v2111 = vld [vmem:[%s2105 + $0x14] sm:$0xf]
  %v2112 = vld [vmem:[%s2105 + $0x18] sm:$0xf]
  %v2113 = vld [vmem:[%s2105 + $0x1c] sm:$0xf]
  %v2114 = vpack.c.bf16 %v2102, %v2101
  %v2115 = vpack.c.bf16 %v2104, %v2103
  %s2116 = scalar_lea.vmem %s11, 1
  %v2117 = vld [vmem:[%s2116] sm:$0x1]
  %v2119 = vperm.slane %v2117, 0
  %v2129 = vunpack.c.l.b16 %v2106
  %v2130 = vunpack.c.l.b16 %v2107
  %v2131 = vunpack.c.l.b16 %v2108
  %v2132 = vunpack.c.l.b16 %v2109
  %v2133 = vunpack.c.l.b16 %v2110
  %v2134 = vunpack.c.l.b16 %v2111
  %v2135 = vunpack.c.l.b16 %v2112
  %v2136 = vunpack.c.l.b16 %v2113
  %v2137 = vpack.c.b16 %v2130, %v2129
  %v2138 = vpack.c.b16 %v2132, %v2131
  %v2139 = vpack.c.b16 %v2134, %v2133
  %v2140 = vpack.c.b16 %v2136, %v2135
  %v2146 = vsel %vm1075, %v2114, 0
  %v2149 = vsel %vm1075, %v2115, 0
  %2151 = vmatpush.bf16.msra.mxu0 0
  %2152 = vmatpush.bf16.msra.mxu0 0
  %2153 = vmatpush.bf16.msra.mxu0 0
  %2154 = vmatpush.bf16.msra.mxu0 0
  %2155 = vmatpush.bf16.msra.mxu0 %v2140
  %2156 = vmatpush.bf16.msra.mxu0 %v2139
  %2157 = vmatpush.bf16.msra.mxu0 %v2138
  %2158 = vmatpush.bf16.msra.mxu0 %v2137
  %2159 = vmatmul.bf16.gmra.mxu0 %v2146
  %v2160 = vpop.f32.mrf.mxu0
  %v2161 = vadd.f32 %v2119, %v2160
  %v2162 = vpop.f32.mrf.mxu0
  %v2163 = vadd.f32 %v2119, %v2162
  %2164 = vmatmul.bf16.gmra.mxu0 %v2149
  %v2165 = vpop.f32.mrf.mxu0
  %v2166 = vadd.f32 %v2119, %v2165
  %v2167 = vpop.f32.mrf.mxu0
  %v2168 = vadd.f32 %v2119, %v2167
  %2169 = vdwg.mxu0
  %s2170 = scalar_lea.vmem %s14, 1
  %v2171 = vld [vmem:[%s2170] sm:$0x1]
  %s2172 = scalar_lea.vmem %s15, 1
  %v2173 = vld [vmem:[%s2172] sm:$0x1]
  %v2174 = vadd.f32 %v2016, %v2161
  %v2175 = vadd.f32 %v2017, %v2163
  %v2176 = vadd.f32 %v2018, %v2166
  %v2177 = vadd.f32 %v2019, %v2168
  %v2178 = vsel %vm125, %v2174, 0.0
  %v2179 = vsel %vm125, %v2175, 0.0
  %v2180 = vadd.f32 %v2178, %v2179
  %v2181 = vsel %vm125, %v2176, 0.0
  %v2182 = vadd.f32 %v2180, %v2181
  %v2183 = vsel %vm125, %v2177, 0.0
  %v2184 = vadd.f32 %v2182, %v2183
  %v2185 = vrot.slane %v2184, 4
  %v2186 = vadd.f32 %v2184, %v2185
  %v2187 = vrot.slane %v2186, 2
  %v2188 = vadd.f32 %v2186, %v2187
  %v2189 = vrot.slane %v2188, 1
  %v2190 = vadd.f32 %v2188, %v2189
  %v2191 = vmul.f32 %v2190, 0.03125
  %v2192 = vsub.f32 %v2174, %v2191
  %v2193 = vsub.f32 %v2175, %v2191
  %v2194 = vsub.f32 %v2176, %v2191
  %v2195 = vsub.f32 %v2177, %v2191
  %v2196 = vmul.f32 %v2192, %v2192
  %v2197 = vmul.f32 %v2193, %v2193
  %v2198 = vmul.f32 %v2194, %v2194
  %v2199 = vmul.f32 %v2195, %v2195
  %v2200 = vsel %vm125, %v2196, 0.0
  %v2201 = vsel %vm125, %v2197, 0.0
  %v2202 = vadd.f32 %v2200, %v2201
  %v2203 = vsel %vm125, %v2198, 0.0
  %v2204 = vadd.f32 %v2202, %v2203
  %v2205 = vsel %vm125, %v2199, 0.0
  %v2206 = vadd.f32 %v2204, %v2205
  %v2207 = vrot.slane %v2206, 4
  %v2208 = vadd.f32 %v2206, %v2207
  %v2209 = vrot.slane %v2208, 2
  %v2210 = vadd.f32 %v2208, %v2209
  %v2211 = vrot.slane %v2210, 1
  %v2212 = vadd.f32 %v2210, %v2211
  %v2213 = vmul.f32 %v2212, 0.03125
  %v2214 = vadd.f32 %v2213, 1e-05
  %v2215 = vrsqrt.pop %v2214
  %v2216 = vmul.f32 %v2215, %v2214
  %v2217 = vmul.f32 %v2216, %v2215
  %v2218 = vmul.f32 0.5, %v2217
  %v2219 = vsub.f32 1.5, %v2218
  %v2220 = vmul.f32 %v2215, %v2219
  %vm2221 = vweird.f32 %v2214
  %vm2222 = vweird.f32 %v2215
  %vm2223 = vmor %vm2221, %vm2222
  %v2224 = vsel %vm2223, %v2215, %v2220
  %v2225 = vmul.f32 %v2224, %v2171
  %v2226 = vperm.slane %v2225, 0
  %v2227 = vmul.f32 %v2192, %v2226
  %v2228 = vmul.f32 %v2193, %v2226
  %v2229 = vmul.f32 %v2194, %v2226
  %v2230 = vmul.f32 %v2195, %v2226
  %v2232 = vperm.slane %v2173, 0
  %v2234 = vadd.f32 %v2227, %v2232
  %v2235 = vadd.f32 %v2228, %v2232
  %v2236 = vadd.f32 %v2229, %v2232
  %v2237 = vadd.f32 %v2230, %v2232
  %v2238 = vmul.f32 %v2234, 0.5
  %v2239 = vmul.f32 %v2235, 0.5
  %v2240 = vmul.f32 %v2236, 0.5
  %v2241 = vmul.f32 %v2237, 0.5
  %v2242 = vmul.f32 %v2234, 0.044715
  %v2243 = vmul.f32 %v2235, 0.044715
  %v2244 = vmul.f32 %v2236, 0.044715
  %v2245 = vmul.f32 %v2237, 0.044715
  %v2246 = vmul.f32 %v2242, %v2234
  %v2247 = vmul.f32 %v2243, %v2235
  %v2248 = vmul.f32 %v2244, %v2236
  %v2249 = vmul.f32 %v2245, %v2237
  %v2250 = vmul.f32 %v2246, %v2234
  %v2251 = vmul.f32 %v2247, %v2235
  %v2252 = vmul.f32 %v2248, %v2236
  %v2253 = vmul.f32 %v2249, %v2237
  %v2254 = vadd.f32 %v2234, %v2250
  %v2255 = vadd.f32 %v2235, %v2251
  %v2256 = vadd.f32 %v2236, %v2252
  %v2257 = vadd.f32 %v2237, %v2253
  %v2258 = vmul.f32 %v2254, 0.7978846
  %v2259 = vmul.f32 %v2255, 0.7978846
  %v2260 = vmul.f32 %v2256, 0.7978846
  %v2261 = vmul.f32 %v2257, 0.7978846
  %v2262 = vtanh.pop %v2258
  %v2263 = vtanh.pop %v2259
  %v2264 = vtanh.pop %v2260
  %v2265 = vtanh.pop %v2261
  %v2266 = vadd.f32 %v2262, 1.0
  %v2267 = vadd.f32 %v2263, 1.0
  %v2268 = vadd.f32 %v2264, 1.0
  %v2269 = vadd.f32 %v2265, 1.0
  %v2270 = vmul.f32 %v2238, %v2266
  %v2271 = vmul.f32 %v2239, %v2267
  %v2272 = vmul.f32 %v2240, %v2268
  %v2273 = vmul.f32 %v2241, %v2269
  %2274 = vst.msk [vmem:[%s16] sm:$0xff] %vm125, %v2270
  %2275 = vst.msk [vmem:[%s16 + $0x8] sm:$0xff] %vm125, %v2271
  %2276 = vst.msk [vmem:[%s16 + $0x10] sm:$0xff] %vm125, %v2272
  %2277 = vst.msk [vmem:[%s16 + $0x18] sm:$0xff] %vm125, %v2273
  // Predicated region
  $region66: #{ts_transformer_forward.2} parent=0 // pred_check
    _
  $region67: #{ts_transformer_forward.2} parent=0 // pred_check_branch
    %2279 = sbr.rel (0) target = $region69
  $region68: #{ts_transformer_forward.2} parent=0 // pred_region
    _
  $region69: #{ts_transformer_forward.2} parent=0 // pred_fallthru
    _
  // Predicated region
  $region70: #{ts_transformer_forward.2} parent=0 // pred_check
    _
  $region71: #{ts_transformer_forward.2} parent=0 // pred_check_branch
    %2281 = sbr.rel (0) target = $region73
  $region72: #{ts_transformer_forward.2} parent=0 // pred_region
    _
  $region73: #{ts_transformer_forward.2} parent=0 // pred_fallthru
    _

</llo_original>
